<compile_context>
chip_gen: v5e
topology: v5e:2x2
jax: 0.10.0
libtpu: 0.0.40
codegen_flags: <defaults>
</compile_context>

<pallas_src>
import functools
import math

import jax
import jax.numpy as jnp
from jax.experimental import pallas as pl
from jax.experimental.pallas import tpu as pltpu


def _default_vmem_limit():
    # Size the scoped-VMEM budget off the actual chip (v7x: 64 MiB/TC,
    # v5e/v6e: 128 MiB); keep headroom for double-buffering.
    try:
        cap = pltpu.get_tpu_info().vmem_capacity_bytes
    except Exception:
        cap = 64 * 1024 * 1024
    return int(min(cap * 3 // 4, 100 * 1024 * 1024))


_VMEM_LIMIT = _default_vmem_limit()


def _pick_tile(dim, target, align):
    """Largest multiple of `align` that divides `dim` and is <= target, else dim."""
    if dim <= target:
        return dim
    t = (min(target, dim) // align) * align
    while t >= align:
        if dim % t == 0:
            return t
        t -= align
    return dim


# --------------------------- Pallas kernels ---------------------------------

def _linear_res_kernel(x_ref, w_ref, res_ref, o_ref, acc_ref):
    # o = res + x @ w, bf16 in / bf16 out, f32 accumulation.
    k = pl.program_id(2)

    @pl.when(k == 0)
    def _():
        acc_ref[...] = jnp.zeros_like(acc_ref)

    acc_ref[...] += jnp.dot(x_ref[...], w_ref[...],
                            preferred_element_type=jnp.float32)

    @pl.when(k == pl.num_programs(2) - 1)
    def _():
        o_ref[...] = (res_ref[...].astype(jnp.float32)
                      + acc_ref[...]).astype(o_ref.dtype)


def linear_residual(x, w_t, res, *, tm=256, tn=256, tk=512):
    # x: (N, K) bf16, w_t: (K, M) bf16, res: (N, M) bf16 -> (N, M) bf16.
    N, K = x.shape
    _, M = w_t.shape
    tm = _pick_tile(N, tm, 8)
    tn = _pick_tile(M, tn, 128)
    tk = _pick_tile(K, tk, 128)
    # Expose >=2 parallel blocks for the second TensorCore (v7x) when the
    # natural tiling collapses both parallel axes to a single block.
    if N // tm == 1 and M // tn == 1 and (M // 128) >= 2:
        tn = _pick_tile(M, max(128, tn // 2), 128)
    cost = pl.CostEstimate(flops=2 * N * K * M, transcendentals=0,
                           bytes_accessed=2 * (N * K + K * M + 2 * N * M))
    return pl.pallas_call(
        _linear_res_kernel,
        out_shape=jax.ShapeDtypeStruct((N, M), jnp.bfloat16),
        grid=(N // tm, M // tn, K // tk),
        in_specs=[pl.BlockSpec((tm, tk), lambda i, j, k: (i, k)),
                  pl.BlockSpec((tk, tn), lambda i, j, k: (k, j)),
                  pl.BlockSpec((tm, tn), lambda i, j, k: (i, j))],
        out_specs=pl.BlockSpec((tm, tn), lambda i, j, k: (i, j)),
        scratch_shapes=[pltpu.VMEM((tm, tn), jnp.float32)],
        compiler_params=pltpu.CompilerParams(
            dimension_semantics=("parallel", "parallel", "arbitrary"),
            vmem_limit_bytes=_VMEM_LIMIT),
        cost_estimate=cost,
    )(x, w_t, res)


def _rmsnorm_matmul_kernel(x_ref, w_ref, o_ref, xn_ref, *, eps):
    # RMSNorm gain is folded into w; only the row scale 1/(sqrt(ms)+eps) is
    # computed here, once per row-tile (j==0), into a bf16 VMEM scratch.
    j = pl.program_id(1)

    @pl.when(j == 0)
    def _():
        x = x_ref[...].astype(jnp.float32)                     # (tm, K)
        ms = jnp.mean(x * x, axis=-1, keepdims=True)
        # Matches PyTorch RMSNorm here: x / (sqrt(mean(x^2)) + eps)  (eps outside sqrt)
        xn_ref[...] = (x / (jnp.sqrt(ms) + eps)).astype(jnp.bfloat16)

    o_ref[...] = jnp.dot(xn_ref[...], w_ref[...],
                         preferred_element_type=jnp.float32).astype(o_ref.dtype)


def rmsnorm_matmul(x, w_t, eps, *, tm=256, tn=256, out_dtype=jnp.bfloat16):
    # y = rmsnorm(x) @ w_t   (gain pre-folded into w_t).
    # K stays un-tiled (needed whole for the mean); M is the inner "arbitrary"
    # axis so the normalized xn is reused across output-column tiles.
    # TODO(synk): K-tiling with an inv-rms prepass for very large D (v7x VMEM).
    N, K = x.shape
    _, M = w_t.shape
    tm = _pick_tile(N, tm, 8)
    tn = _pick_tile(M, tn, 128)
    cost = pl.CostEstimate(flops=2 * N * K * M + 4 * N * K, transcendentals=N,
                           bytes_accessed=2 * (N * K + K * M + N * M))
    return pl.pallas_call(
        functools.partial(_rmsnorm_matmul_kernel, eps=eps),
        out_shape=jax.ShapeDtypeStruct((N, M), out_dtype),
        grid=(N // tm, M // tn),
        in_specs=[pl.BlockSpec((tm, K), lambda i, j: (i, 0)),
                  pl.BlockSpec((K, tn), lambda i, j: (0, j))],
        out_specs=pl.BlockSpec((tm, tn), lambda i, j: (i, j)),
        scratch_shapes=[pltpu.VMEM((tm, K), jnp.bfloat16)],
        compiler_params=pltpu.CompilerParams(
            dimension_semantics=("parallel", "arbitrary"),
            vmem_limit_bytes=_VMEM_LIMIT),
        cost_estimate=cost,
    )(x, w_t)


def _ffn_kernel(x_ref, w1_ref, w3_ref, w2_ref, o_ref, acc_ref, xn_ref, *, eps):
    # Fused: rmsnorm(x) -> SwiGLU -> down-proj (+ residual), tiled over hidden.
    j = pl.program_id(1)

    @pl.when(j == 0)
    def _():
        x = x_ref[...].astype(jnp.float32)
        ms = jnp.mean(x * x, axis=-1, keepdims=True)
        xn_ref[...] = (x / (jnp.sqrt(ms) + eps)).astype(jnp.bfloat16)
        acc_ref[...] = jnp.zeros_like(acc_ref)

    xn = xn_ref[...]
    a = jnp.dot(xn, w1_ref[...], preferred_element_type=jnp.float32)
    b = jnp.dot(xn, w3_ref[...], preferred_element_type=jnp.float32)
    hblk = (a * jax.nn.sigmoid(a)) * b                         # SiLU gate
    acc_ref[...] += jnp.dot(hblk.astype(jnp.bfloat16), w2_ref[...],
                            preferred_element_type=jnp.float32)

    @pl.when(j == pl.num_programs(1) - 1)
    def _():
        # Residual add fused into the finalize store (o = x + FFN(rms(x))).
        o_ref[...] = (x_ref[...].astype(jnp.float32)
                      + acc_ref[...]).astype(o_ref.dtype)


def feed_forward(x, w1_t, w3_t, w2_t, eps, *, tm=256, th=512):
    N, D = x.shape
    H = w1_t.shape[1]
    tm = _pick_tile(N, tm, 8)
    th = _pick_tile(H, th, 128)
    cost = pl.CostEstimate(flops=6 * N * D * H, transcendentals=N * H,
                           bytes_accessed=2 * (2 * N * D + 3 * D * H))
    return pl.pallas_call(
        functools.partial(_ffn_kernel, eps=eps),
        out_shape=jax.ShapeDtypeStruct((N, D), jnp.bfloat16),
        grid=(N // tm, H // th),
        in_specs=[pl.BlockSpec((tm, D), lambda i, j: (i, 0)),
                  pl.BlockSpec((D, th), lambda i, j: (0, j)),
                  pl.BlockSpec((D, th), lambda i, j: (0, j)),
                  pl.BlockSpec((th, D), lambda i, j: (j, 0))],
        out_specs=pl.BlockSpec((tm, D), lambda i, j: (i, 0)),
        scratch_shapes=[pltpu.VMEM((tm, D), jnp.float32),
                        pltpu.VMEM((tm, D), jnp.bfloat16)],
        compiler_params=pltpu.CompilerParams(
            dimension_semantics=("parallel", "arbitrary"),
            vmem_limit_bytes=_VMEM_LIMIT),
        cost_estimate=cost,
    )(x, w1_t, w3_t, w2_t)


def _flash_attn_kernel(q_ref, k_ref, v_ref, o_ref, m_sc, l_sc, acc_sc, *, scale):
    kv = pl.program_id(1)

    @pl.when(kv == 0)
    def _():
        m_sc[...] = jnp.full_like(m_sc, -jnp.inf)
        l_sc[...] = jnp.zeros_like(l_sc)
        acc_sc[...] = jnp.zeros_like(acc_sc)

    q = q_ref[0]                                               # (QS, hd) bf16
    k = k_ref[0]                                               # (tk, hd) bf16
    v = v_ref[0]                                               # (tk, hd) bf16
    # Contract on the last axes: MXU consumes K in native layout (no XLU .T).
    s = jax.lax.dot_general(q, k, (((1,), (1,)), ((), ())),
                            preferred_element_type=jnp.float32) * scale
    m_prev = m_sc[...]
    m_new = jnp.maximum(m_prev, jnp.max(s, axis=-1, keepdims=True))
    alpha = jnp.exp(m_prev - m_new)
    p = jnp.exp(s - m_new)                                     # unnormalized probs
    l_sc[...] = alpha * l_sc[...] + jnp.sum(p, axis=-1, keepdims=True)
    acc_sc[...] = alpha * acc_sc[...] + jnp.dot(p.astype(jnp.bfloat16), v,
                                                preferred_element_type=jnp.float32)
    m_sc[...] = m_new

    @pl.when(kv == pl.num_programs(1) - 1)
    def _():
        # Normalize after PV: (QS,hd) multiply instead of (QS,T); EUP reciprocal.
        o_ref[0] = (acc_sc[...]
                    * pl.reciprocal(l_sc[...], approx=True)).astype(o_ref.dtype)


def attention_core(q, k, v, scale, *, tk=512):
    # GQA layout: q: (B*Hkv, n_rep*S, hd); k, v: (B*Hkv, T, hd), all bf16.
    # Each grid step reads one KV head's K/V tile once and serves all n_rep
    # query heads sharing it; T is streamed with an online softmax.
    G, QS, hd = q.shape
    _, T, _ = k.shape
    tk = _pick_tile(T, tk, 8)
    return pl.pallas_call(
        functools.partial(_flash_attn_kernel, scale=scale),
        out_shape=jax.ShapeDtypeStruct((G, QS, hd), jnp.bfloat16),
        grid=(G, T // tk),
        in_specs=[pl.BlockSpec((1, QS, hd), lambda i, j: (i, 0, 0)),
                  pl.BlockSpec((1, tk, hd), lambda i, j: (i, j, 0)),
                  pl.BlockSpec((1, tk, hd), lambda i, j: (i, j, 0))],
        out_specs=pl.BlockSpec((1, QS, hd), lambda i, j: (i, 0, 0)),
        scratch_shapes=[pltpu.VMEM((QS, 1), jnp.float32),
                        pltpu.VMEM((QS, 1), jnp.float32),
                        pltpu.VMEM((QS, hd), jnp.float32)],
        compiler_params=pltpu.CompilerParams(
            dimension_semantics=("parallel", "arbitrary"),
            vmem_limit_bytes=_VMEM_LIMIT),
    )(q, k, v)


def kv_cache_update(cache_k, cache_v, new_k, new_v, start_pos):
    # In-place cache write (both K and V in one call) via input_output_aliases:
    # only the new (B, Hkv, S, hd) slabs move through VMEM; the aliased cache
    # inputs stay in HBM (pl.ANY) and keep their contents everywhere else.
    MB, Hkv, MT, hd = cache_k.shape
    B, _, S, _ = new_k.shape
    if start_pos % S != 0:
        # TODO(synk): unaligned decode positions; fall back to an XLA update.
        ck = jax.lax.dynamic_update_slice(cache_k, new_k, (0, 0, start_pos, 0))
        cv = jax.lax.dynamic_update_slice(cache_v, new_v, (0, 0, start_pos, 0))
        return ck, cv
    row = start_pos // S

    def kernel(nk_ref, nv_ref, ck_any, cv_any, ok_ref, ov_ref):
        del ck_any, cv_any    # aliased with outputs; only the new slab is written
        ok_ref[...] = nk_ref[...]
        ov_ref[...] = nv_ref[...]

    return pl.pallas_call(
        kernel,
        out_shape=(jax.ShapeDtypeStruct(cache_k.shape, cache_k.dtype),
                   jax.ShapeDtypeStruct(cache_v.shape, cache_v.dtype)),
        grid=(1,),
        in_specs=[pl.BlockSpec((B, Hkv, S, hd), lambda i: (0, 0, 0, 0)),
                  pl.BlockSpec((B, Hkv, S, hd), lambda i: (0, 0, 0, 0)),
                  pl.BlockSpec(memory_space=pl.ANY),
                  pl.BlockSpec(memory_space=pl.ANY)],
        out_specs=(pl.BlockSpec((B, Hkv, S, hd), lambda i: (0, 0, row, 0)),
                   pl.BlockSpec((B, Hkv, S, hd), lambda i: (0, 0, row, 0))),
        input_output_aliases={2: 0, 3: 1},
        compiler_params=pltpu.CompilerParams(vmem_limit_bytes=_VMEM_LIMIT),
    )(new_k, new_v, cache_k, cache_v)


# --------------------------- JAX glue ----------------------------------------

def precompute_theta_pos_frequencies(head_dim, seq_len):
    # Matches the (quirky) PyTorch formula: 10000 ** (-2*(i-1)/head_dim)
    i = jnp.arange(head_dim // 2, dtype=jnp.float32)
    theta = 10000.0 ** (-2.0 * (i - 1.0) / head_dim)
    m = jnp.arange(seq_len, dtype=jnp.float32)
    freqs = jnp.outer(m, theta)
    return jnp.cos(freqs), jnp.sin(freqs)      # polar(1, freqs) = cos + i*sin


def apply_rotary_embeddings(x, cos, sin):
    # x: (B, S, H, Dh) bf16; cos/sin: (S, Dh//2) f32. Complex mul on (even, odd)
    # pairs, computed in f32 then cast back (matches .float()...type_as(x)).
    # TODO(synk): fuse RoPE into the QKV kernel epilogue (pltpu.roll layout).
    B, S, H, Dh = x.shape
    xr = x.astype(jnp.float32).reshape(B, S, H, Dh // 2, 2)
    x0, x1 = xr[..., 0], xr[..., 1]
    c = cos[None, :, None, :]
    s = sin[None, :, None, :]
    o0 = x0 * c - x1 * s
    o1 = x0 * s + x1 * c
    return jnp.stack([o0, o1], axis=-1).reshape(B, S, H, Dh).astype(x.dtype)


class Args:
    dim = 256            # lane-dense (multiple of 128)
    n_layers = 2
    n_heads = 2          # head_dim = 128 (MXU native)
    n_kv_heads = 1       # GQA: 2 query heads share 1 KV head
    vocab_size = 256
    multiple_of = 256
    ffn_dim_multiplier = None
    norm_eps = 1e-5
    max_batch_size = 2
    max_seq_length = 16


def init_params(key, args):
    Hq = args.n_heads
    Hkv = Hq if args.n_kv_heads is None else args.n_kv_heads
    hd = args.dim // Hq
    hidden = int(args.dim * 8 / 3)
    if args.ffn_dim_multiplier is not None:
        hidden = int(args.ffn_dim_multiplier * hidden)
    hidden = math.ceil(hidden / args.multiple_of) * args.multiple_of

    def w(key, shape, scale=0.02):
        return scale * jax.random.normal(key, shape)            # f32 master

    def fold(g, wt):
        # Fold RMSNorm gain g (per input row) into the weight, then cast bf16.
        return (g[:, None] * wt).astype(jnp.bfloat16)

    keys = jax.random.split(key, 2 + args.n_layers)
    norm_g = jnp.ones((args.dim,), jnp.float32)
    params = {
        "tok_embeddings": jax.random.normal(keys[0], (args.vocab_size, args.dim)),
        "output": fold(norm_g, w(keys[1], (args.dim, args.vocab_size))),
        "layers": [],
    }
    cos, sin = precompute_theta_pos_frequencies(hd, args.max_seq_length * 2)
    params["freqs_cos"], params["freqs_sin"] = cos, sin

    for l in range(args.n_layers):
        lk = jax.random.split(keys[2 + l], 5)
        attn_g = jnp.ones((args.dim,), jnp.float32)
        ffn_g = jnp.ones((args.dim,), jnp.float32)
        params["layers"].append({
            # wq/wk/wv fused along the output dim: [q | k | v], pre-transposed,
            # attention_norm gain folded into the rows.
            "wqkv": fold(attn_g, w(lk[0], (args.dim, (Hq + 2 * Hkv) * hd))),
            "wo": w(lk[1], (Hq * hd, args.dim)).astype(jnp.bfloat16),
            "w1": fold(ffn_g, w(lk[2], (args.dim, hidden))),
            "w3": fold(ffn_g, w(lk[3], (args.dim, hidden))),
            "w2": w(lk[4], (hidden, args.dim)).astype(jnp.bfloat16),
            # KV cache: bf16, (B, Hkv, max_T, hd) so attention reads it without
            # transposing the whole cache every layer.
            "cache_k": jnp.zeros((args.max_batch_size, Hkv,
                                  args.max_seq_length, hd), jnp.bfloat16),
            "cache_v": jnp.zeros((args.max_batch_size, Hkv,
                                  args.max_seq_length, hd), jnp.bfloat16),
        })
    return params


def transformer_forward(params, tokens, start_pos, args):
    B, S = tokens.shape
    D = args.dim
    Hq = args.n_heads
    Hkv = Hq if args.n_kv_heads is None else args.n_kv_heads
    hd = D // Hq
    n_rep = Hq // Hkv
    eps = args.norm_eps

    # Embedding gather, bf16 residual stream.
    h = params["tok_embeddings"][tokens].astype(jnp.bfloat16).reshape(B * S, D)
    cos = params["freqs_cos"][start_pos:start_pos + S]
    sin = params["freqs_sin"][start_pos:start_pos + S]

    for lp in params["layers"]:
        x = h                                                   # (B*S, D) bf16
        # ---- attention: fused RMSNorm (folded gain) + QKV projection ----
        qkv = rmsnorm_matmul(x, lp["wqkv"], eps)                # bf16
        q = qkv[:, :Hq * hd].reshape(B, S, Hq, hd)
        k = qkv[:, Hq * hd:(Hq + Hkv) * hd].reshape(B, S, Hkv, hd)
        v = qkv[:, (Hq + Hkv) * hd:].reshape(B, S, Hkv, hd)
        q = apply_rotary_embeddings(q, cos, sin)
        k = apply_rotary_embeddings(k, cos, sin)

        # In-place KV cache write (single aliased Pallas call, K and V).
        k_new = k.transpose(0, 2, 1, 3)                         # (B, Hkv, S, hd)
        v_new = v.transpose(0, 2, 1, 3)
        cache_k, cache_v = kv_cache_update(lp["cache_k"], lp["cache_v"],
                                           k_new, v_new, start_pos)
        T = start_pos + S
        # TODO(synk): stream K/V directly from the full cache inside the kernel
        # (scalar-prefetched T) to avoid this XLA slice at long contexts.
        kh = cache_k[:B, :, :T].reshape(B * Hkv, T, hd)
        vh = cache_v[:B, :, :T].reshape(B * Hkv, T, hd)

        # GQA: fold the n_rep query heads sharing a KV head onto the row axis.
        qg = q.transpose(0, 2, 1, 3).reshape(B * Hkv, n_rep * S, hd)
        ao = attention_core(qg, kh, vh, 1.0 / math.sqrt(hd))    # bf16
        ao = (ao.reshape(B, Hkv, n_rep, S, hd).transpose(0, 3, 1, 2, 4)
                .reshape(B * S, Hq * hd))
        # Output projection with the residual add fused into the finalize.
        hh = linear_residual(ao, lp["wo"], x)

        # ---- FFN: fused RMSNorm + SwiGLU + down-proj + residual ----
        h = feed_forward(hh, lp["w1"], lp["w3"], lp["w2"], eps)

    # Final RMSNorm (gain folded) fused into the LM head matmul; f32 logits.
    logits = rmsnorm_matmul(h, params["output"], eps, out_dtype=jnp.float32)
    return logits.reshape(B, S, args.vocab_size)


# --------------------------- main --------------------------------------------

if __name__ == "__main__":
    args = Args()
    key = jax.random.PRNGKey(0)
    pkey, tkey = jax.random.split(key)

    params = init_params(pkey, args)
    tokens = jax.random.randint(tkey, (2, 8), 0, args.vocab_size,
                                dtype=jnp.int32)
    start_pos = 0

    fwd = jax.jit(transformer_forward, static_argnums=(2, 3))
    logits = fwd(params, tokens, start_pos, args)
    jax.block_until_ready(logits)
    assert logits.shape == (2, 8, args.vocab_size)
    assert logits.dtype == jnp.float32
    print("KERNEL_OK")
</pallas_src>

<mosaic_0001>
module attributes {stable_mosaic.version = 11 : i64} {
  func.func @_rmsnorm_matmul_kernel(%arg0: i32, %arg1: i32, %arg2: memref<16x256xbf16, #tpu.memory_space<vmem>>, %arg3: memref<256x256xbf16, #tpu.memory_space<vmem>>, %arg4: memref<16x256xbf16, #tpu.memory_space<vmem>>, %arg5: memref<16x256xbf16, #tpu.memory_space<vmem>>) attributes {dimension_semantics = [#tpu.dimension_semantics<parallel>, #tpu.dimension_semantics<arbitrary>], iteration_bounds = array<i64: 1, 2>, scalar_prefetch = 0 : i64, scratch_operands = 1 : i64, tpu.core_type = #tpu.core_type<tc>, window_params = [{transform_indices = @transform_0, window_bounds = array<i64: 16, 256>}, {transform_indices = @transform_1, window_bounds = array<i64: 256, 256>}, {transform_indices = @transform_2, window_bounds = array<i64: 16, 256>}]} {
    %c0_i32 = arith.constant 0 : i32
    %0 = arith.cmpi eq, %arg1, %c0_i32 : i32
    %1 = arith.extui %0 : i1 to i32
    %c0_i32_0 = arith.constant 0 : i32
    %2 = arith.cmpi ne, %1, %c0_i32_0 : i32
    scf.if %2 {
      %c0_6 = arith.constant 0 : index
      %c0_7 = arith.constant 0 : index
      %8 = vector.load %arg2[%c0_6, %c0_7] : memref<16x256xbf16, #tpu.memory_space<vmem>>, vector<16x256xbf16>
      %9 = arith.extf %8 : vector<16x256xbf16> to vector<16x256xf32>
      %10 = arith.mulf %9, %9 : vector<16x256xf32>
      %cst_8 = arith.constant dense<0.000000e+00> : vector<16xf32>
      %11 = vector.multi_reduction <add>, %10, %cst_8 [1] : vector<16x256xf32> to vector<16xf32>
      %12 = vector.shape_cast %11 : vector<16xf32> to vector<16x1xf32>
      %cst_9 = arith.constant 2.560000e+02 : f32
      %13 = vector.broadcast %cst_9 : f32 to vector<16x1xf32>
      %14 = arith.divf %12, %13 : vector<16x1xf32>
      %15 = math.sqrt %14 : vector<16x1xf32>
      %cst_10 = arith.constant 9.99999974E-6 : f32
      %16 = vector.broadcast %cst_10 : f32 to vector<16x1xf32>
      %17 = arith.addf %15, %16 : vector<16x1xf32>
      %18 = vector.broadcast %17 : vector<16x1xf32> to vector<16x256xf32>
      %19 = arith.divf %9, %18 : vector<16x256xf32>
      %20 = arith.truncf %19 : vector<16x256xf32> to vector<16x256xbf16>
      %c0_11 = arith.constant 0 : index
      %c0_12 = arith.constant 0 : index
      %21 = vector.load %arg5[%c0_11, %c0_12] : memref<16x256xbf16, #tpu.memory_space<vmem>>, vector<16x256xbf16>
      tpu.vector_store %arg5[%c0_11, %c0_12], %20 {strides = array<i32>} : memref<16x256xbf16, #tpu.memory_space<vmem>>, vector<16x256xbf16>,
    } else {
    }
    %c0 = arith.constant 0 : index
    %c0_1 = arith.constant 0 : index
    %3 = vector.load %arg5[%c0, %c0_1] : memref<16x256xbf16, #tpu.memory_space<vmem>>, vector<16x256xbf16>
    %c0_2 = arith.constant 0 : index
    %c0_3 = arith.constant 0 : index
    %4 = vector.load %arg3[%c0_2, %c0_3] : memref<256x256xbf16, #tpu.memory_space<vmem>>, vector<256x256xbf16>
    %cst = arith.constant dense<0.000000e+00> : vector<16x256xf32>
    %5 = tpu.matmul %3, %4, %cst {dimension_numbers = #tpu.dot_dimension_numbers<[1], [0], [0], [1], [0, 0, 1, 1], [], []>} : vector<16x256xbf16>, vector<256x256xbf16>, vector<16x256xf32> -> vector<16x256xf32>
    %6 = arith.truncf %5 : vector<16x256xf32> to vector<16x256xbf16>
    %c0_4 = arith.constant 0 : index
    %c0_5 = arith.constant 0 : index
    %7 = vector.load %arg4[%c0_4, %c0_5] : memref<16x256xbf16, #tpu.memory_space<vmem>>, vector<16x256xbf16>
    tpu.vector_store %arg4[%c0_4, %c0_5], %6 {strides = array<i32>} : memref<16x256xbf16, #tpu.memory_space<vmem>>, vector<16x256xbf16>,
    return
  }
  func.func @transform_0(%arg0: i32, %arg1: i32) -> (i32, i32) {
    %c0_i32 = arith.constant 0 : i32
    %c0_i32_0 = arith.constant 0 : i32
    return %arg0, %c0_i32 : i32, i32
  }
  func.func @transform_1(%arg0: i32, %arg1: i32) -> (i32, i32) {
    %c0_i32 = arith.constant 0 : i32
    %c0_i32_0 = arith.constant 0 : i32
    return %c0_i32, %arg1 : i32, i32
  }
  func.func @transform_2(%arg0: i32, %arg1: i32) -> (i32, i32) {
    %c0_i32 = arith.constant 0 : i32
    return %arg0, %arg1 : i32, i32
  }
}

module attributes {stable_mosaic.version = 11 : i64} {
  func.func @kernel(%arg0: i32, %arg1: memref<2x1x8x128xbf16, #tpu.memory_space<vmem>>, %arg2: memref<2x1x8x128xbf16, #tpu.memory_space<vmem>>, %arg3: memref<2x1x16x128xbf16, #tpu.memory_space<any>>, %arg4: memref<2x1x16x128xbf16, #tpu.memory_space<any>>, %arg5: memref<2x1x8x128xbf16, #tpu.memory_space<vmem>>, %arg6: memref<2x1x8x128xbf16, #tpu.memory_space<vmem>>) attributes {dimension_semantics = [#tpu.dimension_semantics<arbitrary>], iteration_bounds = array<i64: 1>, scalar_prefetch = 0 : i64, scratch_operands = 0 : i64, tpu.core_type = #tpu.core_type<tc>, window_params = [{pipeline_mode = #tpu.pipeline_mode<synchronous>, transform_indices = @transform_0, window_bounds = array<i64: 2, 1, 8, 128>}, {pipeline_mode = #tpu.pipeline_mode<synchronous>, transform_indices = @transform_1, window_bounds = array<i64: 2, 1, 8, 128>}, {}, {}, {transform_indices = @transform_4, window_bounds = array<i64: 2, 1, 8, 128>}, {transform_indices = @transform_5, window_bounds = array<i64: 2, 1, 8, 128>}]} {
    %c0 = arith.constant 0 : index
    %c0_0 = arith.constant 0 : index
    %c0_1 = arith.constant 0 : index
    %c0_2 = arith.constant 0 : index
    %0 = vector.load %arg1[%c0, %c0_0, %c0_1, %c0_2] : memref<2x1x8x128xbf16, #tpu.memory_space<vmem>>, vector<2x1x8x128xbf16>
    %c0_3 = arith.constant 0 : index
    %c0_4 = arith.constant 0 : index
    %c0_5 = arith.constant 0 : index
    %c0_6 = arith.constant 0 : index
    %1 = vector.load %arg5[%c0_3, %c0_4, %c0_5, %c0_6] : memref<2x1x8x128xbf16, #tpu.memory_space<vmem>>, vector<2x1x8x128xbf16>
    tpu.vector_store %arg5[%c0_3, %c0_4, %c0_5, %c0_6], %0 {strides = array<i32>} : memref<2x1x8x128xbf16, #tpu.memory_space<vmem>>, vector<2x1x8x128xbf16>,
    %c0_7 = arith.constant 0 : index
    %c0_8 = arith.constant 0 : index
    %c0_9 = arith.constant 0 : index
    %c0_10 = arith.constant 0 : index
    %2 = vector.load %arg2[%c0_7, %c0_8, %c0_9, %c0_10] : memref<2x1x8x128xbf16, #tpu.memory_space<vmem>>, vector<2x1x8x128xbf16>
    %c0_11 = arith.constant 0 : index
    %c0_12 = arith.constant 0 : index
    %c0_13 = arith.constant 0 : index
    %c0_14 = arith.constant 0 : index
    %3 = vector.load %arg6[%c0_11, %c0_12, %c0_13, %c0_14] : memref<2x1x8x128xbf16, #tpu.memory_space<vmem>>, vector<2x1x8x128xbf16>
    tpu.vector_store %arg6[%c0_11, %c0_12, %c0_13, %c0_14], %2 {strides = array<i32>} : memref<2x1x8x128xbf16, #tpu.memory_space<vmem>>, vector<2x1x8x128xbf16>,
    return
  }
  func.func @transform_0(%arg0: i32) -> (i32, i32, i32, i32) {
    %c0_i32 = arith.constant 0 : i32
    %c0_i32_0 = arith.constant 0 : i32
    %c0_i32_1 = arith.constant 0 : i32
    %c0_i32_2 = arith.constant 0 : i32
    %c0_i32_3 = arith.constant 0 : i32
    return %c0_i32, %c0_i32_0, %c0_i32_1, %c0_i32_2 : i32, i32, i32, i32
  }
  func.func @transform_1(%arg0: i32) -> (i32, i32, i32, i32) {
    %c0_i32 = arith.constant 0 : i32
    %c0_i32_0 = arith.constant 0 : i32
    %c0_i32_1 = arith.constant 0 : i32
    %c0_i32_2 = arith.constant 0 : i32
    %c0_i32_3 = arith.constant 0 : i32
    return %c0_i32, %c0_i32_0, %c0_i32_1, %c0_i32_2 : i32, i32, i32, i32
  }
  func.func @transform_4(%arg0: i32) -> (i32, i32, i32, i32) {
    %c0_i32 = arith.constant 0 : i32
    %c0_i32_0 = arith.constant 0 : i32
    %c0_i32_1 = arith.constant 0 : i32
    %c0_i32_2 = arith.constant 0 : i32
    %c0_i32_3 = arith.constant 0 : i32
    return %c0_i32, %c0_i32_0, %c0_i32_1, %c0_i32_2 : i32, i32, i32, i32
  }
  func.func @transform_5(%arg0: i32) -> (i32, i32, i32, i32) {
    %c0_i32 = arith.constant 0 : i32
    %c0_i32_0 = arith.constant 0 : i32
    %c0_i32_1 = arith.constant 0 : i32
    %c0_i32_2 = arith.constant 0 : i32
    %c0_i32_3 = arith.constant 0 : i32
    return %c0_i32, %c0_i32_0, %c0_i32_1, %c0_i32_2 : i32, i32, i32, i32
  }
}

module attributes {stable_mosaic.version = 11 : i64} {
  func.func @_linear_res_kernel(%arg0: i32, %arg1: i32, %arg2: i32, %arg3: memref<16x256xbf16, #tpu.memory_space<vmem>>, %arg4: memref<256x128xbf16, #tpu.memory_space<vmem>>, %arg5: memref<16x128xbf16, #tpu.memory_space<vmem>>, %arg6: memref<16x128xbf16, #tpu.memory_space<vmem>>, %arg7: memref<16x128xf32, #tpu.memory_space<vmem>>) attributes {dimension_semantics = [#tpu.dimension_semantics<parallel>, #tpu.dimension_semantics<parallel>, #tpu.dimension_semantics<arbitrary>], iteration_bounds = array<i64: 1, 2, 1>, scalar_prefetch = 0 : i64, scratch_operands = 1 : i64, tpu.core_type = #tpu.core_type<tc>, window_params = [{transform_indices = @transform_0, window_bounds = array<i64: 16, 256>}, {transform_indices = @transform_1, window_bounds = array<i64: 256, 128>}, {transform_indices = @transform_2, window_bounds = array<i64: 16, 128>}, {transform_indices = @transform_3, window_bounds = array<i64: 16, 128>}]} {
    %c0_i32 = arith.constant 0 : i32
    %0 = arith.cmpi eq, %arg2, %c0_i32 : i32
    %1 = arith.extui %0 : i1 to i32
    %c0_i32_0 = arith.constant 0 : i32
    %2 = arith.cmpi ne, %1, %c0_i32_0 : i32
    scf.if %2 {
      %cst_10 = arith.constant 0.000000e+00 : f32
      %12 = vector.broadcast %cst_10 : f32 to vector<16x128xf32>
      %c0_11 = arith.constant 0 : index
      %c0_12 = arith.constant 0 : index
      %13 = vector.load %arg7[%c0_11, %c0_12] : memref<16x128xf32, #tpu.memory_space<vmem>>, vector<16x128xf32>
      tpu.vector_store %arg7[%c0_11, %c0_12], %12 {strides = array<i32>} : memref<16x128xf32, #tpu.memory_space<vmem>>, vector<16x128xf32>,
    } else {
    }
    %c0 = arith.constant 0 : index
    %c0_1 = arith.constant 0 : index
    %3 = vector.load %arg7[%c0, %c0_1] : memref<16x128xf32, #tpu.memory_space<vmem>>, vector<16x128xf32>
    %c0_2 = arith.constant 0 : index
    %c0_3 = arith.constant 0 : index
    %4 = vector.load %arg3[%c0_2, %c0_3] : memref<16x256xbf16, #tpu.memory_space<vmem>>, vector<16x256xbf16>
    %c0_4 = arith.constant 0 : index
    %c0_5 = arith.constant 0 : index
    %5 = vector.load %arg4[%c0_4, %c0_5] : memref<256x128xbf16, #tpu.memory_space<vmem>>, vector<256x128xbf16>
    %cst = arith.constant dense<0.000000e+00> : vector<16x128xf32>
    %6 = tpu.matmul %4, %5, %cst {dimension_numbers = #tpu.dot_dimension_numbers<[1], [0], [0], [1], [0, 0, 1, 1], [], []>} : vector<16x256xbf16>, vector<256x128xbf16>, vector<16x128xf32> -> vector<16x128xf32>
    %7 = arith.addf %3, %6 : vector<16x128xf32>
    %c0_6 = arith.constant 0 : index
    %c0_7 = arith.constant 0 : index
    %8 = vector.load %arg7[%c0_6, %c0_7] : memref<16x128xf32, #tpu.memory_space<vmem>>, vector<16x128xf32>
    tpu.vector_store %arg7[%c0_6, %c0_7], %7 {strides = array<i32>} : memref<16x128xf32, #tpu.memory_space<vmem>>, vector<16x128xf32>,
    %c0_i32_8 = arith.constant 0 : i32
    %9 = arith.cmpi eq, %arg2, %c0_i32_8 : i32
    %10 = arith.extui %9 : i1 to i32
    %c0_i32_9 = arith.constant 0 : i32
    %11 = arith.cmpi ne, %10, %c0_i32_9 : i32
    scf.if %11 {
      %c0_10 = arith.constant 0 : index
      %c0_11 = arith.constant 0 : index
      %12 = vector.load %arg5[%c0_10, %c0_11] : memref<16x128xbf16, #tpu.memory_space<vmem>>, vector<16x128xbf16>
      %13 = arith.extf %12 : vector<16x128xbf16> to vector<16x128xf32>
      %c0_12 = arith.constant 0 : index
      %c0_13 = arith.constant 0 : index
      %14 = vector.load %arg7[%c0_12, %c0_13] : memref<16x128xf32, #tpu.memory_space<vmem>>, vector<16x128xf32>
      %15 = arith.addf %13, %14 : vector<16x128xf32>
      %16 = arith.truncf %15 : vector<16x128xf32> to vector<16x128xbf16>
      %c0_14 = arith.constant 0 : index
      %c0_15 = arith.constant 0 : index
      %17 = vector.load %arg6[%c0_14, %c0_15] : memref<16x128xbf16, #tpu.memory_space<vmem>>, vector<16x128xbf16>
      tpu.vector_store %arg6[%c0_14, %c0_15], %16 {strides = array<i32>} : memref<16x128xbf16, #tpu.memory_space<vmem>>, vector<16x128xbf16>,
    } else {
    }
    return
  }
  func.func @transform_0(%arg0: i32, %arg1: i32, %arg2: i32) -> (i32, i32) {
    %c0_i32 = arith.constant 0 : i32
    return %arg0, %arg2 : i32, i32
  }
  func.func @transform_1(%arg0: i32, %arg1: i32, %arg2: i32) -> (i32, i32) {
    %c0_i32 = arith.constant 0 : i32
    return %arg2, %arg1 : i32, i32
  }
  func.func @transform_2(%arg0: i32, %arg1: i32, %arg2: i32) -> (i32, i32) {
    %c0_i32 = arith.constant 0 : i32
    return %arg0, %arg1 : i32, i32
  }
  func.func @transform_3(%arg0: i32, %arg1: i32, %arg2: i32) -> (i32, i32) {
    %c0_i32 = arith.constant 0 : i32
    return %arg0, %arg1 : i32, i32
  }
}

module attributes {stable_mosaic.version = 11 : i64} {
  func.func @_flash_attn_kernel(%arg0: i32, %arg1: i32, %arg2: memref<1x16x128xbf16, #tpu.memory_space<vmem>>, %arg3: memref<1x8x128xbf16, #tpu.memory_space<vmem>>, %arg4: memref<1x8x128xbf16, #tpu.memory_space<vmem>>, %arg5: memref<1x16x128xbf16, #tpu.memory_space<vmem>>, %arg6: memref<16x1xf32, #tpu.memory_space<vmem>>, %arg7: memref<16x1xf32, #tpu.memory_space<vmem>>, %arg8: memref<16x128xf32, #tpu.memory_space<vmem>>) attributes {dimension_semantics = [#tpu.dimension_semantics<parallel>, #tpu.dimension_semantics<arbitrary>], iteration_bounds = array<i64: 2, 1>, scalar_prefetch = 0 : i64, scratch_operands = 3 : i64, tpu.core_type = #tpu.core_type<tc>, window_params = [{transform_indices = @transform_0, window_bounds = array<i64: 1, 16, 128>}, {transform_indices = @transform_1, window_bounds = array<i64: 1, 8, 128>}, {transform_indices = @transform_2, window_bounds = array<i64: 1, 8, 128>}, {transform_indices = @transform_3, window_bounds = array<i64: 1, 16, 128>}]} {
    %c0_i32 = arith.constant 0 : i32
    %0 = arith.cmpi eq, %arg1, %c0_i32 : i32
    %1 = arith.extui %0 : i1 to i32
    %c0_i32_0 = arith.constant 0 : i32
    %2 = arith.cmpi ne, %1, %c0_i32_0 : i32
    scf.if %2 {
      %cst_27 = arith.constant 0xFF800000 : f32
      %38 = vector.broadcast %cst_27 : f32 to vector<16x1xf32>
      %c0_28 = arith.constant 0 : index
      %c0_29 = arith.constant 0 : index
      %39 = vector.load %arg6[%c0_28, %c0_29] : memref<16x1xf32, #tpu.memory_space<vmem>>, vector<16x1xf32>
      tpu.vector_store %arg6[%c0_28, %c0_29], %38 {strides = array<i32>} : memref<16x1xf32, #tpu.memory_space<vmem>>, vector<16x1xf32>,
      %cst_30 = arith.constant 0.000000e+00 : f32
      %40 = vector.broadcast %cst_30 : f32 to vector<16x1xf32>
      %c0_31 = arith.constant 0 : index
      %c0_32 = arith.constant 0 : index
      %41 = vector.load %arg7[%c0_31, %c0_32] : memref<16x1xf32, #tpu.memory_space<vmem>>, vector<16x1xf32>
      tpu.vector_store %arg7[%c0_31, %c0_32], %40 {strides = array<i32>} : memref<16x1xf32, #tpu.memory_space<vmem>>, vector<16x1xf32>,
      %cst_33 = arith.constant 0.000000e+00 : f32
      %42 = vector.broadcast %cst_33 : f32 to vector<16x128xf32>
      %c0_34 = arith.constant 0 : index
      %c0_35 = arith.constant 0 : index
      %43 = vector.load %arg8[%c0_34, %c0_35] : memref<16x128xf32, #tpu.memory_space<vmem>>, vector<16x128xf32>
      tpu.vector_store %arg8[%c0_34, %c0_35], %42 {strides = array<i32>} : memref<16x128xf32, #tpu.memory_space<vmem>>, vector<16x128xf32>,
    } else {
    }
    %c0 = arith.constant 0 : index
    %c0_1 = arith.constant 0 : index
    %c0_2 = arith.constant 0 : index
    %3 = vector.load %arg2[%c0, %c0_1, %c0_2] : memref<1x16x128xbf16, #tpu.memory_space<vmem>>, vector<1x16x128xbf16>
    %4 = vector.shape_cast %3 : vector<1x16x128xbf16> to vector<16x128xbf16>
    %c0_3 = arith.constant 0 : index
    %c0_4 = arith.constant 0 : index
    %c0_5 = arith.constant 0 : index
    %5 = vector.load %arg3[%c0_3, %c0_4, %c0_5] : memref<1x8x128xbf16, #tpu.memory_space<vmem>>, vector<1x8x128xbf16>
    %6 = vector.shape_cast %5 : vector<1x8x128xbf16> to vector<8x128xbf16>
    %c0_6 = arith.constant 0 : index
    %c0_7 = arith.constant 0 : index
    %c0_8 = arith.constant 0 : index
    %7 = vector.load %arg4[%c0_6, %c0_7, %c0_8] : memref<1x8x128xbf16, #tpu.memory_space<vmem>>, vector<1x8x128xbf16>
    %8 = vector.shape_cast %7 : vector<1x8x128xbf16> to vector<8x128xbf16>
    %cst = arith.constant dense<0.000000e+00> : vector<16x8xf32>
    %9 = tpu.matmul %4, %6, %cst {dimension_numbers = #tpu.dot_dimension_numbers<[1], [1], [0], [0], [0, 0, 1, 0], [], []>} : vector<16x128xbf16>, vector<8x128xbf16>, vector<16x8xf32> -> vector<16x8xf32>
    %cst_9 = arith.constant 0.0883883461 : f32
    %10 = vector.broadcast %cst_9 : f32 to vector<16x8xf32>
    %11 = arith.mulf %9, %10 : vector<16x8xf32>
    %c0_10 = arith.constant 0 : index
    %c0_11 = arith.constant 0 : index
    %12 = vector.load %arg6[%c0_10, %c0_11] : memref<16x1xf32, #tpu.memory_space<vmem>>, vector<16x1xf32>
    %cst_12 = arith.constant dense<0xFF800000> : vector<16xf32>
    %13 = vector.multi_reduction <maximumf>, %11, %cst_12 [1] : vector<16x8xf32> to vector<16xf32>
    %14 = vector.shape_cast %13 : vector<16xf32> to vector<16x1xf32>
    %15 = arith.maximumf %12, %14 : vector<16x1xf32>
    %16 = arith.subf %12, %15 : vector<16x1xf32>
    %17 = math.exp %16 : vector<16x1xf32>
    %18 = vector.broadcast %15 : vector<16x1xf32> to vector<16x8xf32>
    %19 = arith.subf %11, %18 : vector<16x8xf32>
    %20 = math.exp %19 : vector<16x8xf32>
    %c0_13 = arith.constant 0 : index
    %c0_14 = arith.constant 0 : index
    %21 = vector.load %arg7[%c0_13, %c0_14] : memref<16x1xf32, #tpu.memory_space<vmem>>, vector<16x1xf32>
    %22 = arith.mulf %17, %21 : vector<16x1xf32>
    %cst_15 = arith.constant dense<0.000000e+00> : vector<16xf32>
    %23 = vector.multi_reduction <add>, %20, %cst_15 [1] : vector<16x8xf32> to vector<16xf32>
    %24 = vector.shape_cast %23 : vector<16xf32> to vector<16x1xf32>
    %25 = arith.addf %22, %24 : vector<16x1xf32>
    %c0_16 = arith.constant 0 : index
    %c0_17 = arith.constant 0 : index
    %26 = vector.load %arg7[%c0_16, %c0_17] : memref<16x1xf32, #tpu.memory_space<vmem>>, vector<16x1xf32>
    tpu.vector_store %arg7[%c0_16, %c0_17], %25 {strides = array<i32>} : memref<16x1xf32, #tpu.memory_space<vmem>>, vector<16x1xf32>,
    %c0_18 = arith.constant 0 : index
    %c0_19 = arith.constant 0 : index
    %27 = vector.load %arg8[%c0_18, %c0_19] : memref<16x128xf32, #tpu.memory_space<vmem>>, vector<16x128xf32>
    %28 = vector.broadcast %17 : vector<16x1xf32> to vector<16x128xf32>
    %29 = arith.mulf %28, %27 : vector<16x128xf32>
    %30 = arith.truncf %20 : vector<16x8xf32> to vector<16x8xbf16>
    %cst_20 = arith.constant dense<0.000000e+00> : vector<16x128xf32>
    %31 = tpu.matmul %30, %8, %cst_20 {dimension_numbers = #tpu.dot_dimension_numbers<[1], [0], [0], [1], [0, 0, 1, 1], [], []>} : vector<16x8xbf16>, vector<8x128xbf16>, vector<16x128xf32> -> vector<16x128xf32>
    %32 = arith.addf %29, %31 : vector<16x128xf32>
    %c0_21 = arith.constant 0 : index
    %c0_22 = arith.constant 0 : index
    %33 = vector.load %arg8[%c0_21, %c0_22] : memref<16x128xf32, #tpu.memory_space<vmem>>, vector<16x128xf32>
    tpu.vector_store %arg8[%c0_21, %c0_22], %32 {strides = array<i32>} : memref<16x128xf32, #tpu.memory_space<vmem>>, vector<16x128xf32>,
    %c0_23 = arith.constant 0 : index
    %c0_24 = arith.constant 0 : index
    %34 = vector.load %arg6[%c0_23, %c0_24] : memref<16x1xf32, #tpu.memory_space<vmem>>, vector<16x1xf32>
    tpu.vector_store %arg6[%c0_23, %c0_24], %15 {strides = array<i32>} : memref<16x1xf32, #tpu.memory_space<vmem>>, vector<16x1xf32>,
    %c0_i32_25 = arith.constant 0 : i32
    %35 = arith.cmpi eq, %arg1, %c0_i32_25 : i32
    %36 = arith.extui %35 : i1 to i32
    %c0_i32_26 = arith.constant 0 : i32
    %37 = arith.cmpi ne, %36, %c0_i32_26 : i32
    scf.if %37 {
      %c0_27 = arith.constant 0 : index
      %c0_28 = arith.constant 0 : index
      %38 = vector.load %arg8[%c0_27, %c0_28] : memref<16x128xf32, #tpu.memory_space<vmem>>, vector<16x128xf32>
      %c0_29 = arith.constant 0 : index
      %c0_30 = arith.constant 0 : index
      %39 = vector.load %arg7[%c0_29, %c0_30] : memref<16x1xf32, #tpu.memory_space<vmem>>, vector<16x1xf32>
      %40 = tpu.reciprocal %39 {approx = true} : vector<16x1xf32> -> vector<16x1xf32>
      %41 = vector.broadcast %40 : vector<16x1xf32> to vector<16x128xf32>
      %42 = arith.mulf %38, %41 : vector<16x128xf32>
      %43 = arith.truncf %42 : vector<16x128xf32> to vector<16x128xbf16>
      %c0_31 = arith.constant 0 : index
      %c0_32 = arith.constant 0 : index
      %c0_33 = arith.constant 0 : index
      %44 = vector.load %arg5[%c0_31, %c0_32, %c0_33] : memref<1x16x128xbf16, #tpu.memory_space<vmem>>, vector<1x16x128xbf16>
      %45 = vector.shape_cast %44 : vector<1x16x128xbf16> to vector<16x128xbf16>
      %46 = vector.shape_cast %43 : vector<16x128xbf16> to vector<1x16x128xbf16>
      tpu.vector_store %arg5[%c0_31, %c0_32, %c0_33], %46 {strides = array<i32>} : memref<1x16x128xbf16, #tpu.memory_space<vmem>>, vector<1x16x128xbf16>,
    } else {
    }
    return
  }
  func.func @transform_0(%arg0: i32, %arg1: i32) -> (i32, i32, i32) {
    %c0_i32 = arith.constant 0 : i32
    %c0_i32_0 = arith.constant 0 : i32
    %c0_i32_1 = arith.constant 0 : i32
    return %arg0, %c0_i32, %c0_i32_0 : i32, i32, i32
  }
  func.func @transform_1(%arg0: i32, %arg1: i32) -> (i32, i32, i32) {
    %c0_i32 = arith.constant 0 : i32
    %c0_i32_0 = arith.constant 0 : i32
    return %arg0, %arg1, %c0_i32 : i32, i32, i32
  }
  func.func @transform_2(%arg0: i32, %arg1: i32) -> (i32, i32, i32) {
    %c0_i32 = arith.constant 0 : i32
    %c0_i32_0 = arith.constant 0 : i32
    return %arg0, %arg1, %c0_i32 : i32, i32, i32
  }
  func.func @transform_3(%arg0: i32, %arg1: i32) -> (i32, i32, i32) {
    %c0_i32 = arith.constant 0 : i32
    %c0_i32_0 = arith.constant 0 : i32
    %c0_i32_1 = arith.constant 0 : i32
    return %arg0, %c0_i32, %c0_i32_0 : i32, i32, i32
  }
}

module attributes {stable_mosaic.version = 11 : i64} {
  func.func @_ffn_kernel(%arg0: i32, %arg1: i32, %arg2: memref<16x256xbf16, #tpu.memory_space<vmem>>, %arg3: memref<256x384xbf16, #tpu.memory_space<vmem>>, %arg4: memref<256x384xbf16, #tpu.memory_space<vmem>>, %arg5: memref<384x256xbf16, #tpu.memory_space<vmem>>, %arg6: memref<16x256xbf16, #tpu.memory_space<vmem>>, %arg7: memref<16x256xf32, #tpu.memory_space<vmem>>, %arg8: memref<16x256xbf16, #tpu.memory_space<vmem>>) attributes {dimension_semantics = [#tpu.dimension_semantics<parallel>, #tpu.dimension_semantics<arbitrary>], iteration_bounds = array<i64: 1, 2>, scalar_prefetch = 0 : i64, scratch_operands = 2 : i64, tpu.core_type = #tpu.core_type<tc>, window_params = [{transform_indices = @transform_0, window_bounds = array<i64: 16, 256>}, {transform_indices = @transform_1, window_bounds = array<i64: 256, 384>}, {transform_indices = @transform_2, window_bounds = array<i64: 256, 384>}, {transform_indices = @transform_3, window_bounds = array<i64: 384, 256>}, {transform_indices = @transform_4, window_bounds = array<i64: 16, 256>}]} {
    %c0_i32 = arith.constant 0 : i32
    %0 = arith.cmpi eq, %arg1, %c0_i32 : i32
    %1 = arith.extui %0 : i1 to i32
    %c0_i32_0 = arith.constant 0 : i32
    %2 = arith.cmpi ne, %1, %c0_i32_0 : i32
    scf.if %2 {
      %c0_16 = arith.constant 0 : index
      %c0_17 = arith.constant 0 : index
      %24 = vector.load %arg2[%c0_16, %c0_17] : memref<16x256xbf16, #tpu.memory_space<vmem>>, vector<16x256xbf16>
      %25 = arith.extf %24 : vector<16x256xbf16> to vector<16x256xf32>
      %26 = arith.mulf %25, %25 : vector<16x256xf32>
      %cst_18 = arith.constant dense<0.000000e+00> : vector<16xf32>
      %27 = vector.multi_reduction <add>, %26, %cst_18 [1] : vector<16x256xf32> to vector<16xf32>
      %28 = vector.shape_cast %27 : vector<16xf32> to vector<16x1xf32>
      %cst_19 = arith.constant 2.560000e+02 : f32
      %29 = vector.broadcast %cst_19 : f32 to vector<16x1xf32>
      %30 = arith.divf %28, %29 : vector<16x1xf32>
      %31 = math.sqrt %30 : vector<16x1xf32>
      %cst_20 = arith.constant 9.99999974E-6 : f32
      %32 = vector.broadcast %cst_20 : f32 to vector<16x1xf32>
      %33 = arith.addf %31, %32 : vector<16x1xf32>
      %34 = vector.broadcast %33 : vector<16x1xf32> to vector<16x256xf32>
      %35 = arith.divf %25, %34 : vector<16x256xf32>
      %36 = arith.truncf %35 : vector<16x256xf32> to vector<16x256xbf16>
      %c0_21 = arith.constant 0 : index
      %c0_22 = arith.constant 0 : index
      %37 = vector.load %arg8[%c0_21, %c0_22] : memref<16x256xbf16, #tpu.memory_space<vmem>>, vector<16x256xbf16>
      tpu.vector_store %arg8[%c0_21, %c0_22], %36 {strides = array<i32>} : memref<16x256xbf16, #tpu.memory_space<vmem>>, vector<16x256xbf16>,
      %cst_23 = arith.constant 0.000000e+00 : f32
      %38 = vector.broadcast %cst_23 : f32 to vector<16x256xf32>
      %c0_24 = arith.constant 0 : index
      %c0_25 = arith.constant 0 : index
      %39 = vector.load %arg7[%c0_24, %c0_25] : memref<16x256xf32, #tpu.memory_space<vmem>>, vector<16x256xf32>
      tpu.vector_store %arg7[%c0_24, %c0_25], %38 {strides = array<i32>} : memref<16x256xf32, #tpu.memory_space<vmem>>, vector<16x256xf32>,
    } else {
    }
    %c0 = arith.constant 0 : index
    %c0_1 = arith.constant 0 : index
    %3 = vector.load %arg8[%c0, %c0_1] : memref<16x256xbf16, #tpu.memory_space<vmem>>, vector<16x256xbf16>
    %c0_2 = arith.constant 0 : index
    %c0_3 = arith.constant 0 : index
    %4 = vector.load %arg3[%c0_2, %c0_3] : memref<256x384xbf16, #tpu.memory_space<vmem>>, vector<256x384xbf16>
    %cst = arith.constant dense<0.000000e+00> : vector<16x384xf32>
    %5 = tpu.matmul %3, %4, %cst {dimension_numbers = #tpu.dot_dimension_numbers<[1], [0], [0], [1], [0, 0, 1, 1], [], []>} : vector<16x256xbf16>, vector<256x384xbf16>, vector<16x384xf32> -> vector<16x384xf32>
    %c0_4 = arith.constant 0 : index
    %c0_5 = arith.constant 0 : index
    %6 = vector.load %arg4[%c0_4, %c0_5] : memref<256x384xbf16, #tpu.memory_space<vmem>>, vector<256x384xbf16>
    %cst_6 = arith.constant dense<0.000000e+00> : vector<16x384xf32>
    %7 = tpu.matmul %3, %6, %cst_6 {dimension_numbers = #tpu.dot_dimension_numbers<[1], [0], [0], [1], [0, 0, 1, 1], [], []>} : vector<16x256xbf16>, vector<256x384xbf16>, vector<16x384xf32> -> vector<16x384xf32>
    %8 = arith.negf %5 : vector<16x384xf32>
    %9 = math.exp %8 : vector<16x384xf32>
    %cst_7 = arith.constant 1.000000e+00 : f32
    %10 = vector.broadcast %cst_7 : f32 to vector<16x384xf32>
    %11 = arith.addf %10, %9 : vector<16x384xf32>
    %12 = arith.divf %10, %11 : vector<16x384xf32>
    %13 = arith.mulf %5, %12 : vector<16x384xf32>
    %14 = arith.mulf %13, %7 : vector<16x384xf32>
    %c0_8 = arith.constant 0 : index
    %c0_9 = arith.constant 0 : index
    %15 = vector.load %arg7[%c0_8, %c0_9] : memref<16x256xf32, #tpu.memory_space<vmem>>, vector<16x256xf32>
    %16 = arith.truncf %14 : vector<16x384xf32> to vector<16x384xbf16>
    %c0_10 = arith.constant 0 : index
    %c0_11 = arith.constant 0 : index
    %17 = vector.load %arg5[%c0_10, %c0_11] : memref<384x256xbf16, #tpu.memory_space<vmem>>, vector<384x256xbf16>
    %cst_12 = arith.constant dense<0.000000e+00> : vector<16x256xf32>
    %18 = tpu.matmul %16, %17, %cst_12 {dimension_numbers = #tpu.dot_dimension_numbers<[1], [0], [0], [1], [0, 0, 1, 1], [], []>} : vector<16x384xbf16>, vector<384x256xbf16>, vector<16x256xf32> -> vector<16x256xf32>
    %19 = arith.addf %15, %18 : vector<16x256xf32>
    %c0_13 = arith.constant 0 : index
    %c0_14 = arith.constant 0 : index
    %20 = vector.load %arg7[%c0_13, %c0_14] : memref<16x256xf32, #tpu.memory_space<vmem>>, vector<16x256xf32>
    tpu.vector_store %arg7[%c0_13, %c0_14], %19 {strides = array<i32>} : memref<16x256xf32, #tpu.memory_space<vmem>>, vector<16x256xf32>,
    %c1_i32 = arith.constant 1 : i32
    %21 = arith.cmpi eq, %arg1, %c1_i32 : i32
    %22 = arith.extui %21 : i1 to i32
    %c0_i32_15 = arith.constant 0 : i32
    %23 = arith.cmpi ne, %22, %c0_i32_15 : i32
    scf.if %23 {
      %c0_16 = arith.constant 0 : index
      %c0_17 = arith.constant 0 : index
      %24 = vector.load %arg2[%c0_16, %c0_17] : memref<16x256xbf16, #tpu.memory_space<vmem>>, vector<16x256xbf16>
      %25 = arith.extf %24 : vector<16x256xbf16> to vector<16x256xf32>
      %c0_18 = arith.constant 0 : index
      %c0_19 = arith.constant 0 : index
      %26 = vector.load %arg7[%c0_18, %c0_19] : memref<16x256xf32, #tpu.memory_space<vmem>>, vector<16x256xf32>
      %27 = arith.addf %25, %26 : vector<16x256xf32>
      %28 = arith.truncf %27 : vector<16x256xf32> to vector<16x256xbf16>
      %c0_20 = arith.constant 0 : index
      %c0_21 = arith.constant 0 : index
      %29 = vector.load %arg6[%c0_20, %c0_21] : memref<16x256xbf16, #tpu.memory_space<vmem>>, vector<16x256xbf16>
      tpu.vector_store %arg6[%c0_20, %c0_21], %28 {strides = array<i32>} : memref<16x256xbf16, #tpu.memory_space<vmem>>, vector<16x256xbf16>,
    } else {
    }
    return
  }
  func.func @transform_0(%arg0: i32, %arg1: i32) -> (i32, i32) {
    %c0_i32 = arith.constant 0 : i32
    %c0_i32_0 = arith.constant 0 : i32
    return %arg0, %c0_i32 : i32, i32
  }
  func.func @transform_1(%arg0: i32, %arg1: i32) -> (i32, i32) {
    %c0_i32 = arith.constant 0 : i32
    %c0_i32_0 = arith.constant 0 : i32
    return %c0_i32, %arg1 : i32, i32
  }
  func.func @transform_2(%arg0: i32, %arg1: i32) -> (i32, i32) {
    %c0_i32 = arith.constant 0 : i32
    %c0_i32_0 = arith.constant 0 : i32
    return %c0_i32, %arg1 : i32, i32
  }
  func.func @transform_3(%arg0: i32, %arg1: i32) -> (i32, i32) {
    %c0_i32 = arith.constant 0 : i32
    %c0_i32_0 = arith.constant 0 : i32
    return %arg1, %c0_i32 : i32, i32
  }
  func.func @transform_4(%arg0: i32, %arg1: i32) -> (i32, i32) {
    %c0_i32 = arith.constant 0 : i32
    %c0_i32_0 = arith.constant 0 : i32
    return %arg0, %c0_i32 : i32, i32
  }
}

module attributes {stable_mosaic.version = 11 : i64} {
  func.func @_rmsnorm_matmul_kernel(%arg0: i32, %arg1: i32, %arg2: memref<16x256xbf16, #tpu.memory_space<vmem>>, %arg3: memref<256x256xbf16, #tpu.memory_space<vmem>>, %arg4: memref<16x256xbf16, #tpu.memory_space<vmem>>, %arg5: memref<16x256xbf16, #tpu.memory_space<vmem>>) attributes {dimension_semantics = [#tpu.dimension_semantics<parallel>, #tpu.dimension_semantics<arbitrary>], iteration_bounds = array<i64: 1, 2>, scalar_prefetch = 0 : i64, scratch_operands = 1 : i64, tpu.core_type = #tpu.core_type<tc>, window_params = [{transform_indices = @transform_0, window_bounds = array<i64: 16, 256>}, {transform_indices = @transform_1, window_bounds = array<i64: 256, 256>}, {transform_indices = @transform_2, window_bounds = array<i64: 16, 256>}]} {
    %c0_i32 = arith.constant 0 : i32
    %0 = arith.cmpi eq, %arg1, %c0_i32 : i32
    %1 = arith.extui %0 : i1 to i32
    %c0_i32_0 = arith.constant 0 : i32
    %2 = arith.cmpi ne, %1, %c0_i32_0 : i32
    scf.if %2 {
      %c0_6 = arith.constant 0 : index
      %c0_7 = arith.constant 0 : index
      %8 = vector.load %arg2[%c0_6, %c0_7] : memref<16x256xbf16, #tpu.memory_space<vmem>>, vector<16x256xbf16>
      %9 = arith.extf %8 : vector<16x256xbf16> to vector<16x256xf32>
      %10 = arith.mulf %9, %9 : vector<16x256xf32>
      %cst_8 = arith.constant dense<0.000000e+00> : vector<16xf32>
      %11 = vector.multi_reduction <add>, %10, %cst_8 [1] : vector<16x256xf32> to vector<16xf32>
      %12 = vector.shape_cast %11 : vector<16xf32> to vector<16x1xf32>
      %cst_9 = arith.constant 2.560000e+02 : f32
      %13 = vector.broadcast %cst_9 : f32 to vector<16x1xf32>
      %14 = arith.divf %12, %13 : vector<16x1xf32>
      %15 = math.sqrt %14 : vector<16x1xf32>
      %cst_10 = arith.constant 9.99999974E-6 : f32
      %16 = vector.broadcast %cst_10 : f32 to vector<16x1xf32>
      %17 = arith.addf %15, %16 : vector<16x1xf32>
      %18 = vector.broadcast %17 : vector<16x1xf32> to vector<16x256xf32>
      %19 = arith.divf %9, %18 : vector<16x256xf32>
      %20 = arith.truncf %19 : vector<16x256xf32> to vector<16x256xbf16>
      %c0_11 = arith.constant 0 : index
      %c0_12 = arith.constant 0 : index
      %21 = vector.load %arg5[%c0_11, %c0_12] : memref<16x256xbf16, #tpu.memory_space<vmem>>, vector<16x256xbf16>
      tpu.vector_store %arg5[%c0_11, %c0_12], %20 {strides = array<i32>} : memref<16x256xbf16, #tpu.memory_space<vmem>>, vector<16x256xbf16>,
    } else {
    }
    %c0 = arith.constant 0 : index
    %c0_1 = arith.constant 0 : index
    %3 = vector.load %arg5[%c0, %c0_1] : memref<16x256xbf16, #tpu.memory_space<vmem>>, vector<16x256xbf16>
    %c0_2 = arith.constant 0 : index
    %c0_3 = arith.constant 0 : index
    %4 = vector.load %arg3[%c0_2, %c0_3] : memref<256x256xbf16, #tpu.memory_space<vmem>>, vector<256x256xbf16>
    %cst = arith.constant dense<0.000000e+00> : vector<16x256xf32>
    %5 = tpu.matmul %3, %4, %cst {dimension_numbers = #tpu.dot_dimension_numbers<[1], [0], [0], [1], [0, 0, 1, 1], [], []>} : vector<16x256xbf16>, vector<256x256xbf16>, vector<16x256xf32> -> vector<16x256xf32>
    %6 = arith.truncf %5 : vector<16x256xf32> to vector<16x256xbf16>
    %c0_4 = arith.constant 0 : index
    %c0_5 = arith.constant 0 : index
    %7 = vector.load %arg4[%c0_4, %c0_5] : memref<16x256xbf16, #tpu.memory_space<vmem>>, vector<16x256xbf16>
    tpu.vector_store %arg4[%c0_4, %c0_5], %6 {strides = array<i32>} : memref<16x256xbf16, #tpu.memory_space<vmem>>, vector<16x256xbf16>,
    return
  }
  func.func @transform_0(%arg0: i32, %arg1: i32) -> (i32, i32) {
    %c0_i32 = arith.constant 0 : i32
    %c0_i32_0 = arith.constant 0 : i32
    return %arg0, %c0_i32 : i32, i32
  }
  func.func @transform_1(%arg0: i32, %arg1: i32) -> (i32, i32) {
    %c0_i32 = arith.constant 0 : i32
    %c0_i32_0 = arith.constant 0 : i32
    return %c0_i32, %arg1 : i32, i32
  }
  func.func @transform_2(%arg0: i32, %arg1: i32) -> (i32, i32) {
    %c0_i32 = arith.constant 0 : i32
    return %arg0, %arg1 : i32, i32
  }
}

module attributes {stable_mosaic.version = 11 : i64} {
  func.func @_rmsnorm_matmul_kernel(%arg0: i32, %arg1: i32, %arg2: memref<16x256xbf16, #tpu.memory_space<vmem>>, %arg3: memref<256x256xbf16, #tpu.memory_space<vmem>>, %arg4: memref<16x256xf32, #tpu.memory_space<vmem>>, %arg5: memref<16x256xbf16, #tpu.memory_space<vmem>>) attributes {dimension_semantics = [#tpu.dimension_semantics<parallel>, #tpu.dimension_semantics<arbitrary>], iteration_bounds = array<i64: 1, 1>, scalar_prefetch = 0 : i64, scratch_operands = 1 : i64, tpu.core_type = #tpu.core_type<tc>, window_params = [{transform_indices = @transform_0, window_bounds = array<i64: 16, 256>}, {transform_indices = @transform_1, window_bounds = array<i64: 256, 256>}, {transform_indices = @transform_2, window_bounds = array<i64: 16, 256>}]} {
    %c0_i32 = arith.constant 0 : i32
    %0 = arith.cmpi eq, %arg1, %c0_i32 : i32
    %1 = arith.extui %0 : i1 to i32
    %c0_i32_0 = arith.constant 0 : i32
    %2 = arith.cmpi ne, %1, %c0_i32_0 : i32
    scf.if %2 {
      %c0_6 = arith.constant 0 : index
      %c0_7 = arith.constant 0 : index
      %7 = vector.load %arg2[%c0_6, %c0_7] : memref<16x256xbf16, #tpu.memory_space<vmem>>, vector<16x256xbf16>
      %8 = arith.extf %7 : vector<16x256xbf16> to vector<16x256xf32>
      %9 = arith.mulf %8, %8 : vector<16x256xf32>
      %cst_8 = arith.constant dense<0.000000e+00> : vector<16xf32>
      %10 = vector.multi_reduction <add>, %9, %cst_8 [1] : vector<16x256xf32> to vector<16xf32>
      %11 = vector.shape_cast %10 : vector<16xf32> to vector<16x1xf32>
      %cst_9 = arith.constant 2.560000e+02 : f32
      %12 = vector.broadcast %cst_9 : f32 to vector<16x1xf32>
      %13 = arith.divf %11, %12 : vector<16x1xf32>
      %14 = math.sqrt %13 : vector<16x1xf32>
      %cst_10 = arith.constant 9.99999974E-6 : f32
      %15 = vector.broadcast %cst_10 : f32 to vector<16x1xf32>
      %16 = arith.addf %14, %15 : vector<16x1xf32>
      %17 = vector.broadcast %16 : vector<16x1xf32> to vector<16x256xf32>
      %18 = arith.divf %8, %17 : vector<16x256xf32>
      %19 = arith.truncf %18 : vector<16x256xf32> to vector<16x256xbf16>
      %c0_11 = arith.constant 0 : index
      %c0_12 = arith.constant 0 : index
      %20 = vector.load %arg5[%c0_11, %c0_12] : memref<16x256xbf16, #tpu.memory_space<vmem>>, vector<16x256xbf16>
      tpu.vector_store %arg5[%c0_11, %c0_12], %19 {strides = array<i32>} : memref<16x256xbf16, #tpu.memory_space<vmem>>, vector<16x256xbf16>,
    } else {
    }
    %c0 = arith.constant 0 : index
    %c0_1 = arith.constant 0 : index
    %3 = vector.load %arg5[%c0, %c0_1] : memref<16x256xbf16, #tpu.memory_space<vmem>>, vector<16x256xbf16>
    %c0_2 = arith.constant 0 : index
    %c0_3 = arith.constant 0 : index
    %4 = vector.load %arg3[%c0_2, %c0_3] : memref<256x256xbf16, #tpu.memory_space<vmem>>, vector<256x256xbf16>
    %cst = arith.constant dense<0.000000e+00> : vector<16x256xf32>
    %5 = tpu.matmul %3, %4, %cst {dimension_numbers = #tpu.dot_dimension_numbers<[1], [0], [0], [1], [0, 0, 1, 1], [], []>} : vector<16x256xbf16>, vector<256x256xbf16>, vector<16x256xf32> -> vector<16x256xf32>
    %c0_4 = arith.constant 0 : index
    %c0_5 = arith.constant 0 : index
    %6 = vector.load %arg4[%c0_4, %c0_5] : memref<16x256xf32, #tpu.memory_space<vmem>>, vector<16x256xf32>
    tpu.vector_store %arg4[%c0_4, %c0_5], %5 {strides = array<i32>} : memref<16x256xf32, #tpu.memory_space<vmem>>, vector<16x256xf32>,
    return
  }
  func.func @transform_0(%arg0: i32, %arg1: i32) -> (i32, i32) {
    %c0_i32 = arith.constant 0 : i32
    %c0_i32_0 = arith.constant 0 : i32
    return %arg0, %c0_i32 : i32, i32
  }
  func.func @transform_1(%arg0: i32, %arg1: i32) -> (i32, i32) {
    %c0_i32 = arith.constant 0 : i32
    %c0_i32_0 = arith.constant 0 : i32
    return %c0_i32, %arg1 : i32, i32
  }
  func.func @transform_2(%arg0: i32, %arg1: i32) -> (i32, i32) {
    %c0_i32 = arith.constant 0 : i32
    return %arg0, %arg1 : i32, i32
  }
}

</mosaic_0001>

<llo_original>
// kernel: transformer_forward.12
$region0: #{transformer_forward.12}
  #allocation0 [shape = 'u32[]', space=smem, size = 0x4, offset = 0x4, fixed_abs, tag = 'smem constant byte address 0x4 - core index']
  #allocation1 [shape = 'u32[72,128]{1,0:T(1,128)}', space=vmem, size = 0x9000, scoped, tag = 'internal scratch']
  %s0 = inlined_call_operand.vmem [shape: bf16[2,1,8,128], index: 0, kind: input, shape index: {}]
  %s1 = inlined_call_operand.vmem [shape: bf16[2,1,8,128], index: 1, kind: input, shape index: {}]
  %s2 = inlined_call_operand.vmem [shape: bf16[2,1,16,128], index: 2, kind: input, shape index: {}, may-alias: {2,4}]
  %s3 = inlined_call_operand.vmem [shape: bf16[2,1,16,128], index: 3, kind: input, shape index: {}, may-alias: {3,5}]
  %s4 = inlined_call_operand.vmem [shape: bf16[2,1,16,128], index: 4, kind: output, shape index: {0}, may-alias: {2,4}]
  %s5 = inlined_call_operand.vmem [shape: bf16[2,1,16,128], index: 5, kind: output, shape index: {1}, may-alias: {3,5}]
  %6 = xla_tuple %s4, %s5
  %s7 = sld [smem:[#allocation0]]
  $region100: #{transformer_forward.12} parent=0
    _
  %s9 = ssub.s32 1, %s7
  %s10 = scalar_select 0, %s9, %s7
  $region1: #{transformer_forward.12} parent=0
    #allocation2 [shape = 'u8[4096]{0}', space=vmem, size = 0x1000, scoped, tag = 'output window, operand 0, single buffered']
    #allocation3 [shape = 'u8[4096]{0}', space=vmem, size = 0x1000, scoped, tag = 'output window, operand 1, single buffered']
    // Predicated region
    $region2: #{transformer_forward.12} parent=1 // pred_check
      _
    $region3: #{transformer_forward.12} parent=1 // pred_check_branch
      %12 = sbr.rel (0) target = $region5
    $region4: #{transformer_forward.12} parent=1 // pred_region
      _
    $region5: #{transformer_forward.12} parent=1 // pred_fallthru
      _
    // Predicated region
    $region6: #{transformer_forward.12} parent=1 // pred_check
      _
    $region7: #{transformer_forward.12} parent=1 // pred_check_branch
      %14 = sbr.rel (0) target = $region9
    $region8: #{transformer_forward.12} parent=1 // pred_region
      _
    $region9: #{transformer_forward.12} parent=1 // pred_fallthru
      _
    %v15 = vld [vmem:[%s0] sm:$0xf]
    %v16 = vld [vmem:[%s0 + $0x4] sm:$0xf]
    %17 = vst [vmem:[#allocation2] sm:$0xf] %v15
    %18 = vst [vmem:[#allocation2 + $0x4] sm:$0xf] %v16
    %v19 = vld [vmem:[%s1] sm:$0xf]
    %v20 = vld [vmem:[%s1 + $0x4] sm:$0xf]
    %21 = vst [vmem:[#allocation3] sm:$0xf] %v19
    %22 = vst [vmem:[#allocation3 + $0x4] sm:$0xf] %v20
    // Predicated region
    $region10: #{transformer_forward.12} parent=1 // pred_check
      _
    $region11: #{transformer_forward.12} parent=1 // pred_check_branch
      %24 = sbr.rel (0) target = $region13
    $region12: #{transformer_forward.12} parent=1 // pred_region
      // Predicated region
      $region14: #{transformer_forward.12} parent=12 // pred_check
        _
      $region15: #{transformer_forward.12} parent=12 // pred_check_branch
        %26 = sbr.rel (0) target = $region17
      $region16: #{transformer_forward.12} parent=12 // pred_region
        // Predicated region
        $region18: #{transformer_forward.12} parent=16 // pred_check
          _
        $region19: #{transformer_forward.12} parent=16 // pred_check_branch
          %28 = sbr.rel target = $region21
        $region20: #{transformer_forward.12} parent=16 // pred_region
          // Predicated region
          $region33: #{transformer_forward.12} parent=20 // pred_check
            _
          $region34: #{transformer_forward.12} parent=20 // pred_check_branch
            %46 = sbr.rel (0) target = $region36
          $region35: #{transformer_forward.12} parent=20 // pred_region
            loop: start=0, step=1, limit=1
            $region37: #{transformer_forward.12} parent=35 // loop_pre_header
              _
            $region38: #{transformer_forward.12} parent=35 // loop_header
              %s48 = sphi 0, %s52
              %p49 = scmp.ge.s32.totalorder %s48, 1
              %s53 = sphi [#allocation2], [#allocation2]
              %s54 = sphi %s4, %s4
            $region39: #{transformer_forward.12} parent=35 // loop_header_branch
              %51 = sbr.rel (%p49) target = $region43
            $region40: #{transformer_forward.12} parent=35 // loop_body
              _
            $region41: #{transformer_forward.12} parent=35 // loop_footer
              %s52 = sadd.s32 1, %s48
            $region42: #{transformer_forward.12} parent=35 // loop_footer_branch
              %47 = sbr.rel target = $region38
            $region43: #{transformer_forward.12} parent=35 // loop_exit
              _
            %s56 = ssub.s32 16, 1
            loop: start=0, step=1, limit=1
            $region44: #{transformer_forward.12} parent=35 // loop_pre_header
              _
            $region45: #{transformer_forward.12} parent=35 // loop_header
              %s58 = sphi 0, %s62
              %p59 = scmp.ge.s32.totalorder %s58, 1
              %s63 = sphi [#allocation2], [#allocation2]
              %s64 = sphi %s4, %s4
            $region46: #{transformer_forward.12} parent=35 // loop_header_branch
              %61 = sbr.rel (%p59) target = $region50
            $region47: #{transformer_forward.12} parent=35 // loop_body
              %v65 = vld [vmem:[%s63] sm:%s56]
              %66 = vst [vmem:[%s64] sm:%s56] %v65
              %v67 = vld [vmem:[%s63 + $0x4] sm:%s56]
              %68 = vst [vmem:[%s64 + $0x8] sm:%s56] %v67
            $region48: #{transformer_forward.12} parent=35 // loop_footer
              %s62 = sadd.s32 1, %s58
            $region49: #{transformer_forward.12} parent=35 // loop_footer_branch
              %57 = sbr.rel target = $region45
            $region50: #{transformer_forward.12} parent=35 // loop_exit
              _
          $region36: #{transformer_forward.12} parent=20 // pred_fallthru
            _
        $region21: #{transformer_forward.12} parent=16 // pred_fallthru
          _
        // Predicated region
        $region22: #{transformer_forward.12} parent=16 // pred_check
          _
        $region23: #{transformer_forward.12} parent=16 // pred_check_branch
          %30 = sbr.rel (0) target = $region25
        $region24: #{transformer_forward.12} parent=16 // pred_region
          %s32 = ssub.s32 16, 1
          loop: start=0, step=1, limit=1
          $region26: #{transformer_forward.12} parent=24 // loop_pre_header
            _
          $region27: #{transformer_forward.12} parent=24 // loop_header
            %s34 = sphi 0, %s38
            %p35 = scmp.ge.s32.totalorder %s34, 1
            %s39 = sphi [#allocation2], [#allocation2]
            %s40 = sphi %s4, %s4
          $region28: #{transformer_forward.12} parent=24 // loop_header_branch
            %37 = sbr.rel (%p35) target = $region32
          $region29: #{transformer_forward.12} parent=24 // loop_body
            %v41 = vld [vmem:[%s39] sm:%s32]
            %42 = vst [vmem:[%s40] sm:%s32] %v41
            %v43 = vld [vmem:[%s39 + $0x4] sm:%s32]
            %44 = vst [vmem:[%s40 + $0x8] sm:%s32] %v43
          $region30: #{transformer_forward.12} parent=24 // loop_footer
            %s38 = sadd.s32 1, %s34
          $region31: #{transformer_forward.12} parent=24 // loop_footer_branch
            %33 = sbr.rel target = $region27
          $region32: #{transformer_forward.12} parent=24 // loop_exit
            _
        $region25: #{transformer_forward.12} parent=16 // pred_fallthru
          _
      $region17: #{transformer_forward.12} parent=12 // pred_fallthru
        _
      %69 = vnop
    $region13: #{transformer_forward.12} parent=1 // pred_fallthru
      _
    // Predicated region
    $region51: #{transformer_forward.12} parent=1 // pred_check
      _
    $region52: #{transformer_forward.12} parent=1 // pred_check_branch
      %71 = sbr.rel (0) target = $region54
    $region53: #{transformer_forward.12} parent=1 // pred_region
      // Predicated region
      $region55: #{transformer_forward.12} parent=53 // pred_check
        _
      $region56: #{transformer_forward.12} parent=53 // pred_check_branch
        %73 = sbr.rel (0) target = $region58
      $region57: #{transformer_forward.12} parent=53 // pred_region
        // Predicated region
        $region59: #{transformer_forward.12} parent=57 // pred_check
          _
        $region60: #{transformer_forward.12} parent=57 // pred_check_branch
          %75 = sbr.rel target = $region62
        $region61: #{transformer_forward.12} parent=57 // pred_region
          // Predicated region
          $region74: #{transformer_forward.12} parent=61 // pred_check
            _
          $region75: #{transformer_forward.12} parent=61 // pred_check_branch
            %93 = sbr.rel (0) target = $region77
          $region76: #{transformer_forward.12} parent=61 // pred_region
            loop: start=0, step=1, limit=1
            $region78: #{transformer_forward.12} parent=76 // loop_pre_header
              _
            $region79: #{transformer_forward.12} parent=76 // loop_header
              %s95 = sphi 0, %s99
              %p96 = scmp.ge.s32.totalorder %s95, 1
              %s100 = sphi [#allocation3], [#allocation3]
              %s101 = sphi %s5, %s5
            $region80: #{transformer_forward.12} parent=76 // loop_header_branch
              %98 = sbr.rel (%p96) target = $region84
            $region81: #{transformer_forward.12} parent=76 // loop_body
              _
            $region82: #{transformer_forward.12} parent=76 // loop_footer
              %s99 = sadd.s32 1, %s95
            $region83: #{transformer_forward.12} parent=76 // loop_footer_branch
              %94 = sbr.rel target = $region79
            $region84: #{transformer_forward.12} parent=76 // loop_exit
              _
            %s103 = ssub.s32 16, 1
            loop: start=0, step=1, limit=1
            $region85: #{transformer_forward.12} parent=76 // loop_pre_header
              _
            $region86: #{transformer_forward.12} parent=76 // loop_header
              %s105 = sphi 0, %s109
              %p106 = scmp.ge.s32.totalorder %s105, 1
              %s110 = sphi [#allocation3], [#allocation3]
              %s111 = sphi %s5, %s5
            $region87: #{transformer_forward.12} parent=76 // loop_header_branch
              %108 = sbr.rel (%p106) target = $region91
            $region88: #{transformer_forward.12} parent=76 // loop_body
              %v112 = vld [vmem:[%s110] sm:%s103]
              %113 = vst [vmem:[%s111] sm:%s103] %v112
              %v114 = vld [vmem:[%s110 + $0x4] sm:%s103]
              %115 = vst [vmem:[%s111 + $0x8] sm:%s103] %v114
            $region89: #{transformer_forward.12} parent=76 // loop_footer
              %s109 = sadd.s32 1, %s105
            $region90: #{transformer_forward.12} parent=76 // loop_footer_branch
              %104 = sbr.rel target = $region86
            $region91: #{transformer_forward.12} parent=76 // loop_exit
              _
          $region77: #{transformer_forward.12} parent=61 // pred_fallthru
            _
        $region62: #{transformer_forward.12} parent=57 // pred_fallthru
          _
        // Predicated region
        $region63: #{transformer_forward.12} parent=57 // pred_check
          _
        $region64: #{transformer_forward.12} parent=57 // pred_check_branch
          %77 = sbr.rel (0) target = $region66
        $region65: #{transformer_forward.12} parent=57 // pred_region
          %s79 = ssub.s32 16, 1
          loop: start=0, step=1, limit=1
          $region67: #{transformer_forward.12} parent=65 // loop_pre_header
            _
          $region68: #{transformer_forward.12} parent=65 // loop_header
            %s81 = sphi 0, %s85
            %p82 = scmp.ge.s32.totalorder %s81, 1
            %s86 = sphi [#allocation3], [#allocation3]
            %s87 = sphi %s5, %s5
          $region69: #{transformer_forward.12} parent=65 // loop_header_branch
            %84 = sbr.rel (%p82) target = $region73
          $region70: #{transformer_forward.12} parent=65 // loop_body
            %v88 = vld [vmem:[%s86] sm:%s79]
            %89 = vst [vmem:[%s87] sm:%s79] %v88
            %v90 = vld [vmem:[%s86 + $0x4] sm:%s79]
            %91 = vst [vmem:[%s87 + $0x8] sm:%s79] %v90
          $region71: #{transformer_forward.12} parent=65 // loop_footer
            %s85 = sadd.s32 1, %s81
          $region72: #{transformer_forward.12} parent=65 // loop_footer_branch
            %80 = sbr.rel target = $region68
          $region73: #{transformer_forward.12} parent=65 // loop_exit
            _
        $region66: #{transformer_forward.12} parent=57 // pred_fallthru
          _
      $region58: #{transformer_forward.12} parent=53 // pred_fallthru
        _
      %116 = vnop
    $region54: #{transformer_forward.12} parent=1 // pred_fallthru
      _
    // Predicated region
    $region92: #{transformer_forward.12} parent=1 // pred_check
      _
    $region93: #{transformer_forward.12} parent=1 // pred_check_branch
      %118 = sbr.rel (0) target = $region95
    $region94: #{transformer_forward.12} parent=1 // pred_region
      _
    $region95: #{transformer_forward.12} parent=1 // pred_fallthru
      _
    // Predicated region
    $region96: #{transformer_forward.12} parent=1 // pred_check
      _
    $region97: #{transformer_forward.12} parent=1 // pred_check_branch
      %120 = sbr.rel (0) target = $region99
    $region98: #{transformer_forward.12} parent=1 // pred_region
      _
    $region99: #{transformer_forward.12} parent=1 // pred_fallthru
      _

// kernel: transformer_forward.11
$region0: #{transformer_forward.11}
  #allocation0 [shape = 'u32[]', space=smem, size = 0x4, offset = 0x4, fixed_abs, tag = 'smem constant byte address 0x4 - core index']
  #allocation1 [shape = 'u32[72,128]{1,0:T(1,128)}', space=vmem, size = 0x9000, scoped, tag = 'internal scratch']
  #allocation2 [shape = 'bf16[16,256]{1,0:T(8,128)(2,1)}', space=vmem, size = 0x2000, scoped, tag = 'scratch operand']
  %s0 = inlined_call_operand.vmem [shape: bf16[16,256], index: 0, kind: input, shape index: {}]
  %s1 = inlined_call_operand.hbm [shape: bf16[256,512], index: 1, kind: input, shape index: {}]
  %s2 = inlined_call_operand.vmem [shape: bf16[16,512], index: 2, kind: output, shape index: {}]
  %s3 = sld [smem:[#allocation0]]
  $region83: #{transformer_forward.11} parent=0
    _
  %s5 = ssub.s32 1, %s3
  %s6 = scalar_select 0, %s5, %s3
  $region1: #{transformer_forward.11} parent=0
    #allocation3 [shape = 'u8[262144]{0}', space=vmem, size = 0x40000, scoped, tag = 'input window, operand 1']
    #allocation4 [shape = 's32[2]{0}', space=sflag, size = 0x8, scoped, tag = 'scoped memory for transformer_forward.11']
    #allocation5 [shape = 'u8[16384]{0}', space=vmem, size = 0x4000, scoped, tag = 'output window, operand 0']
    %7 = vsyncpa [#allocation4], 0
    %s8 = scalar_lea.sflag [#allocation4], 1
    %9 = vsyncpa %s8, 0
    loop: start=0, step=1, limit=4
    $region2: #{transformer_forward.11} parent=1 // loop_pre_header
      _
    $region3: #{transformer_forward.11} parent=1 // loop_header
      %s11 = sphi 0, %s15
      %p12 = scmp.ge.s32.totalorder %s11, 4
      %s18 = sphi 0, %s30
      %s19 = sphi 0, %s26
      %s20 = sphi 0, %s18
      %s21 = sphi 0, %s19
      %s22 = sphi 0, %s20
      %s23 = sphi 0, %s21
      %s33 = sphi 0, %s35
      %s36 = sphi 0, %s33
      %s37 = sphi 0, %s36
      %s53 = sphi 0, %s37
      %s59 = sphi 0, %s61
      %s62 = sphi 0, %s59
      %s63 = sphi 0, %s62
      %s79 = sphi 0, %s63
      %s87 = sphi 0, %s89
      %s90 = sphi 0, %s87
      %s91 = sphi 0, %s90
      %s107 = sphi 0, %s91
    $region4: #{transformer_forward.11} parent=1 // loop_header_branch
      %14 = sbr.rel (%p12) target = $region8
    $region5: #{transformer_forward.11} parent=1 // loop_body
      %s16 = ssub.s32 %s11, 1
      %s17 = ssub.s32 %s11, 2
      %s24 = sadd.s32 1, %s19
      %p25 = scmp.ge.s32.totalorder %s24, 2
      %s26 = scalar_select %p25, 0, %s24
      %s27 = sadd.s32 1, %s18
      %s28 = scalar_select %p25, %s27, %s18
      %p29 = scmp.ge.s32.totalorder %s28, 1
      %s30 = scalar_select %p29, 0, %s28
      %s31 = ssub.s32 %s18, %s30
      %p32 = scmp.eq.s32.totalorder %s31, 0
      %s34 = sadd.s32 %s33, 1
      %s35 = scalar_select %p32, %s33, %s34
      %p38 = pneg %p32
      %p39 = scmp.eq.s32.totalorder %s11, 1
      %p40 = por %p38, %p39
      %p41 = scmp.ne.s32.totalorder %s33, %s36
      %p42 = scmp.eq.s32.totalorder %s11, 0
      %p43 = por %p41, %p42
      %p44 = scmp.ne.s32.totalorder %s33, %s36
      %p45 = scmp.eq.s32.totalorder %s16, 1
      %p46 = por %p44, %p45
      %p47 = scmp.ne.s32.totalorder %s36, %s37
      %p48 = scmp.eq.s32.totalorder %s16, 0
      %p49 = por %p47, %p48
      %p50 = scmp.ne.s32.totalorder %s36, %s37
      %p51 = scmp.eq.s32.totalorder %s17, 1
      %p52 = por %p50, %p51
      %p54 = scmp.ne.s32.totalorder %s37, %s53
      %p55 = scmp.eq.s32.totalorder %s17, 0
      %p56 = por %p54, %p55
      %s57 = ssub.s32 %s19, %s26
      %p58 = scmp.eq.s32.totalorder %s57, 0
      %s60 = sadd.s32 %s59, 1
      %s61 = scalar_select %p58, %s59, %s60
      %p64 = pneg %p58
      %p65 = scmp.eq.s32.totalorder %s11, 1
      %p66 = por %p64, %p65
      %p67 = scmp.ne.s32.totalorder %s59, %s62
      %p68 = scmp.eq.s32.totalorder %s11, 0
      %p69 = por %p67, %p68
      %p70 = scmp.ne.s32.totalorder %s59, %s62
      %p71 = scmp.eq.s32.totalorder %s16, 1
      %p72 = por %p70, %p71
      %p73 = scmp.ne.s32.totalorder %s62, %s63
      %p74 = scmp.eq.s32.totalorder %s16, 0
      %p75 = por %p73, %p74
      %p76 = scmp.ne.s32.totalorder %s62, %s63
      %p77 = scmp.eq.s32.totalorder %s17, 1
      %p78 = por %p76, %p77
      %p80 = scmp.ne.s32.totalorder %s63, %s79
      %p81 = scmp.eq.s32.totalorder %s17, 0
      %p82 = por %p80, %p81
      %s83 = ssub.s32 %s18, %s30
      %s84 = ssub.s32 %s19, %s26
      %s85 = sor.u32 %s83, %s84
      %p86 = scmp.eq.s32.totalorder %s85, 0
      %s88 = sadd.s32 %s87, 1
      %s89 = scalar_select %p86, %s87, %s88
      %p92 = pneg %p86
      %p93 = scmp.eq.s32.totalorder %s11, 1
      %p94 = por %p92, %p93
      %p95 = scmp.ne.s32.totalorder %s87, %s90
      %p96 = scmp.eq.s32.totalorder %s11, 0
      %p97 = por %p95, %p96
      %p98 = scmp.ne.s32.totalorder %s87, %s90
      %p99 = scmp.eq.s32.totalorder %s16, 1
      %p100 = por %p98, %p99
      %p101 = scmp.ne.s32.totalorder %s90, %s91
      %p102 = scmp.eq.s32.totalorder %s16, 0
      %p103 = por %p101, %p102
      %p104 = scmp.ne.s32.totalorder %s90, %s91
      %p105 = scmp.eq.s32.totalorder %s17, 1
      %p106 = por %p104, %p105
      %p108 = scmp.ne.s32.totalorder %s91, %s107
      %p109 = scmp.eq.s32.totalorder %s17, 0
      %p110 = por %p108, %p109
      %p111 = scmp.le.s32.totalorder 1, %s11
      %p112 = scmp.lt.s32.totalorder %s11, 3
      %p113 = pnand %p111, %p112
      %p114 = pneg %p113
      // Predicated region
      $region9: #{transformer_forward.11} parent=5 // pred_check
        _
      $region10: #{transformer_forward.11} parent=5 // pred_check_branch
        %116 = sbr.rel (%p113) target = $region12
      $region11: #{transformer_forward.11} parent=5 // pred_region
        %s117 = ssub.s32 %s11, 1
        // Predicated region
        $region13: #{transformer_forward.11} parent=11 // pred_check
          %p118 = pneg %p49
        $region14: #{transformer_forward.11} parent=11 // pred_check_branch
          %120 = sbr.rel (%p118) target = $region16
        $region15: #{transformer_forward.11} parent=11 // pred_region
          %s121 = smul.u32 2, %s20
          %p122 = scmp.lt.s32.totalorder %s121, 1
          %s123 = scalar_select %p122, %s121, 1
          %s124 = smul.addr %s123, 2
          %s125 = smul.addr %s124, 4
          %s126 = scalar_lea.vmem %s0, %s125
          %s127 = smul.u32 2, %s20
        $region16: #{transformer_forward.11} parent=11 // pred_fallthru
          _
      $region12: #{transformer_forward.11} parent=5 // pred_fallthru
        _
      %p128 = scmp.lt.s32.totalorder %s11, 2
      // Predicated region
      $region17: #{transformer_forward.11} parent=5 // pred_check
        %p129 = pneg %p128
      $region18: #{transformer_forward.11} parent=5 // pred_check_branch
        %131 = sbr.rel (%p129) target = $region20
      $region19: #{transformer_forward.11} parent=5 // pred_region
        // Predicated region
        $region21: #{transformer_forward.11} parent=19 // pred_check
          %p132 = pneg %p69
        $region22: #{transformer_forward.11} parent=19 // pred_check_branch
          %134 = sbr.rel (%p132) target = $region24
        $region23: #{transformer_forward.11} parent=19 // pred_region
          %s135 = sand.u32 %s59, 1
          %s136 = scalar_lea.sflag [#allocation4], %s135
          %s137 = sand.u32 %s59, 1
          %s138 = smul.addr %s137, 256
          %s139 = scalar_lea.vmem [#allocation3], %s138
          %s140 = smul.u32 2, %s19
          %142 = vsyncadd %s136, 0
          %s143 = smul.addr %s140, 4
          %s144 = scalar_lea.hbm %s1, %s143
          %s145 = sshll.u32 %s144, 4
          %s146 = int_to_ptr.hbm [resolvable:$true] %s145
          %s147 = sshll.u32 %s139, 4
          %s148 = int_to_ptr.vmem [resolvable:$true] %s147
          %153 = dma.hbm_to_vmem [thread:$0]  %s146, 4096, %s148, %s136, 256, 128, 8
        $region24: #{transformer_forward.11} parent=19 // pred_fallthru
          _
      $region20: #{transformer_forward.11} parent=5 // pred_fallthru
        _
      %p154 = scmp.le.s32.totalorder 1, %s11
      %p155 = scmp.lt.s32.totalorder %s11, 3
      %p156 = pnand %p154, %p155
      %p157 = pneg %p156
      // Predicated region
      $region25: #{transformer_forward.11} parent=5 // pred_check
        _
      $region26: #{transformer_forward.11} parent=5 // pred_check_branch
        %159 = sbr.rel (%p156) target = $region28
      $region27: #{transformer_forward.11} parent=5 // pred_region
        %s160 = ssub.s32 %s11, 1
        %s161 = sand.u32 %s62, 1
        %s162 = scalar_lea.sflag [#allocation4], %s161
        %s163 = sand.u32 %s62, 1
        %s164 = smul.addr %s163, 256
        %s165 = scalar_lea.vmem [#allocation3], %s164
        // Predicated region
        $region29: #{transformer_forward.11} parent=27 // pred_check
          %p166 = pneg %p75
        $region30: #{transformer_forward.11} parent=27 // pred_check_branch
          %168 = sbr.rel (%p166) target = $region32
        $region31: #{transformer_forward.11} parent=27 // pred_region
          %170 = dma.done %s162, 4096
        $region32: #{transformer_forward.11} parent=27 // pred_fallthru
          _
        %s171 = smul.u32 2, %s20
        %p172 = scmp.lt.s32.totalorder %s171, 1
        %s173 = scalar_select %p172, %s171, 1
        %s174 = smul.addr %s173, 2
        %s175 = smul.addr %s174, 4
        %s176 = scalar_lea.vmem %s0, %s175
        %p177 = pneg %p49
        %p178 = pneg %p46
        %s179 = sand.u32 %s62, 1
        %s180 = scalar_lea.sflag [#allocation4], %s179
        %s181 = sand.u32 %s62, 1
        %s182 = smul.addr %s181, 256
        %s183 = scalar_lea.vmem [#allocation3], %s182
        %p184 = pneg %p75
        %p185 = pneg %p72
        %p186 = pneg %p103
        %p187 = pneg %p100
        %s188 = sand.u32 %s90, 1
        %s189 = sand.u32 %s90, 1
        %s190 = smul.addr %s189, 16
        %s191 = scalar_lea.vmem [#allocation5], %s190
        %s192 = smul.u32 2, %s20
        %p193 = scmp.lt.s32.totalorder %s192, 1
        %s194 = scalar_select %p193, %s192, 1
        %s195 = smul.addr %s194, 2
        %s196 = smul.addr %s195, 4
        %s197 = scalar_lea.vmem %s0, %s196
        %s198 = smul.u32 2, %s20
        %s199 = smul.u32 2, %s21
        %s200 = smul.u32 2, %s20
        %s201 = smul.u32 2, %s21
        %p202 = scmp.eq.s32.totalorder %s21, 0
        // Predicated region
        $region33: #{transformer_forward.11} parent=27 // pred_check
          %p203 = pneg %p202
        $region34: #{transformer_forward.11} parent=27 // pred_check_branch
          %205 = sbr.rel (%p203) target = $region36
        $region35: #{transformer_forward.11} parent=27 // pred_region
          %v206 = vld [vmem:[%s197] sm:$0xff]
          %v207 = vld [vmem:[%s197 + $0x8] sm:$0xff]
          %v208 = vunpack.c.l.bf16 %v206
          %v209 = vunpack.c.h.bf16 %v206
          %v210 = vunpack.c.l.bf16 %v207
          %v211 = vunpack.c.h.bf16 %v207
          %v212 = vmul.f32 %v208, %v208
          %v213 = vmul.f32 %v209, %v209
          %v214 = vmul.f32 %v210, %v210
          %v215 = vmul.f32 %v211, %v211
          %v216 = vadd.f32 %v212, %v213
          %217 = vadd.xlane.f32.xlu0 %v216
          %v218 = vpop.xlane.xlu0 %217
          %v219 = vadd.f32 %v214, %v215
          %220 = vadd.xlane.f32.xlu0 %v219
          %v221 = vpop.xlane.xlu0 %220
          %v222 = vrcp.pop 256.0
          %v223 = vmul.f32 256.0, %v222
          %v224 = vsub.f32 1.0, %v223
          %v225 = vmul.f32 %v222, %v224
          %v226 = vadd.f32 %v222, %v225
          %vm227 = vweird.f32 %v222
          %v228 = vsel %vm227, %v222, %v226
          %v229 = vmul.f32 %v218, %v228
          %v230 = vmul.f32 %v221, %v228
          %v231 = vrsqrt.pop %v229
          %v232 = vmul.f32 %v231, %v229
          %v233 = vmul.f32 %v232, %v231
          %v234 = vmul.f32 0.5, %v233
          %v235 = vsub.f32 1.5, %v234
          %v236 = vmul.f32 %v231, %v235
          %v237 = vmul.f32 %v229, %v236
          %vm238 = vcmp.eq.f32.partialorder %v229, inf
          %v239 = vsel %vm238, %v229, %v237
          %vm240 = vcmp.eq.f32.partialorder %v229, 0.0
          %v241 = vand.u32 %v229, 2147483648
          %v242 = vsel %vm240, %v241, %v239
          %v243 = vrsqrt.pop %v230
          %v244 = vmul.f32 %v243, %v230
          %v245 = vmul.f32 %v244, %v243
          %v246 = vmul.f32 0.5, %v245
          %v247 = vsub.f32 1.5, %v246
          %v248 = vmul.f32 %v243, %v247
          %v249 = vmul.f32 %v230, %v248
          %vm250 = vcmp.eq.f32.partialorder %v230, inf
          %v251 = vsel %vm250, %v230, %v249
          %vm252 = vcmp.eq.f32.partialorder %v230, 0.0
          %v253 = vand.u32 %v230, 2147483648
          %v254 = vsel %vm252, %v253, %v251
          %v255 = vadd.f32 %v242, 1e-05
          %v256 = vadd.f32 %v254, 1e-05
          %v257 = vrcp.pop %v255
          %v258 = vmul.f32 %v255, %v257
          %v259 = vsub.f32 1.0, %v258
          %v260 = vmul.f32 %v257, %v259
          %v261 = vadd.f32 %v257, %v260
          %vm262 = vweird.f32 %v255
          %vm263 = vweird.f32 %v257
          %vm264 = vmor %vm262, %vm263
          %v265 = vsel %vm264, %v257, %v261
          %v266 = vand.u32 2147483647, %v255
          %vm267 = vcmp.eq.f32.partialorder %v266, 8.507059e+37
          %v268 = vand.u32 %v255, 2147483648
          %v269 = vor.u32 1.1754944e-38, %v268
          %v270 = vsel %vm267, %v269, %v265
          %v271 = vmul.f32 %v208, %v270
          %v272 = vmul.f32 %v209, %v270
          %v273 = vrcp.pop %v256
          %v274 = vmul.f32 %v256, %v273
          %v275 = vsub.f32 1.0, %v274
          %v276 = vmul.f32 %v273, %v275
          %v277 = vadd.f32 %v273, %v276
          %vm278 = vweird.f32 %v256
          %vm279 = vweird.f32 %v273
          %vm280 = vmor %vm278, %vm279
          %v281 = vsel %vm280, %v273, %v277
          %v282 = vand.u32 2147483647, %v256
          %vm283 = vcmp.eq.f32.partialorder %v282, 8.507059e+37
          %v284 = vand.u32 %v256, 2147483648
          %v285 = vor.u32 1.1754944e-38, %v284
          %v286 = vsel %vm283, %v285, %v281
          %v287 = vmul.f32 %v210, %v286
          %v288 = vmul.f32 %v211, %v286
          %v289 = vpack.c.bf16 %v272, %v271
          %v290 = vpack.c.bf16 %v288, %v287
          %291 = vst [vmem:[#allocation2] sm:$0xff] %v289
          %292 = vst [vmem:[#allocation2 + $0x8] sm:$0xff] %v290
        $region36: #{transformer_forward.11} parent=27 // pred_fallthru
          _
        %v293 = vld [vmem:[#allocation2] sm:$0xff]
        %v294 = vld [vmem:[#allocation2 + $0x8] sm:$0xff]
        %v295 = vld [vmem:[%s165] sm:$0xff]
        %v296 = vld [vmem:[%s165 + $0x8] sm:$0xff]
        %v297 = vld [vmem:[%s165 + $0x10] sm:$0xff]
        %v298 = vld [vmem:[%s165 + $0x18] sm:$0xff]
        %v299 = vld [vmem:[%s165 + $0x20] sm:$0xff]
        %v300 = vld [vmem:[%s165 + $0x28] sm:$0xff]
        %v301 = vld [vmem:[%s165 + $0x30] sm:$0xff]
        %v302 = vld [vmem:[%s165 + $0x38] sm:$0xff]
        %v303 = vld [vmem:[%s165 + $0x40] sm:$0xff]
        %v304 = vld [vmem:[%s165 + $0x48] sm:$0xff]
        %v305 = vld [vmem:[%s165 + $0x50] sm:$0xff]
        %v306 = vld [vmem:[%s165 + $0x58] sm:$0xff]
        %v307 = vld [vmem:[%s165 + $0x60] sm:$0xff]
        %v308 = vld [vmem:[%s165 + $0x68] sm:$0xff]
        %v309 = vld [vmem:[%s165 + $0x70] sm:$0xff]
        %v310 = vld [vmem:[%s165 + $0x78] sm:$0xff]
        %v311 = vld [vmem:[%s165 + $0x80] sm:$0xff]
        %v312 = vld [vmem:[%s165 + $0x88] sm:$0xff]
        %v313 = vld [vmem:[%s165 + $0x90] sm:$0xff]
        %v314 = vld [vmem:[%s165 + $0x98] sm:$0xff]
        %v315 = vld [vmem:[%s165 + $0xa0] sm:$0xff]
        %v316 = vld [vmem:[%s165 + $0xa8] sm:$0xff]
        %v317 = vld [vmem:[%s165 + $0xb0] sm:$0xff]
        %v318 = vld [vmem:[%s165 + $0xb8] sm:$0xff]
        %v319 = vld [vmem:[%s165 + $0xc0] sm:$0xff]
        %v320 = vld [vmem:[%s165 + $0xc8] sm:$0xff]
        %v321 = vld [vmem:[%s165 + $0xd0] sm:$0xff]
        %v322 = vld [vmem:[%s165 + $0xd8] sm:$0xff]
        %v323 = vld [vmem:[%s165 + $0xe0] sm:$0xff]
        %v324 = vld [vmem:[%s165 + $0xe8] sm:$0xff]
        %v325 = vld [vmem:[%s165 + $0xf0] sm:$0xff]
        %v326 = vld [vmem:[%s165 + $0xf8] sm:$0xff]
        %v329 = vunpack.c.l.b16 %v293
        %v330 = vunpack.c.h.b16 %v293
        %v331 = vunpack.c.l.b16 %v294
        %v332 = vunpack.c.h.b16 %v294
        %v333 = vpack.c.b16 %v331, %v329
        %v334 = vpack.c.b16 %v332, %v330
        %v369 = vunpack.c.l.b16 %v295
        %v370 = vunpack.c.h.b16 %v295
        %v371 = vunpack.c.l.b16 %v296
        %v372 = vunpack.c.h.b16 %v296
        %v373 = vunpack.c.l.b16 %v297
        %v374 = vunpack.c.h.b16 %v297
        %v375 = vunpack.c.l.b16 %v298
        %v376 = vunpack.c.h.b16 %v298
        %v377 = vunpack.c.l.b16 %v299
        %v378 = vunpack.c.h.b16 %v299
        %v379 = vunpack.c.l.b16 %v300
        %v380 = vunpack.c.h.b16 %v300
        %v381 = vunpack.c.l.b16 %v301
        %v382 = vunpack.c.h.b16 %v301
        %v383 = vunpack.c.l.b16 %v302
        %v384 = vunpack.c.h.b16 %v302
        %v385 = vunpack.c.l.b16 %v303
        %v386 = vunpack.c.h.b16 %v303
        %v387 = vunpack.c.l.b16 %v304
        %v388 = vunpack.c.h.b16 %v304
        %v389 = vunpack.c.l.b16 %v305
        %v390 = vunpack.c.h.b16 %v305
        %v391 = vunpack.c.l.b16 %v306
        %v392 = vunpack.c.h.b16 %v306
        %v393 = vunpack.c.l.b16 %v307
        %v394 = vunpack.c.h.b16 %v307
        %v395 = vunpack.c.l.b16 %v308
        %v396 = vunpack.c.h.b16 %v308
        %v397 = vunpack.c.l.b16 %v309
        %v398 = vunpack.c.h.b16 %v309
        %v399 = vunpack.c.l.b16 %v310
        %v400 = vunpack.c.h.b16 %v310
        %v401 = vunpack.c.l.b16 %v311
        %v402 = vunpack.c.h.b16 %v311
        %v403 = vunpack.c.l.b16 %v312
        %v404 = vunpack.c.h.b16 %v312
        %v405 = vunpack.c.l.b16 %v313
        %v406 = vunpack.c.h.b16 %v313
        %v407 = vunpack.c.l.b16 %v314
        %v408 = vunpack.c.h.b16 %v314
        %v409 = vunpack.c.l.b16 %v315
        %v410 = vunpack.c.h.b16 %v315
        %v411 = vunpack.c.l.b16 %v316
        %v412 = vunpack.c.h.b16 %v316
        %v413 = vunpack.c.l.b16 %v317
        %v414 = vunpack.c.h.b16 %v317
        %v415 = vunpack.c.l.b16 %v318
        %v416 = vunpack.c.h.b16 %v318
        %v417 = vunpack.c.l.b16 %v319
        %v418 = vunpack.c.h.b16 %v319
        %v419 = vunpack.c.l.b16 %v320
        %v420 = vunpack.c.h.b16 %v320
        %v421 = vunpack.c.l.b16 %v321
        %v422 = vunpack.c.h.b16 %v321
        %v423 = vunpack.c.l.b16 %v322
        %v424 = vunpack.c.h.b16 %v322
        %v425 = vunpack.c.l.b16 %v323
        %v426 = vunpack.c.h.b16 %v323
        %v427 = vunpack.c.l.b16 %v324
        %v428 = vunpack.c.h.b16 %v324
        %v429 = vunpack.c.l.b16 %v325
        %v430 = vunpack.c.h.b16 %v325
        %v431 = vunpack.c.l.b16 %v326
        %v432 = vunpack.c.h.b16 %v326
        %v433 = vpack.c.b16 %v371, %v369
        %v434 = vpack.c.b16 %v372, %v370
        %v435 = vpack.c.b16 %v375, %v373
        %v436 = vpack.c.b16 %v376, %v374
        %v437 = vpack.c.b16 %v379, %v377
        %v438 = vpack.c.b16 %v380, %v378
        %v439 = vpack.c.b16 %v383, %v381
        %v440 = vpack.c.b16 %v384, %v382
        %v441 = vpack.c.b16 %v387, %v385
        %v442 = vpack.c.b16 %v388, %v386
        %v443 = vpack.c.b16 %v391, %v389
        %v444 = vpack.c.b16 %v392, %v390
        %v445 = vpack.c.b16 %v395, %v393
        %v446 = vpack.c.b16 %v396, %v394
        %v447 = vpack.c.b16 %v399, %v397
        %v448 = vpack.c.b16 %v400, %v398
        %v449 = vpack.c.b16 %v403, %v401
        %v450 = vpack.c.b16 %v404, %v402
        %v451 = vpack.c.b16 %v407, %v405
        %v452 = vpack.c.b16 %v408, %v406
        %v453 = vpack.c.b16 %v411, %v409
        %v454 = vpack.c.b16 %v412, %v410
        %v455 = vpack.c.b16 %v415, %v413
        %v456 = vpack.c.b16 %v416, %v414
        %v457 = vpack.c.b16 %v419, %v417
        %v458 = vpack.c.b16 %v420, %v418
        %v459 = vpack.c.b16 %v423, %v421
        %v460 = vpack.c.b16 %v424, %v422
        %v461 = vpack.c.b16 %v427, %v425
        %v462 = vpack.c.b16 %v428, %v426
        %v463 = vpack.c.b16 %v431, %v429
        %v464 = vpack.c.b16 %v432, %v430
        %497 = vmatpush.bf16.msra.mxu0 %v447
        %498 = vmatpush.bf16.msra.mxu0 %v445
        %499 = vmatpush.bf16.msra.mxu0 %v443
        %500 = vmatpush.bf16.msra.mxu0 %v441
        %501 = vmatpush.bf16.msra.mxu0 %v439
        %502 = vmatpush.bf16.msra.mxu0 %v437
        %503 = vmatpush.bf16.msra.mxu0 %v435
        %504 = vmatpush.bf16.msra.mxu0 %v433
        %505 = vmatmul.bf16.gmra.mxu0 %v333
        %v506 = vpop.f32.mrf.mxu0
        %v507 = vadd.f32 0.0, %v506
        %v508 = vpop.f32.mrf.mxu0
        %v509 = vadd.f32 0.0, %v508
        %510 = vdwg.mxu0
        %511 = vmatpush.bf16.msra.mxu0 %v463
        %512 = vmatpush.bf16.msra.mxu0 %v461
        %513 = vmatpush.bf16.msra.mxu0 %v459
        %514 = vmatpush.bf16.msra.mxu0 %v457
        %515 = vmatpush.bf16.msra.mxu0 %v455
        %516 = vmatpush.bf16.msra.mxu0 %v453
        %517 = vmatpush.bf16.msra.mxu0 %v451
        %518 = vmatpush.bf16.msra.mxu0 %v449
        %519 = vmatmul.bf16.gmra.mxu0 %v334
        %v520 = vpop.f32.mrf.mxu0
        %v521 = vadd.f32 %v507, %v520
        %v522 = vpop.f32.mrf.mxu0
        %v523 = vadd.f32 %v509, %v522
        %524 = vdwg.mxu0
        %525 = vmatpush.bf16.msra.mxu0 %v448
        %526 = vmatpush.bf16.msra.mxu0 %v446
        %527 = vmatpush.bf16.msra.mxu0 %v444
        %528 = vmatpush.bf16.msra.mxu0 %v442
        %529 = vmatpush.bf16.msra.mxu0 %v440
        %530 = vmatpush.bf16.msra.mxu0 %v438
        %531 = vmatpush.bf16.msra.mxu0 %v436
        %532 = vmatpush.bf16.msra.mxu0 %v434
        %533 = vmatmul.bf16.gmra.mxu0 %v333
        %v534 = vpop.f32.mrf.mxu0
        %v535 = vadd.f32 0.0, %v534
        %v536 = vpop.f32.mrf.mxu0
        %v537 = vadd.f32 0.0, %v536
        %538 = vdwg.mxu0
        %539 = vmatpush.bf16.msra.mxu0 %v464
        %540 = vmatpush.bf16.msra.mxu0 %v462
        %541 = vmatpush.bf16.msra.mxu0 %v460
        %542 = vmatpush.bf16.msra.mxu0 %v458
        %543 = vmatpush.bf16.msra.mxu0 %v456
        %544 = vmatpush.bf16.msra.mxu0 %v454
        %545 = vmatpush.bf16.msra.mxu0 %v452
        %546 = vmatpush.bf16.msra.mxu0 %v450
        %547 = vmatmul.bf16.gmra.mxu0 %v334
        %v548 = vpop.f32.mrf.mxu0
        %v549 = vadd.f32 %v535, %v548
        %v550 = vpop.f32.mrf.mxu0
        %v551 = vadd.f32 %v537, %v550
        %552 = vdwg.mxu0
        %v553 = vpack.c.bf16 %v549, %v521
        %v554 = vpack.c.bf16 %v551, %v523
        %555 = vst [vmem:[%s191] sm:$0xff] %v553
        %556 = vst [vmem:[%s191 + $0x8] sm:$0xff] %v554
        %s557 = sand.u32 %s90, 1
        %s558 = sand.u32 %s90, 1
        %s559 = smul.addr %s558, 16
        %s560 = scalar_lea.vmem [#allocation5], %s559
        // Predicated region
        $region37: #{transformer_forward.11} parent=27 // pred_check
          %p561 = pneg %p100
        $region38: #{transformer_forward.11} parent=27 // pred_check_branch
          %563 = sbr.rel (%p561) target = $region40
        $region39: #{transformer_forward.11} parent=27 // pred_region
          %s564 = smul.u32 2, %s20
          %s565 = smul.u32 2, %s21
          %s566 = smul.addr %s564, 4
          %s567 = sadd.s32 %s565, %s566
          %s568 = smul.addr %s567, 4
          %s569 = scalar_lea.vmem %s2, %s568
          // Predicated region
          $region41: #{transformer_forward.11} parent=39 // pred_check
            _
          $region42: #{transformer_forward.11} parent=39 // pred_check_branch
            %571 = sbr.rel (0) target = $region44
          $region43: #{transformer_forward.11} parent=39 // pred_region
            // Predicated region
            $region45: #{transformer_forward.11} parent=43 // pred_check
              _
            $region46: #{transformer_forward.11} parent=43 // pred_check_branch
              %573 = sbr.rel (0) target = $region48
            $region47: #{transformer_forward.11} parent=43 // pred_region
              // Predicated region
              $region60: #{transformer_forward.11} parent=47 // pred_check
                _
              $region61: #{transformer_forward.11} parent=47 // pred_check_branch
                %591 = sbr.rel (0) target = $region63
              $region62: #{transformer_forward.11} parent=47 // pred_region
                loop: start=0, step=1, limit=1
                $region64: #{transformer_forward.11} parent=62 // loop_pre_header
                  _
                $region65: #{transformer_forward.11} parent=62 // loop_header
                  %s593 = sphi 0, %s597
                  %p594 = scmp.ge.s32.totalorder %s593, 1
                  %s598 = sphi %s560, %s560
                  %s599 = sphi %s569, %s569
                $region66: #{transformer_forward.11} parent=62 // loop_header_branch
                  %596 = sbr.rel (%p594) target = $region70
                $region67: #{transformer_forward.11} parent=62 // loop_body
                  %v600 = vld [vmem:[%s598] sm:$0xff]
                  %601 = vst [vmem:[%s599] sm:$0xff] %v600
                  %v602 = vld [vmem:[%s598 + $0x8] sm:$0xff]
                  %603 = vst [vmem:[%s599 + $0x10] sm:$0xff] %v602
                $region68: #{transformer_forward.11} parent=62 // loop_footer
                  %s597 = sadd.s32 1, %s593
                $region69: #{transformer_forward.11} parent=62 // loop_footer_branch
                  %592 = sbr.rel target = $region65
                $region70: #{transformer_forward.11} parent=62 // loop_exit
                  _
              $region63: #{transformer_forward.11} parent=47 // pred_fallthru
                _
              // Predicated region
              $region71: #{transformer_forward.11} parent=47 // pred_check
                _
              $region72: #{transformer_forward.11} parent=47 // pred_check_branch
                %605 = sbr.rel target = $region74
              $region73: #{transformer_forward.11} parent=47 // pred_region
                _
              $region74: #{transformer_forward.11} parent=47 // pred_fallthru
                _
            $region48: #{transformer_forward.11} parent=43 // pred_fallthru
              _
            // Predicated region
            $region49: #{transformer_forward.11} parent=43 // pred_check
              _
            $region50: #{transformer_forward.11} parent=43 // pred_check_branch
              %575 = sbr.rel target = $region52
            $region51: #{transformer_forward.11} parent=43 // pred_region
              %s577 = ssub.s32 256, 1
              loop: start=0, step=1, limit=1
              $region53: #{transformer_forward.11} parent=51 // loop_pre_header
                _
              $region54: #{transformer_forward.11} parent=51 // loop_header
                %s579 = sphi 0, %s583
                %p580 = scmp.ge.s32.totalorder %s579, 1
                %s584 = sphi %s560, %s560
                %s585 = sphi %s569, %s569
              $region55: #{transformer_forward.11} parent=51 // loop_header_branch
                %582 = sbr.rel (%p580) target = $region59
              $region56: #{transformer_forward.11} parent=51 // loop_body
                %v586 = vld [vmem:[%s584] sm:%s577]
                %587 = vst [vmem:[%s585] sm:%s577] %v586
                %v588 = vld [vmem:[%s584 + $0x8] sm:%s577]
                %589 = vst [vmem:[%s585 + $0x10] sm:%s577] %v588
              $region57: #{transformer_forward.11} parent=51 // loop_footer
                %s583 = sadd.s32 1, %s579
              $region58: #{transformer_forward.11} parent=51 // loop_footer_branch
                %578 = sbr.rel target = $region54
              $region59: #{transformer_forward.11} parent=51 // loop_exit
                _
            $region52: #{transformer_forward.11} parent=43 // pred_fallthru
              _
          $region44: #{transformer_forward.11} parent=39 // pred_fallthru
            _
          %606 = vnop
        $region40: #{transformer_forward.11} parent=27 // pred_fallthru
          _
      $region28: #{transformer_forward.11} parent=5 // pred_fallthru
        _
      %p607 = scmp.le.s32.totalorder 2, %s11
      // Predicated region
      $region75: #{transformer_forward.11} parent=5 // pred_check
        %p608 = pneg %p607
      $region76: #{transformer_forward.11} parent=5 // pred_check_branch
        %610 = sbr.rel (%p608) target = $region78
      $region77: #{transformer_forward.11} parent=5 // pred_region
        %s611 = ssub.s32 %s11, 2
        // Predicated region
        $region79: #{transformer_forward.11} parent=77 // pred_check
          %p612 = pneg %p106
        $region80: #{transformer_forward.11} parent=77 // pred_check_branch
          %614 = sbr.rel (%p612) target = $region82
        $region81: #{transformer_forward.11} parent=77 // pred_region
          %s615 = sand.u32 %s91, 1
          %s616 = sand.u32 %s91, 1
          %s617 = smul.addr %s616, 16
          %s618 = scalar_lea.vmem [#allocation5], %s617
        $region82: #{transformer_forward.11} parent=77 // pred_fallthru
          _
      $region78: #{transformer_forward.11} parent=5 // pred_fallthru
        _
    $region6: #{transformer_forward.11} parent=1 // loop_footer
      %s15 = sadd.s32 1, %s11
    $region7: #{transformer_forward.11} parent=1 // loop_footer_branch
      %10 = sbr.rel target = $region3
    $region8: #{transformer_forward.11} parent=1 // loop_exit
      _
    %619 = vsyncpa [#allocation4], 1
    %s620 = scalar_lea.sflag [#allocation4], 1
    %621 = vsyncpa %s620, 1

// kernel: transformer_forward.14
$region0: #{transformer_forward.14}
  #allocation0 [shape = 'u32[]', space=smem, size = 0x4, offset = 0x4, fixed_abs, tag = 'smem constant byte address 0x4 - core index']
  #allocation1 [shape = 'u32[72,128]{1,0:T(1,128)}', space=vmem, size = 0x9000, scoped, tag = 'internal scratch']
  #allocation2 [shape = 'f32[16,128]{1,0:T(8,128)}', space=vmem, size = 0x2000, scoped, tag = 'scratch operand']
  %s0 = inlined_call_operand.vmem [shape: bf16[16,256], index: 0, kind: input, shape index: {}]
  %s1 = inlined_call_operand.vmem [shape: bf16[256,256], index: 1, kind: input, shape index: {}]
  %s2 = inlined_call_operand.vmem [shape: bf16[16,256], index: 2, kind: input, shape index: {}]
  %s3 = inlined_call_operand.vmem [shape: bf16[16,256], index: 3, kind: output, shape index: {}]
  %s4 = sld [smem:[#allocation0]]
  $region172: #{transformer_forward.14} parent=0
    _
  %s6 = ssub.s32 1, %s4
  %s7 = scalar_select 0, %s6, %s4
  $region1: #{transformer_forward.14} parent=0
    #allocation3 [shape = 'u8[131072]{0}', space=vmem, size = 0x20000, scoped, tag = 'input window, operand 1']
    #allocation4 [shape = 'u8[8192]{0}', space=vmem, size = 0x2000, scoped, tag = 'input window, operand 2']
    #allocation5 [shape = 'u8[8192]{0}', space=vmem, size = 0x2000, scoped, tag = 'output window, operand 0']
    loop: start=0, step=1, limit=4
    $region2: #{transformer_forward.14} parent=1 // loop_pre_header
      _
    $region3: #{transformer_forward.14} parent=1 // loop_header
      %s9 = sphi 0, %s13
      %p10 = scmp.ge.s32.totalorder %s9, 4
      %s16 = sphi 0, %s35
      %s17 = sphi 0, %s31
      %s18 = sphi 0, %s27
      %s19 = sphi 0, %s16
      %s20 = sphi 0, %s17
      %s21 = sphi 0, %s18
      %s22 = sphi 0, %s19
      %s23 = sphi 0, %s20
      %s24 = sphi 0, %s21
      %s40 = sphi 0, %s42
      %s43 = sphi 0, %s40
      %s44 = sphi 0, %s43
      %s60 = sphi 0, %s44
      %s68 = sphi 0, %s70
      %s71 = sphi 0, %s68
      %s72 = sphi 0, %s71
      %s88 = sphi 0, %s72
      %s96 = sphi 0, %s98
      %s99 = sphi 0, %s96
      %s100 = sphi 0, %s99
      %s116 = sphi 0, %s100
      %s124 = sphi 0, %s126
      %s127 = sphi 0, %s124
      %s128 = sphi 0, %s127
      %s144 = sphi 0, %s128
    $region4: #{transformer_forward.14} parent=1 // loop_header_branch
      %12 = sbr.rel (%p10) target = $region8
    $region5: #{transformer_forward.14} parent=1 // loop_body
      %s14 = ssub.s32 %s9, 1
      %s15 = ssub.s32 %s9, 2
      %s25 = sadd.s32 1, %s18
      %p26 = scmp.ge.s32.totalorder %s25, 1
      %s27 = scalar_select %p26, 0, %s25
      %s28 = sadd.s32 1, %s17
      %s29 = scalar_select %p26, %s28, %s17
      %p30 = scmp.ge.s32.totalorder %s29, 2
      %s31 = scalar_select %p30, 0, %s29
      %s32 = sadd.s32 1, %s16
      %s33 = scalar_select %p30, %s32, %s16
      %p34 = scmp.ge.s32.totalorder %s33, 1
      %s35 = scalar_select %p34, 0, %s33
      %s36 = ssub.s32 %s16, %s35
      %s37 = ssub.s32 %s18, %s27
      %s38 = sor.u32 %s36, %s37
      %p39 = scmp.eq.s32.totalorder %s38, 0
      %s41 = sadd.s32 %s40, 1
      %s42 = scalar_select %p39, %s40, %s41
      %p45 = pneg %p39
      %p46 = scmp.eq.s32.totalorder %s9, 1
      %p47 = por %p45, %p46
      %p48 = scmp.ne.s32.totalorder %s40, %s43
      %p49 = scmp.eq.s32.totalorder %s9, 0
      %p50 = por %p48, %p49
      %p51 = scmp.ne.s32.totalorder %s40, %s43
      %p52 = scmp.eq.s32.totalorder %s14, 1
      %p53 = por %p51, %p52
      %p54 = scmp.ne.s32.totalorder %s43, %s44
      %p55 = scmp.eq.s32.totalorder %s14, 0
      %p56 = por %p54, %p55
      %p57 = scmp.ne.s32.totalorder %s43, %s44
      %p58 = scmp.eq.s32.totalorder %s15, 1
      %p59 = por %p57, %p58
      %p61 = scmp.ne.s32.totalorder %s44, %s60
      %p62 = scmp.eq.s32.totalorder %s15, 0
      %p63 = por %p61, %p62
      %s64 = ssub.s32 %s18, %s27
      %s65 = ssub.s32 %s17, %s31
      %s66 = sor.u32 %s64, %s65
      %p67 = scmp.eq.s32.totalorder %s66, 0
      %s69 = sadd.s32 %s68, 1
      %s70 = scalar_select %p67, %s68, %s69
      %p73 = pneg %p67
      %p74 = scmp.eq.s32.totalorder %s9, 1
      %p75 = por %p73, %p74
      %p76 = scmp.ne.s32.totalorder %s68, %s71
      %p77 = scmp.eq.s32.totalorder %s9, 0
      %p78 = por %p76, %p77
      %p79 = scmp.ne.s32.totalorder %s68, %s71
      %p80 = scmp.eq.s32.totalorder %s14, 1
      %p81 = por %p79, %p80
      %p82 = scmp.ne.s32.totalorder %s71, %s72
      %p83 = scmp.eq.s32.totalorder %s14, 0
      %p84 = por %p82, %p83
      %p85 = scmp.ne.s32.totalorder %s71, %s72
      %p86 = scmp.eq.s32.totalorder %s15, 1
      %p87 = por %p85, %p86
      %p89 = scmp.ne.s32.totalorder %s72, %s88
      %p90 = scmp.eq.s32.totalorder %s15, 0
      %p91 = por %p89, %p90
      %s92 = ssub.s32 %s16, %s35
      %s93 = ssub.s32 %s17, %s31
      %s94 = sor.u32 %s92, %s93
      %p95 = scmp.eq.s32.totalorder %s94, 0
      %s97 = sadd.s32 %s96, 1
      %s98 = scalar_select %p95, %s96, %s97
      %p101 = pneg %p95
      %p102 = scmp.eq.s32.totalorder %s9, 1
      %p103 = por %p101, %p102
      %p104 = scmp.ne.s32.totalorder %s96, %s99
      %p105 = scmp.eq.s32.totalorder %s9, 0
      %p106 = por %p104, %p105
      %p107 = scmp.ne.s32.totalorder %s96, %s99
      %p108 = scmp.eq.s32.totalorder %s14, 1
      %p109 = por %p107, %p108
      %p110 = scmp.ne.s32.totalorder %s99, %s100
      %p111 = scmp.eq.s32.totalorder %s14, 0
      %p112 = por %p110, %p111
      %p113 = scmp.ne.s32.totalorder %s99, %s100
      %p114 = scmp.eq.s32.totalorder %s15, 1
      %p115 = por %p113, %p114
      %p117 = scmp.ne.s32.totalorder %s100, %s116
      %p118 = scmp.eq.s32.totalorder %s15, 0
      %p119 = por %p117, %p118
      %s120 = ssub.s32 %s16, %s35
      %s121 = ssub.s32 %s17, %s31
      %s122 = sor.u32 %s120, %s121
      %p123 = scmp.eq.s32.totalorder %s122, 0
      %s125 = sadd.s32 %s124, 1
      %s126 = scalar_select %p123, %s124, %s125
      %p129 = pneg %p123
      %p130 = scmp.eq.s32.totalorder %s9, 1
      %p131 = por %p129, %p130
      %p132 = scmp.ne.s32.totalorder %s124, %s127
      %p133 = scmp.eq.s32.totalorder %s9, 0
      %p134 = por %p132, %p133
      %p135 = scmp.ne.s32.totalorder %s124, %s127
      %p136 = scmp.eq.s32.totalorder %s14, 1
      %p137 = por %p135, %p136
      %p138 = scmp.ne.s32.totalorder %s127, %s128
      %p139 = scmp.eq.s32.totalorder %s14, 0
      %p140 = por %p138, %p139
      %p141 = scmp.ne.s32.totalorder %s127, %s128
      %p142 = scmp.eq.s32.totalorder %s15, 1
      %p143 = por %p141, %p142
      %p145 = scmp.ne.s32.totalorder %s128, %s144
      %p146 = scmp.eq.s32.totalorder %s15, 0
      %p147 = por %p145, %p146
      %p148 = scmp.le.s32.totalorder 1, %s9
      %p149 = scmp.lt.s32.totalorder %s9, 3
      %p150 = pnand %p148, %p149
      %p151 = pneg %p150
      // Predicated region
      $region9: #{transformer_forward.14} parent=5 // pred_check
        _
      $region10: #{transformer_forward.14} parent=5 // pred_check_branch
        %153 = sbr.rel (%p150) target = $region12
      $region11: #{transformer_forward.14} parent=5 // pred_region
        %s154 = ssub.s32 %s9, 1
        // Predicated region
        $region13: #{transformer_forward.14} parent=11 // pred_check
          %p155 = pneg %p56
        $region14: #{transformer_forward.14} parent=11 // pred_check_branch
          %157 = sbr.rel (%p155) target = $region16
        $region15: #{transformer_forward.14} parent=11 // pred_region
          %s158 = smul.u32 2, %s19
          %s159 = smul.u32 2, %s21
          %p160 = scmp.lt.s32.totalorder %s158, 1
          %s161 = scalar_select %p160, %s158, 1
          %p162 = scmp.lt.s32.totalorder %s159, 1
          %s163 = scalar_select %p162, %s159, 1
          %s164 = smul.addr %s161, 2
          %s165 = sadd.s32 %s163, %s164
          %s166 = smul.addr %s165, 4
          %s167 = scalar_lea.vmem %s0, %s166
          %s168 = smul.u32 2, %s19
          %s169 = smul.u32 2, %s21
        $region16: #{transformer_forward.14} parent=11 // pred_fallthru
          _
      $region12: #{transformer_forward.14} parent=5 // pred_fallthru
        _
      %p170 = scmp.lt.s32.totalorder %s9, 2
      // Predicated region
      $region17: #{transformer_forward.14} parent=5 // pred_check
        %p171 = pneg %p170
      $region18: #{transformer_forward.14} parent=5 // pred_check_branch
        %173 = sbr.rel (%p171) target = $region20
      $region19: #{transformer_forward.14} parent=5 // pred_region
        // Predicated region
        $region21: #{transformer_forward.14} parent=19 // pred_check
          %p174 = pneg %p78
        $region22: #{transformer_forward.14} parent=19 // pred_check_branch
          %176 = sbr.rel (%p174) target = $region24
        $region23: #{transformer_forward.14} parent=19 // pred_region
          %s177 = sand.u32 %s68, 1
          %s178 = sand.u32 %s68, 1
          %s179 = smul.addr %s178, 128
          %s180 = scalar_lea.vmem [#allocation3], %s179
          %s181 = smul.u32 32, %s18
          %s182 = smul.addr %s181, 2
          %s183 = sadd.s32 %s17, %s182
          %s184 = smul.addr %s183, 4
          %s185 = scalar_lea.vmem %s1, %s184
          // Predicated region
          $region25: #{transformer_forward.14} parent=23 // pred_check
            _
          $region26: #{transformer_forward.14} parent=23 // pred_check_branch
            %187 = sbr.rel (0) target = $region28
          $region27: #{transformer_forward.14} parent=23 // pred_region
            // Predicated region
            $region29: #{transformer_forward.14} parent=27 // pred_check
              _
            $region30: #{transformer_forward.14} parent=27 // pred_check_branch
              %189 = sbr.rel target = $region32
            $region31: #{transformer_forward.14} parent=27 // pred_region
              // Predicated region
              $region44: #{transformer_forward.14} parent=31 // pred_check
                _
              $region45: #{transformer_forward.14} parent=31 // pred_check_branch
                %267 = sbr.rel (0) target = $region47
              $region46: #{transformer_forward.14} parent=31 // pred_region
                loop: start=0, step=1, limit=1
                $region48: #{transformer_forward.14} parent=46 // loop_pre_header
                  _
                $region49: #{transformer_forward.14} parent=46 // loop_header
                  %s269 = sphi 0, %s273
                  %p270 = scmp.ge.s32.totalorder %s269, 1
                  %s274 = sphi %s185, %s185
                  %s275 = sphi %s180, %s180
                $region50: #{transformer_forward.14} parent=46 // loop_header_branch
                  %272 = sbr.rel (%p270) target = $region54
                $region51: #{transformer_forward.14} parent=46 // loop_body
                  _
                $region52: #{transformer_forward.14} parent=46 // loop_footer
                  %s273 = sadd.s32 1, %s269
                $region53: #{transformer_forward.14} parent=46 // loop_footer_branch
                  %268 = sbr.rel target = $region49
                $region54: #{transformer_forward.14} parent=46 // loop_exit
                  _
                %s277 = ssub.s32 16, 1
                loop: start=0, step=1, limit=1
                $region55: #{transformer_forward.14} parent=46 // loop_pre_header
                  _
                $region56: #{transformer_forward.14} parent=46 // loop_header
                  %s279 = sphi 0, %s283
                  %p280 = scmp.ge.s32.totalorder %s279, 1
                  %s284 = sphi %s185, %s185
                  %s285 = sphi %s180, %s180
                $region57: #{transformer_forward.14} parent=46 // loop_header_branch
                  %282 = sbr.rel (%p280) target = $region61
                $region58: #{transformer_forward.14} parent=46 // loop_body
                  %v286 = vld [vmem:[%s284] sm:%s277]
                  %287 = vst [vmem:[%s285] sm:%s277] %v286
                  %v288 = vld [vmem:[%s284 + $0x8] sm:%s277]
                  %289 = vst [vmem:[%s285 + $0x4] sm:%s277] %v288
                  %v290 = vld [vmem:[%s284 + $0x10] sm:%s277]
                  %291 = vst [vmem:[%s285 + $0x8] sm:%s277] %v290
                  %v292 = vld [vmem:[%s284 + $0x18] sm:%s277]
                  %293 = vst [vmem:[%s285 + $0xc] sm:%s277] %v292
                  %v294 = vld [vmem:[%s284 + $0x20] sm:%s277]
                  %295 = vst [vmem:[%s285 + $0x10] sm:%s277] %v294
                  %v296 = vld [vmem:[%s284 + $0x28] sm:%s277]
                  %297 = vst [vmem:[%s285 + $0x14] sm:%s277] %v296
                  %v298 = vld [vmem:[%s284 + $0x30] sm:%s277]
                  %299 = vst [vmem:[%s285 + $0x18] sm:%s277] %v298
                  %v300 = vld [vmem:[%s284 + $0x38] sm:%s277]
                  %301 = vst [vmem:[%s285 + $0x1c] sm:%s277] %v300
                  %v302 = vld [vmem:[%s284 + $0x40] sm:%s277]
                  %303 = vst [vmem:[%s285 + $0x20] sm:%s277] %v302
                  %v304 = vld [vmem:[%s284 + $0x48] sm:%s277]
                  %305 = vst [vmem:[%s285 + $0x24] sm:%s277] %v304
                  %v306 = vld [vmem:[%s284 + $0x50] sm:%s277]
                  %307 = vst [vmem:[%s285 + $0x28] sm:%s277] %v306
                  %v308 = vld [vmem:[%s284 + $0x58] sm:%s277]
                  %309 = vst [vmem:[%s285 + $0x2c] sm:%s277] %v308
                  %v310 = vld [vmem:[%s284 + $0x60] sm:%s277]
                  %311 = vst [vmem:[%s285 + $0x30] sm:%s277] %v310
                  %v312 = vld [vmem:[%s284 + $0x68] sm:%s277]
                  %313 = vst [vmem:[%s285 + $0x34] sm:%s277] %v312
                  %v314 = vld [vmem:[%s284 + $0x70] sm:%s277]
                  %315 = vst [vmem:[%s285 + $0x38] sm:%s277] %v314
                  %v316 = vld [vmem:[%s284 + $0x78] sm:%s277]
                  %317 = vst [vmem:[%s285 + $0x3c] sm:%s277] %v316
                  %v318 = vld [vmem:[%s284 + $0x80] sm:%s277]
                  %319 = vst [vmem:[%s285 + $0x40] sm:%s277] %v318
                  %v320 = vld [vmem:[%s284 + $0x88] sm:%s277]
                  %321 = vst [vmem:[%s285 + $0x44] sm:%s277] %v320
                  %v322 = vld [vmem:[%s284 + $0x90] sm:%s277]
                  %323 = vst [vmem:[%s285 + $0x48] sm:%s277] %v322
                  %v324 = vld [vmem:[%s284 + $0x98] sm:%s277]
                  %325 = vst [vmem:[%s285 + $0x4c] sm:%s277] %v324
                  %v326 = vld [vmem:[%s284 + $0xa0] sm:%s277]
                  %327 = vst [vmem:[%s285 + $0x50] sm:%s277] %v326
                  %v328 = vld [vmem:[%s284 + $0xa8] sm:%s277]
                  %329 = vst [vmem:[%s285 + $0x54] sm:%s277] %v328
                  %v330 = vld [vmem:[%s284 + $0xb0] sm:%s277]
                  %331 = vst [vmem:[%s285 + $0x58] sm:%s277] %v330
                  %v332 = vld [vmem:[%s284 + $0xb8] sm:%s277]
                  %333 = vst [vmem:[%s285 + $0x5c] sm:%s277] %v332
                  %v334 = vld [vmem:[%s284 + $0xc0] sm:%s277]
                  %335 = vst [vmem:[%s285 + $0x60] sm:%s277] %v334
                  %v336 = vld [vmem:[%s284 + $0xc8] sm:%s277]
                  %337 = vst [vmem:[%s285 + $0x64] sm:%s277] %v336
                  %v338 = vld [vmem:[%s284 + $0xd0] sm:%s277]
                  %339 = vst [vmem:[%s285 + $0x68] sm:%s277] %v338
                  %v340 = vld [vmem:[%s284 + $0xd8] sm:%s277]
                  %341 = vst [vmem:[%s285 + $0x6c] sm:%s277] %v340
                  %v342 = vld [vmem:[%s284 + $0xe0] sm:%s277]
                  %343 = vst [vmem:[%s285 + $0x70] sm:%s277] %v342
                  %v344 = vld [vmem:[%s284 + $0xe8] sm:%s277]
                  %345 = vst [vmem:[%s285 + $0x74] sm:%s277] %v344
                  %v346 = vld [vmem:[%s284 + $0xf0] sm:%s277]
                  %347 = vst [vmem:[%s285 + $0x78] sm:%s277] %v346
                  %v348 = vld [vmem:[%s284 + $0xf8] sm:%s277]
                  %349 = vst [vmem:[%s285 + $0x7c] sm:%s277] %v348
                $region59: #{transformer_forward.14} parent=46 // loop_footer
                  %s283 = sadd.s32 1, %s279
                $region60: #{transformer_forward.14} parent=46 // loop_footer_branch
                  %278 = sbr.rel target = $region56
                $region61: #{transformer_forward.14} parent=46 // loop_exit
                  _
              $region47: #{transformer_forward.14} parent=31 // pred_fallthru
                _
            $region32: #{transformer_forward.14} parent=27 // pred_fallthru
              _
            // Predicated region
            $region33: #{transformer_forward.14} parent=27 // pred_check
              _
            $region34: #{transformer_forward.14} parent=27 // pred_check_branch
              %191 = sbr.rel (0) target = $region36
            $region35: #{transformer_forward.14} parent=27 // pred_region
              %s193 = ssub.s32 16, 1
              loop: start=0, step=1, limit=1
              $region37: #{transformer_forward.14} parent=35 // loop_pre_header
                _
              $region38: #{transformer_forward.14} parent=35 // loop_header
                %s195 = sphi 0, %s199
                %p196 = scmp.ge.s32.totalorder %s195, 1
                %s200 = sphi %s185, %s185
                %s201 = sphi %s180, %s180
              $region39: #{transformer_forward.14} parent=35 // loop_header_branch
                %198 = sbr.rel (%p196) target = $region43
              $region40: #{transformer_forward.14} parent=35 // loop_body
                %v202 = vld [vmem:[%s200] sm:%s193]
                %203 = vst [vmem:[%s201] sm:%s193] %v202
                %v204 = vld [vmem:[%s200 + $0x8] sm:%s193]
                %205 = vst [vmem:[%s201 + $0x4] sm:%s193] %v204
                %v206 = vld [vmem:[%s200 + $0x10] sm:%s193]
                %207 = vst [vmem:[%s201 + $0x8] sm:%s193] %v206
                %v208 = vld [vmem:[%s200 + $0x18] sm:%s193]
                %209 = vst [vmem:[%s201 + $0xc] sm:%s193] %v208
                %v210 = vld [vmem:[%s200 + $0x20] sm:%s193]
                %211 = vst [vmem:[%s201 + $0x10] sm:%s193] %v210
                %v212 = vld [vmem:[%s200 + $0x28] sm:%s193]
                %213 = vst [vmem:[%s201 + $0x14] sm:%s193] %v212
                %v214 = vld [vmem:[%s200 + $0x30] sm:%s193]
                %215 = vst [vmem:[%s201 + $0x18] sm:%s193] %v214
                %v216 = vld [vmem:[%s200 + $0x38] sm:%s193]
                %217 = vst [vmem:[%s201 + $0x1c] sm:%s193] %v216
                %v218 = vld [vmem:[%s200 + $0x40] sm:%s193]
                %219 = vst [vmem:[%s201 + $0x20] sm:%s193] %v218
                %v220 = vld [vmem:[%s200 + $0x48] sm:%s193]
                %221 = vst [vmem:[%s201 + $0x24] sm:%s193] %v220
                %v222 = vld [vmem:[%s200 + $0x50] sm:%s193]
                %223 = vst [vmem:[%s201 + $0x28] sm:%s193] %v222
                %v224 = vld [vmem:[%s200 + $0x58] sm:%s193]
                %225 = vst [vmem:[%s201 + $0x2c] sm:%s193] %v224
                %v226 = vld [vmem:[%s200 + $0x60] sm:%s193]
                %227 = vst [vmem:[%s201 + $0x30] sm:%s193] %v226
                %v228 = vld [vmem:[%s200 + $0x68] sm:%s193]
                %229 = vst [vmem:[%s201 + $0x34] sm:%s193] %v228
                %v230 = vld [vmem:[%s200 + $0x70] sm:%s193]
                %231 = vst [vmem:[%s201 + $0x38] sm:%s193] %v230
                %v232 = vld [vmem:[%s200 + $0x78] sm:%s193]
                %233 = vst [vmem:[%s201 + $0x3c] sm:%s193] %v232
                %v234 = vld [vmem:[%s200 + $0x80] sm:%s193]
                %235 = vst [vmem:[%s201 + $0x40] sm:%s193] %v234
                %v236 = vld [vmem:[%s200 + $0x88] sm:%s193]
                %237 = vst [vmem:[%s201 + $0x44] sm:%s193] %v236
                %v238 = vld [vmem:[%s200 + $0x90] sm:%s193]
                %239 = vst [vmem:[%s201 + $0x48] sm:%s193] %v238
                %v240 = vld [vmem:[%s200 + $0x98] sm:%s193]
                %241 = vst [vmem:[%s201 + $0x4c] sm:%s193] %v240
                %v242 = vld [vmem:[%s200 + $0xa0] sm:%s193]
                %243 = vst [vmem:[%s201 + $0x50] sm:%s193] %v242
                %v244 = vld [vmem:[%s200 + $0xa8] sm:%s193]
                %245 = vst [vmem:[%s201 + $0x54] sm:%s193] %v244
                %v246 = vld [vmem:[%s200 + $0xb0] sm:%s193]
                %247 = vst [vmem:[%s201 + $0x58] sm:%s193] %v246
                %v248 = vld [vmem:[%s200 + $0xb8] sm:%s193]
                %249 = vst [vmem:[%s201 + $0x5c] sm:%s193] %v248
                %v250 = vld [vmem:[%s200 + $0xc0] sm:%s193]
                %251 = vst [vmem:[%s201 + $0x60] sm:%s193] %v250
                %v252 = vld [vmem:[%s200 + $0xc8] sm:%s193]
                %253 = vst [vmem:[%s201 + $0x64] sm:%s193] %v252
                %v254 = vld [vmem:[%s200 + $0xd0] sm:%s193]
                %255 = vst [vmem:[%s201 + $0x68] sm:%s193] %v254
                %v256 = vld [vmem:[%s200 + $0xd8] sm:%s193]
                %257 = vst [vmem:[%s201 + $0x6c] sm:%s193] %v256
                %v258 = vld [vmem:[%s200 + $0xe0] sm:%s193]
                %259 = vst [vmem:[%s201 + $0x70] sm:%s193] %v258
                %v260 = vld [vmem:[%s200 + $0xe8] sm:%s193]
                %261 = vst [vmem:[%s201 + $0x74] sm:%s193] %v260
                %v262 = vld [vmem:[%s200 + $0xf0] sm:%s193]
                %263 = vst [vmem:[%s201 + $0x78] sm:%s193] %v262
                %v264 = vld [vmem:[%s200 + $0xf8] sm:%s193]
                %265 = vst [vmem:[%s201 + $0x7c] sm:%s193] %v264
              $region41: #{transformer_forward.14} parent=35 // loop_footer
                %s199 = sadd.s32 1, %s195
              $region42: #{transformer_forward.14} parent=35 // loop_footer_branch
                %194 = sbr.rel target = $region38
              $region43: #{transformer_forward.14} parent=35 // loop_exit
                _
            $region36: #{transformer_forward.14} parent=27 // pred_fallthru
              _
          $region28: #{transformer_forward.14} parent=23 // pred_fallthru
            _
          %350 = vnop
        $region24: #{transformer_forward.14} parent=19 // pred_fallthru
          _
        // Predicated region
        $region62: #{transformer_forward.14} parent=19 // pred_check
          %p351 = pneg %p106
        $region63: #{transformer_forward.14} parent=19 // pred_check_branch
          %353 = sbr.rel (%p351) target = $region65
        $region64: #{transformer_forward.14} parent=19 // pred_region
          %s354 = sand.u32 %s96, 1
          %s355 = sand.u32 %s96, 1
          %s356 = smul.addr %s355, 8
          %s357 = scalar_lea.vmem [#allocation4], %s356
          %s358 = smul.u32 2, %s16
          %s359 = smul.addr %s358, 2
          %s360 = sadd.s32 %s17, %s359
          %s361 = smul.addr %s360, 4
          %s362 = scalar_lea.vmem %s2, %s361
          // Predicated region
          $region66: #{transformer_forward.14} parent=64 // pred_check
            _
          $region67: #{transformer_forward.14} parent=64 // pred_check_branch
            %364 = sbr.rel (0) target = $region69
          $region68: #{transformer_forward.14} parent=64 // pred_region
            // Predicated region
            $region70: #{transformer_forward.14} parent=68 // pred_check
              _
            $region71: #{transformer_forward.14} parent=68 // pred_check_branch
              %366 = sbr.rel target = $region73
            $region72: #{transformer_forward.14} parent=68 // pred_region
              // Predicated region
              $region85: #{transformer_forward.14} parent=72 // pred_check
                _
              $region86: #{transformer_forward.14} parent=72 // pred_check_branch
                %384 = sbr.rel (0) target = $region88
              $region87: #{transformer_forward.14} parent=72 // pred_region
                loop: start=0, step=1, limit=1
                $region89: #{transformer_forward.14} parent=87 // loop_pre_header
                  _
                $region90: #{transformer_forward.14} parent=87 // loop_header
                  %s386 = sphi 0, %s390
                  %p387 = scmp.ge.s32.totalorder %s386, 1
                  %s391 = sphi %s362, %s362
                  %s392 = sphi %s357, %s357
                $region91: #{transformer_forward.14} parent=87 // loop_header_branch
                  %389 = sbr.rel (%p387) target = $region95
                $region92: #{transformer_forward.14} parent=87 // loop_body
                  _
                $region93: #{transformer_forward.14} parent=87 // loop_footer
                  %s390 = sadd.s32 1, %s386
                $region94: #{transformer_forward.14} parent=87 // loop_footer_branch
                  %385 = sbr.rel target = $region90
                $region95: #{transformer_forward.14} parent=87 // loop_exit
                  _
                %s394 = ssub.s32 16, 1
                loop: start=0, step=1, limit=1
                $region96: #{transformer_forward.14} parent=87 // loop_pre_header
                  _
                $region97: #{transformer_forward.14} parent=87 // loop_header
                  %s396 = sphi 0, %s400
                  %p397 = scmp.ge.s32.totalorder %s396, 1
                  %s401 = sphi %s362, %s362
                  %s402 = sphi %s357, %s357
                $region98: #{transformer_forward.14} parent=87 // loop_header_branch
                  %399 = sbr.rel (%p397) target = $region102
                $region99: #{transformer_forward.14} parent=87 // loop_body
                  %v403 = vld [vmem:[%s401] sm:%s394]
                  %404 = vst [vmem:[%s402] sm:%s394] %v403
                  %v405 = vld [vmem:[%s401 + $0x8] sm:%s394]
                  %406 = vst [vmem:[%s402 + $0x4] sm:%s394] %v405
                $region100: #{transformer_forward.14} parent=87 // loop_footer
                  %s400 = sadd.s32 1, %s396
                $region101: #{transformer_forward.14} parent=87 // loop_footer_branch
                  %395 = sbr.rel target = $region97
                $region102: #{transformer_forward.14} parent=87 // loop_exit
                  _
              $region88: #{transformer_forward.14} parent=72 // pred_fallthru
                _
            $region73: #{transformer_forward.14} parent=68 // pred_fallthru
              _
            // Predicated region
            $region74: #{transformer_forward.14} parent=68 // pred_check
              _
            $region75: #{transformer_forward.14} parent=68 // pred_check_branch
              %368 = sbr.rel (0) target = $region77
            $region76: #{transformer_forward.14} parent=68 // pred_region
              %s370 = ssub.s32 16, 1
              loop: start=0, step=1, limit=1
              $region78: #{transformer_forward.14} parent=76 // loop_pre_header
                _
              $region79: #{transformer_forward.14} parent=76 // loop_header
                %s372 = sphi 0, %s376
                %p373 = scmp.ge.s32.totalorder %s372, 1
                %s377 = sphi %s362, %s362
                %s378 = sphi %s357, %s357
              $region80: #{transformer_forward.14} parent=76 // loop_header_branch
                %375 = sbr.rel (%p373) target = $region84
              $region81: #{transformer_forward.14} parent=76 // loop_body
                %v379 = vld [vmem:[%s377] sm:%s370]
                %380 = vst [vmem:[%s378] sm:%s370] %v379
                %v381 = vld [vmem:[%s377 + $0x8] sm:%s370]
                %382 = vst [vmem:[%s378 + $0x4] sm:%s370] %v381
              $region82: #{transformer_forward.14} parent=76 // loop_footer
                %s376 = sadd.s32 1, %s372
              $region83: #{transformer_forward.14} parent=76 // loop_footer_branch
                %371 = sbr.rel target = $region79
              $region84: #{transformer_forward.14} parent=76 // loop_exit
                _
            $region77: #{transformer_forward.14} parent=68 // pred_fallthru
              _
          $region69: #{transformer_forward.14} parent=64 // pred_fallthru
            _
          %407 = vnop
        $region65: #{transformer_forward.14} parent=19 // pred_fallthru
          _
      $region20: #{transformer_forward.14} parent=5 // pred_fallthru
        _
      %p408 = scmp.le.s32.totalorder 1, %s9
      %p409 = scmp.lt.s32.totalorder %s9, 3
      %p410 = pnand %p408, %p409
      %p411 = pneg %p410
      // Predicated region
      $region103: #{transformer_forward.14} parent=5 // pred_check
        _
      $region104: #{transformer_forward.14} parent=5 // pred_check_branch
        %413 = sbr.rel (%p410) target = $region106
      $region105: #{transformer_forward.14} parent=5 // pred_region
        %s414 = ssub.s32 %s9, 1
        %s415 = sand.u32 %s71, 1
        %s416 = sand.u32 %s71, 1
        %s417 = smul.addr %s416, 128
        %s418 = scalar_lea.vmem [#allocation3], %s417
        // Predicated region
        $region107: #{transformer_forward.14} parent=105 // pred_check
          %p419 = pneg %p84
        $region108: #{transformer_forward.14} parent=105 // pred_check_branch
          %421 = sbr.rel (%p419) target = $region110
        $region109: #{transformer_forward.14} parent=105 // pred_region
          _
        $region110: #{transformer_forward.14} parent=105 // pred_fallthru
          _
        %s422 = sand.u32 %s99, 1
        %s423 = sand.u32 %s99, 1
        %s424 = smul.addr %s423, 8
        %s425 = scalar_lea.vmem [#allocation4], %s424
        // Predicated region
        $region111: #{transformer_forward.14} parent=105 // pred_check
          %p426 = pneg %p112
        $region112: #{transformer_forward.14} parent=105 // pred_check_branch
          %428 = sbr.rel (%p426) target = $region114
        $region113: #{transformer_forward.14} parent=105 // pred_region
          _
        $region114: #{transformer_forward.14} parent=105 // pred_fallthru
          _
        %s429 = smul.u32 2, %s19
        %s430 = smul.u32 2, %s21
        %p431 = scmp.lt.s32.totalorder %s429, 1
        %s432 = scalar_select %p431, %s429, 1
        %p433 = scmp.lt.s32.totalorder %s430, 1
        %s434 = scalar_select %p433, %s430, 1
        %s435 = smul.addr %s432, 2
        %s436 = sadd.s32 %s434, %s435
        %s437 = smul.addr %s436, 4
        %s438 = scalar_lea.vmem %s0, %s437
        %p439 = pneg %p56
        %p440 = pneg %p53
        %s441 = sand.u32 %s71, 1
        %s442 = sand.u32 %s71, 1
        %s443 = smul.addr %s442, 128
        %s444 = scalar_lea.vmem [#allocation3], %s443
        %p445 = pneg %p84
        %p446 = pneg %p81
        %s447 = sand.u32 %s99, 1
        %s448 = sand.u32 %s99, 1
        %s449 = smul.addr %s448, 8
        %s450 = scalar_lea.vmem [#allocation4], %s449
        %p451 = pneg %p112
        %p452 = pneg %p109
        %p453 = pneg %p140
        %p454 = pneg %p137
        %s455 = sand.u32 %s127, 1
        %s456 = sand.u32 %s127, 1
        %s457 = smul.addr %s456, 8
        %s458 = scalar_lea.vmem [#allocation5], %s457
        %s459 = smul.u32 2, %s19
        %s460 = smul.u32 2, %s21
        %p461 = scmp.lt.s32.totalorder %s459, 1
        %s462 = scalar_select %p461, %s459, 1
        %p463 = scmp.lt.s32.totalorder %s460, 1
        %s464 = scalar_select %p463, %s460, 1
        %s465 = smul.addr %s462, 2
        %s466 = sadd.s32 %s464, %s465
        %s467 = smul.addr %s466, 4
        %s468 = scalar_lea.vmem %s0, %s467
        %s469 = smul.u32 2, %s19
        %s470 = smul.u32 2, %s21
        %s471 = smul.u32 32, %s21
        %s472 = smul.u32 2, %s19
        %s473 = smul.u32 2, %s19
        %p474 = scmp.eq.s32.totalorder %s21, 0
        // Predicated region
        $region115: #{transformer_forward.14} parent=105 // pred_check
          %p475 = pneg %p474
        $region116: #{transformer_forward.14} parent=105 // pred_check_branch
          %477 = sbr.rel (%p475) target = $region118
        $region117: #{transformer_forward.14} parent=105 // pred_region
          %478 = vst [vmem:[#allocation2] sm:$0xff] 0.0
          %479 = vst [vmem:[#allocation2 + $0x8] sm:$0xff] 0.0
        $region118: #{transformer_forward.14} parent=105 // pred_fallthru
          _
        %v480 = vld [vmem:[#allocation2] sm:$0xff]
        %v481 = vld [vmem:[#allocation2 + $0x8] sm:$0xff]
        %v482 = vld [vmem:[%s468] sm:$0xff]
        %v483 = vld [vmem:[%s468 + $0x8] sm:$0xff]
        %v484 = vld [vmem:[%s418] sm:$0xf]
        %v485 = vld [vmem:[%s418 + $0x4] sm:$0xf]
        %v486 = vld [vmem:[%s418 + $0x8] sm:$0xf]
        %v487 = vld [vmem:[%s418 + $0xc] sm:$0xf]
        %v488 = vld [vmem:[%s418 + $0x10] sm:$0xf]
        %v489 = vld [vmem:[%s418 + $0x14] sm:$0xf]
        %v490 = vld [vmem:[%s418 + $0x18] sm:$0xf]
        %v491 = vld [vmem:[%s418 + $0x1c] sm:$0xf]
        %v492 = vld [vmem:[%s418 + $0x20] sm:$0xf]
        %v493 = vld [vmem:[%s418 + $0x24] sm:$0xf]
        %v494 = vld [vmem:[%s418 + $0x28] sm:$0xf]
        %v495 = vld [vmem:[%s418 + $0x2c] sm:$0xf]
        %v496 = vld [vmem:[%s418 + $0x30] sm:$0xf]
        %v497 = vld [vmem:[%s418 + $0x34] sm:$0xf]
        %v498 = vld [vmem:[%s418 + $0x38] sm:$0xf]
        %v499 = vld [vmem:[%s418 + $0x3c] sm:$0xf]
        %v500 = vld [vmem:[%s418 + $0x40] sm:$0xf]
        %v501 = vld [vmem:[%s418 + $0x44] sm:$0xf]
        %v502 = vld [vmem:[%s418 + $0x48] sm:$0xf]
        %v503 = vld [vmem:[%s418 + $0x4c] sm:$0xf]
        %v504 = vld [vmem:[%s418 + $0x50] sm:$0xf]
        %v505 = vld [vmem:[%s418 + $0x54] sm:$0xf]
        %v506 = vld [vmem:[%s418 + $0x58] sm:$0xf]
        %v507 = vld [vmem:[%s418 + $0x5c] sm:$0xf]
        %v508 = vld [vmem:[%s418 + $0x60] sm:$0xf]
        %v509 = vld [vmem:[%s418 + $0x64] sm:$0xf]
        %v510 = vld [vmem:[%s418 + $0x68] sm:$0xf]
        %v511 = vld [vmem:[%s418 + $0x6c] sm:$0xf]
        %v512 = vld [vmem:[%s418 + $0x70] sm:$0xf]
        %v513 = vld [vmem:[%s418 + $0x74] sm:$0xf]
        %v514 = vld [vmem:[%s418 + $0x78] sm:$0xf]
        %v515 = vld [vmem:[%s418 + $0x7c] sm:$0xf]
        %v518 = vunpack.c.l.b16 %v482
        %v519 = vunpack.c.h.b16 %v482
        %v520 = vunpack.c.l.b16 %v483
        %v521 = vunpack.c.h.b16 %v483
        %v522 = vpack.c.b16 %v520, %v518
        %v523 = vpack.c.b16 %v521, %v519
        %v558 = vunpack.c.l.b16 %v484
        %v559 = vunpack.c.l.b16 %v485
        %v560 = vunpack.c.l.b16 %v486
        %v561 = vunpack.c.l.b16 %v487
        %v562 = vunpack.c.l.b16 %v488
        %v563 = vunpack.c.l.b16 %v489
        %v564 = vunpack.c.l.b16 %v490
        %v565 = vunpack.c.l.b16 %v491
        %v566 = vunpack.c.l.b16 %v492
        %v567 = vunpack.c.l.b16 %v493
        %v568 = vunpack.c.l.b16 %v494
        %v569 = vunpack.c.l.b16 %v495
        %v570 = vunpack.c.l.b16 %v496
        %v571 = vunpack.c.l.b16 %v497
        %v572 = vunpack.c.l.b16 %v498
        %v573 = vunpack.c.l.b16 %v499
        %v574 = vunpack.c.l.b16 %v500
        %v575 = vunpack.c.l.b16 %v501
        %v576 = vunpack.c.l.b16 %v502
        %v577 = vunpack.c.l.b16 %v503
        %v578 = vunpack.c.l.b16 %v504
        %v579 = vunpack.c.l.b16 %v505
        %v580 = vunpack.c.l.b16 %v506
        %v581 = vunpack.c.l.b16 %v507
        %v582 = vunpack.c.l.b16 %v508
        %v583 = vunpack.c.l.b16 %v509
        %v584 = vunpack.c.l.b16 %v510
        %v585 = vunpack.c.l.b16 %v511
        %v586 = vunpack.c.l.b16 %v512
        %v587 = vunpack.c.l.b16 %v513
        %v588 = vunpack.c.l.b16 %v514
        %v589 = vunpack.c.l.b16 %v515
        %v590 = vpack.c.b16 %v559, %v558
        %v591 = vpack.c.b16 %v561, %v560
        %v592 = vpack.c.b16 %v563, %v562
        %v593 = vpack.c.b16 %v565, %v564
        %v594 = vpack.c.b16 %v567, %v566
        %v595 = vpack.c.b16 %v569, %v568
        %v596 = vpack.c.b16 %v571, %v570
        %v597 = vpack.c.b16 %v573, %v572
        %v598 = vpack.c.b16 %v575, %v574
        %v599 = vpack.c.b16 %v577, %v576
        %v600 = vpack.c.b16 %v579, %v578
        %v601 = vpack.c.b16 %v581, %v580
        %v602 = vpack.c.b16 %v583, %v582
        %v603 = vpack.c.b16 %v585, %v584
        %v604 = vpack.c.b16 %v587, %v586
        %v605 = vpack.c.b16 %v589, %v588
        %622 = vmatpush.bf16.msra.mxu0 %v597
        %623 = vmatpush.bf16.msra.mxu0 %v596
        %624 = vmatpush.bf16.msra.mxu0 %v595
        %625 = vmatpush.bf16.msra.mxu0 %v594
        %626 = vmatpush.bf16.msra.mxu0 %v593
        %627 = vmatpush.bf16.msra.mxu0 %v592
        %628 = vmatpush.bf16.msra.mxu0 %v591
        %629 = vmatpush.bf16.msra.mxu0 %v590
        %630 = vmatmul.bf16.gmra.mxu0 %v522
        %v631 = vpop.f32.mrf.mxu0
        %v632 = vadd.f32 0.0, %v631
        %v633 = vpop.f32.mrf.mxu0
        %v634 = vadd.f32 0.0, %v633
        %635 = vdwg.mxu0
        %636 = vmatpush.bf16.msra.mxu0 %v605
        %637 = vmatpush.bf16.msra.mxu0 %v604
        %638 = vmatpush.bf16.msra.mxu0 %v603
        %639 = vmatpush.bf16.msra.mxu0 %v602
        %640 = vmatpush.bf16.msra.mxu0 %v601
        %641 = vmatpush.bf16.msra.mxu0 %v600
        %642 = vmatpush.bf16.msra.mxu0 %v599
        %643 = vmatpush.bf16.msra.mxu0 %v598
        %644 = vmatmul.bf16.gmra.mxu0 %v523
        %v645 = vpop.f32.mrf.mxu0
        %v646 = vadd.f32 %v632, %v645
        %v647 = vpop.f32.mrf.mxu0
        %v648 = vadd.f32 %v634, %v647
        %649 = vdwg.mxu0
        %v650 = vadd.f32 %v480, %v646
        %v651 = vadd.f32 %v481, %v648
        %652 = vst [vmem:[#allocation2] sm:$0xff] %v650
        %653 = vst [vmem:[#allocation2 + $0x8] sm:$0xff] %v651
        // Predicated region
        $region119: #{transformer_forward.14} parent=105 // pred_check
          %p654 = pneg %p474
        $region120: #{transformer_forward.14} parent=105 // pred_check_branch
          %656 = sbr.rel (%p654) target = $region122
        $region121: #{transformer_forward.14} parent=105 // pred_region
          %v657 = vld [vmem:[%s425] sm:$0xf]
          %v658 = vld [vmem:[%s425 + $0x4] sm:$0xf]
          %v659 = vunpack.c.l.bf16 %v657
          %v660 = vunpack.c.l.bf16 %v658
          %v661 = vld [vmem:[#allocation2] sm:$0xff]
          %v662 = vld [vmem:[#allocation2 + $0x8] sm:$0xff]
          %v663 = vadd.f32 %v659, %v661
          %v664 = vadd.f32 %v660, %v662
          %v665 = vpack.c.bf16 %v663, %v663
          %v666 = vpack.c.bf16 %v664, %v664
          %667 = vst [vmem:[%s458] sm:$0xf] %v665
          %668 = vst [vmem:[%s458 + $0x4] sm:$0xf] %v666
        $region122: #{transformer_forward.14} parent=105 // pred_fallthru
          _
        %s669 = sand.u32 %s127, 1
        %s670 = sand.u32 %s127, 1
        %s671 = smul.addr %s670, 8
        %s672 = scalar_lea.vmem [#allocation5], %s671
        // Predicated region
        $region123: #{transformer_forward.14} parent=105 // pred_check
          %p673 = pneg %p137
        $region124: #{transformer_forward.14} parent=105 // pred_check_branch
          %675 = sbr.rel (%p673) target = $region126
        $region125: #{transformer_forward.14} parent=105 // pred_region
          %s676 = smul.u32 2, %s19
          %s677 = smul.addr %s676, 2
          %s678 = sadd.s32 %s20, %s677
          %s679 = smul.addr %s678, 4
          %s680 = scalar_lea.vmem %s3, %s679
          // Predicated region
          $region127: #{transformer_forward.14} parent=125 // pred_check
            _
          $region128: #{transformer_forward.14} parent=125 // pred_check_branch
            %682 = sbr.rel (0) target = $region130
          $region129: #{transformer_forward.14} parent=125 // pred_region
            // Predicated region
            $region131: #{transformer_forward.14} parent=129 // pred_check
              _
            $region132: #{transformer_forward.14} parent=129 // pred_check_branch
              %684 = sbr.rel target = $region134
            $region133: #{transformer_forward.14} parent=129 // pred_region
              // Predicated region
              $region146: #{transformer_forward.14} parent=133 // pred_check
                _
              $region147: #{transformer_forward.14} parent=133 // pred_check_branch
                %702 = sbr.rel (0) target = $region149
              $region148: #{transformer_forward.14} parent=133 // pred_region
                loop: start=0, step=1, limit=1
                $region150: #{transformer_forward.14} parent=148 // loop_pre_header
                  _
                $region151: #{transformer_forward.14} parent=148 // loop_header
                  %s704 = sphi 0, %s708
                  %p705 = scmp.ge.s32.totalorder %s704, 1
                  %s709 = sphi %s672, %s672
                  %s710 = sphi %s680, %s680
                $region152: #{transformer_forward.14} parent=148 // loop_header_branch
                  %707 = sbr.rel (%p705) target = $region156
                $region153: #{transformer_forward.14} parent=148 // loop_body
                  _
                $region154: #{transformer_forward.14} parent=148 // loop_footer
                  %s708 = sadd.s32 1, %s704
                $region155: #{transformer_forward.14} parent=148 // loop_footer_branch
                  %703 = sbr.rel target = $region151
                $region156: #{transformer_forward.14} parent=148 // loop_exit
                  _
                %s712 = ssub.s32 16, 1
                loop: start=0, step=1, limit=1
                $region157: #{transformer_forward.14} parent=148 // loop_pre_header
                  _
                $region158: #{transformer_forward.14} parent=148 // loop_header
                  %s714 = sphi 0, %s718
                  %p715 = scmp.ge.s32.totalorder %s714, 1
                  %s719 = sphi %s672, %s672
                  %s720 = sphi %s680, %s680
                $region159: #{transformer_forward.14} parent=148 // loop_header_branch
                  %717 = sbr.rel (%p715) target = $region163
                $region160: #{transformer_forward.14} parent=148 // loop_body
                  %v721 = vld [vmem:[%s719] sm:%s712]
                  %722 = vst [vmem:[%s720] sm:%s712] %v721
                  %v723 = vld [vmem:[%s719 + $0x4] sm:%s712]
                  %724 = vst [vmem:[%s720 + $0x8] sm:%s712] %v723
                $region161: #{transformer_forward.14} parent=148 // loop_footer
                  %s718 = sadd.s32 1, %s714
                $region162: #{transformer_forward.14} parent=148 // loop_footer_branch
                  %713 = sbr.rel target = $region158
                $region163: #{transformer_forward.14} parent=148 // loop_exit
                  _
              $region149: #{transformer_forward.14} parent=133 // pred_fallthru
                _
            $region134: #{transformer_forward.14} parent=129 // pred_fallthru
              _
            // Predicated region
            $region135: #{transformer_forward.14} parent=129 // pred_check
              _
            $region136: #{transformer_forward.14} parent=129 // pred_check_branch
              %686 = sbr.rel (0) target = $region138
            $region137: #{transformer_forward.14} parent=129 // pred_region
              %s688 = ssub.s32 16, 1
              loop: start=0, step=1, limit=1
              $region139: #{transformer_forward.14} parent=137 // loop_pre_header
                _
              $region140: #{transformer_forward.14} parent=137 // loop_header
                %s690 = sphi 0, %s694
                %p691 = scmp.ge.s32.totalorder %s690, 1
                %s695 = sphi %s672, %s672
                %s696 = sphi %s680, %s680
              $region141: #{transformer_forward.14} parent=137 // loop_header_branch
                %693 = sbr.rel (%p691) target = $region145
              $region142: #{transformer_forward.14} parent=137 // loop_body
                %v697 = vld [vmem:[%s695] sm:%s688]
                %698 = vst [vmem:[%s696] sm:%s688] %v697
                %v699 = vld [vmem:[%s695 + $0x4] sm:%s688]
                %700 = vst [vmem:[%s696 + $0x8] sm:%s688] %v699
              $region143: #{transformer_forward.14} parent=137 // loop_footer
                %s694 = sadd.s32 1, %s690
              $region144: #{transformer_forward.14} parent=137 // loop_footer_branch
                %689 = sbr.rel target = $region140
              $region145: #{transformer_forward.14} parent=137 // loop_exit
                _
            $region138: #{transformer_forward.14} parent=129 // pred_fallthru
              _
          $region130: #{transformer_forward.14} parent=125 // pred_fallthru
            _
          %725 = vnop
        $region126: #{transformer_forward.14} parent=105 // pred_fallthru
          _
      $region106: #{transformer_forward.14} parent=5 // pred_fallthru
        _
      %p726 = scmp.le.s32.totalorder 2, %s9
      // Predicated region
      $region164: #{transformer_forward.14} parent=5 // pred_check
        %p727 = pneg %p726
      $region165: #{transformer_forward.14} parent=5 // pred_check_branch
        %729 = sbr.rel (%p727) target = $region167
      $region166: #{transformer_forward.14} parent=5 // pred_region
        %s730 = ssub.s32 %s9, 2
        // Predicated region
        $region168: #{transformer_forward.14} parent=166 // pred_check
          %p731 = pneg %p143
        $region169: #{transformer_forward.14} parent=166 // pred_check_branch
          %733 = sbr.rel (%p731) target = $region171
        $region170: #{transformer_forward.14} parent=166 // pred_region
          %s734 = sand.u32 %s128, 1
          %s735 = sand.u32 %s128, 1
          %s736 = smul.addr %s735, 8
          %s737 = scalar_lea.vmem [#allocation5], %s736
        $region171: #{transformer_forward.14} parent=166 // pred_fallthru
          _
      $region167: #{transformer_forward.14} parent=5 // pred_fallthru
        _
    $region6: #{transformer_forward.14} parent=1 // loop_footer
      %s13 = sadd.s32 1, %s9
    $region7: #{transformer_forward.14} parent=1 // loop_footer_branch
      %8 = sbr.rel target = $region3
    $region8: #{transformer_forward.14} parent=1 // loop_exit
      _

// kernel: transformer_forward.13
$region0: #{transformer_forward.13}
  #allocation0 [shape = 'u32[]', space=smem, size = 0x4, offset = 0x4, fixed_abs, tag = 'smem constant byte address 0x4 - core index']
  #allocation1 [shape = 'u32[72,128]{1,0:T(1,128)}', space=vmem, size = 0x9000, scoped, tag = 'internal scratch']
  #allocation2 [shape = 'f32[16,1]{1,0:T(8,128)}', space=vmem, size = 0x2000, scoped, tag = 'scratch operand']
  #allocation3 [shape = 'f32[16,1]{1,0:T(8,128)}', space=vmem, size = 0x2000, scoped, tag = 'scratch operand']
  #allocation4 [shape = 'f32[16,128]{1,0:T(8,128)}', space=vmem, size = 0x2000, scoped, tag = 'scratch operand']
  %s0 = inlined_call_operand.vmem [shape: bf16[2,16,128], index: 0, kind: input, shape index: {}]
  %s1 = inlined_call_operand.vmem [shape: bf16[2,8,128], index: 1, kind: input, shape index: {}]
  %s2 = inlined_call_operand.vmem [shape: bf16[2,8,128], index: 2, kind: input, shape index: {}]
  %s3 = inlined_call_operand.vmem [shape: bf16[2,16,128], index: 3, kind: output, shape index: {}]
  %s4 = sld [smem:[#allocation0]]
  $region53: #{transformer_forward.13} parent=0
    _
  %s6 = ssub.s32 1, %s4
  %s7 = scalar_select 0, %s6, %s4
  loop: start=0, step=1, limit=4
  $region2: #{transformer_forward.13} parent=0 // loop_pre_header
    _
  $region3: #{transformer_forward.13} parent=0 // loop_header
    %s9 = sphi 0, %s13
    %p10 = scmp.ge.s32.totalorder %s9, 4
    %s16 = sphi 0, %s28
    %s17 = sphi 0, %s24
    %s18 = sphi 0, %s16
    %s19 = sphi 0, %s17
    %s20 = sphi 0, %s18
    %s21 = sphi 0, %s19
    %s31 = sphi 0, %s33
    %s34 = sphi 0, %s31
    %s35 = sphi 0, %s34
    %s51 = sphi 0, %s35
    %s59 = sphi 0, %s61
    %s62 = sphi 0, %s59
    %s63 = sphi 0, %s62
    %s79 = sphi 0, %s63
    %s87 = sphi 0, %s89
    %s90 = sphi 0, %s87
    %s91 = sphi 0, %s90
    %s107 = sphi 0, %s91
    %s113 = sphi 0, %s115
    %s116 = sphi 0, %s113
    %s117 = sphi 0, %s116
    %s133 = sphi 0, %s117
  $region4: #{transformer_forward.13} parent=0 // loop_header_branch
    %12 = sbr.rel (%p10) target = $region8
  $region5: #{transformer_forward.13} parent=0 // loop_body
    %s14 = ssub.s32 %s9, 1
    %s15 = ssub.s32 %s9, 2
    %s22 = sadd.s32 1, %s17
    %p23 = scmp.ge.s32.totalorder %s22, 1
    %s24 = scalar_select %p23, 0, %s22
    %s25 = sadd.s32 1, %s16
    %s26 = scalar_select %p23, %s25, %s16
    %p27 = scmp.ge.s32.totalorder %s26, 2
    %s28 = scalar_select %p27, 0, %s26
    %s29 = ssub.s32 %s16, %s28
    %p30 = scmp.eq.s32.totalorder %s29, 0
    %s32 = sadd.s32 %s31, 1
    %s33 = scalar_select %p30, %s31, %s32
    %p36 = pneg %p30
    %p37 = scmp.eq.s32.totalorder %s9, 1
    %p38 = por %p36, %p37
    %p39 = scmp.ne.s32.totalorder %s31, %s34
    %p40 = scmp.eq.s32.totalorder %s9, 0
    %p41 = por %p39, %p40
    %p42 = scmp.ne.s32.totalorder %s31, %s34
    %p43 = scmp.eq.s32.totalorder %s14, 1
    %p44 = por %p42, %p43
    %p45 = scmp.ne.s32.totalorder %s34, %s35
    %p46 = scmp.eq.s32.totalorder %s14, 0
    %p47 = por %p45, %p46
    %p48 = scmp.ne.s32.totalorder %s34, %s35
    %p49 = scmp.eq.s32.totalorder %s15, 1
    %p50 = por %p48, %p49
    %p52 = scmp.ne.s32.totalorder %s35, %s51
    %p53 = scmp.eq.s32.totalorder %s15, 0
    %p54 = por %p52, %p53
    %s55 = ssub.s32 %s16, %s28
    %s56 = ssub.s32 %s17, %s24
    %s57 = sor.u32 %s55, %s56
    %p58 = scmp.eq.s32.totalorder %s57, 0
    %s60 = sadd.s32 %s59, 1
    %s61 = scalar_select %p58, %s59, %s60
    %p64 = pneg %p58
    %p65 = scmp.eq.s32.totalorder %s9, 1
    %p66 = por %p64, %p65
    %p67 = scmp.ne.s32.totalorder %s59, %s62
    %p68 = scmp.eq.s32.totalorder %s9, 0
    %p69 = por %p67, %p68
    %p70 = scmp.ne.s32.totalorder %s59, %s62
    %p71 = scmp.eq.s32.totalorder %s14, 1
    %p72 = por %p70, %p71
    %p73 = scmp.ne.s32.totalorder %s62, %s63
    %p74 = scmp.eq.s32.totalorder %s14, 0
    %p75 = por %p73, %p74
    %p76 = scmp.ne.s32.totalorder %s62, %s63
    %p77 = scmp.eq.s32.totalorder %s15, 1
    %p78 = por %p76, %p77
    %p80 = scmp.ne.s32.totalorder %s63, %s79
    %p81 = scmp.eq.s32.totalorder %s15, 0
    %p82 = por %p80, %p81
    %s83 = ssub.s32 %s16, %s28
    %s84 = ssub.s32 %s17, %s24
    %s85 = sor.u32 %s83, %s84
    %p86 = scmp.eq.s32.totalorder %s85, 0
    %s88 = sadd.s32 %s87, 1
    %s89 = scalar_select %p86, %s87, %s88
    %p92 = pneg %p86
    %p93 = scmp.eq.s32.totalorder %s9, 1
    %p94 = por %p92, %p93
    %p95 = scmp.ne.s32.totalorder %s87, %s90
    %p96 = scmp.eq.s32.totalorder %s9, 0
    %p97 = por %p95, %p96
    %p98 = scmp.ne.s32.totalorder %s87, %s90
    %p99 = scmp.eq.s32.totalorder %s14, 1
    %p100 = por %p98, %p99
    %p101 = scmp.ne.s32.totalorder %s90, %s91
    %p102 = scmp.eq.s32.totalorder %s14, 0
    %p103 = por %p101, %p102
    %p104 = scmp.ne.s32.totalorder %s90, %s91
    %p105 = scmp.eq.s32.totalorder %s15, 1
    %p106 = por %p104, %p105
    %p108 = scmp.ne.s32.totalorder %s91, %s107
    %p109 = scmp.eq.s32.totalorder %s15, 0
    %p110 = por %p108, %p109
    %s111 = ssub.s32 %s16, %s28
    %p112 = scmp.eq.s32.totalorder %s111, 0
    %s114 = sadd.s32 %s113, 1
    %s115 = scalar_select %p112, %s113, %s114
    %p118 = pneg %p112
    %p119 = scmp.eq.s32.totalorder %s9, 1
    %p120 = por %p118, %p119
    %p121 = scmp.ne.s32.totalorder %s113, %s116
    %p122 = scmp.eq.s32.totalorder %s9, 0
    %p123 = por %p121, %p122
    %p124 = scmp.ne.s32.totalorder %s113, %s116
    %p125 = scmp.eq.s32.totalorder %s14, 1
    %p126 = por %p124, %p125
    %p127 = scmp.ne.s32.totalorder %s116, %s117
    %p128 = scmp.eq.s32.totalorder %s14, 0
    %p129 = por %p127, %p128
    %p130 = scmp.ne.s32.totalorder %s116, %s117
    %p131 = scmp.eq.s32.totalorder %s15, 1
    %p132 = por %p130, %p131
    %p134 = scmp.ne.s32.totalorder %s117, %s133
    %p135 = scmp.eq.s32.totalorder %s15, 0
    %p136 = por %p134, %p135
    %p137 = scmp.le.s32.totalorder 1, %s9
    %p138 = scmp.lt.s32.totalorder %s9, 3
    %p139 = pnand %p137, %p138
    %p140 = pneg %p139
    // Predicated region
    $region9: #{transformer_forward.13} parent=5 // pred_check
      _
    $region10: #{transformer_forward.13} parent=5 // pred_check_branch
      %142 = sbr.rel (%p139) target = $region12
    $region11: #{transformer_forward.13} parent=5 // pred_region
      %s143 = ssub.s32 %s9, 1
    $region12: #{transformer_forward.13} parent=5 // pred_fallthru
      _
    %p144 = scmp.lt.s32.totalorder %s9, 2
    // Predicated region
    $region13: #{transformer_forward.13} parent=5 // pred_check
      %p145 = pneg %p144
    $region14: #{transformer_forward.13} parent=5 // pred_check_branch
      %147 = sbr.rel (%p145) target = $region16
    $region15: #{transformer_forward.13} parent=5 // pred_region
      // Predicated region
      $region17: #{transformer_forward.13} parent=15 // pred_check
        %p148 = pneg %p41
      $region18: #{transformer_forward.13} parent=15 // pred_check_branch
        %150 = sbr.rel (%p148) target = $region20
      $region19: #{transformer_forward.13} parent=15 // pred_region
        %p151 = scmp.lt.s32.totalorder %s16, 1
        %s152 = scalar_select %p151, %s16, 1
        %s153 = smul.addr %s152, 2
        %s154 = smul.addr %s153, 4
        %s155 = scalar_lea.vmem %s0, %s154
      $region20: #{transformer_forward.13} parent=15 // pred_fallthru
        _
      // Predicated region
      $region21: #{transformer_forward.13} parent=15 // pred_check
        %p156 = pneg %p69
      $region22: #{transformer_forward.13} parent=15 // pred_check_branch
        %158 = sbr.rel (%p156) target = $region24
      $region23: #{transformer_forward.13} parent=15 // pred_region
        %p159 = scmp.lt.s32.totalorder %s16, 1
        %s160 = scalar_select %p159, %s16, 1
        %p161 = scmp.lt.s32.totalorder %s17, 0
        %s162 = scalar_select %p161, %s17, 0
        %s163 = sadd.s32 %s162, %s160
        %s164 = smul.addr %s163, 4
        %s165 = scalar_lea.vmem %s1, %s164
      $region24: #{transformer_forward.13} parent=15 // pred_fallthru
        _
      // Predicated region
      $region25: #{transformer_forward.13} parent=15 // pred_check
        %p166 = pneg %p97
      $region26: #{transformer_forward.13} parent=15 // pred_check_branch
        %168 = sbr.rel (%p166) target = $region28
      $region27: #{transformer_forward.13} parent=15 // pred_region
        %p169 = scmp.lt.s32.totalorder %s16, 1
        %s170 = scalar_select %p169, %s16, 1
        %p171 = scmp.lt.s32.totalorder %s17, 0
        %s172 = scalar_select %p171, %s17, 0
        %s173 = sadd.s32 %s172, %s170
        %s174 = smul.addr %s173, 4
        %s175 = scalar_lea.vmem %s2, %s174
      $region28: #{transformer_forward.13} parent=15 // pred_fallthru
        _
    $region16: #{transformer_forward.13} parent=5 // pred_fallthru
      _
    %p176 = scmp.le.s32.totalorder 1, %s9
    %p177 = scmp.lt.s32.totalorder %s9, 3
    %p178 = pnand %p176, %p177
    %p179 = pneg %p178
    // Predicated region
    $region29: #{transformer_forward.13} parent=5 // pred_check
      _
    $region30: #{transformer_forward.13} parent=5 // pred_check_branch
      %181 = sbr.rel (%p178) target = $region32
    $region31: #{transformer_forward.13} parent=5 // pred_region
      %s182 = ssub.s32 %s9, 1
      %p183 = scmp.lt.s32.totalorder %s18, 1
      %s184 = scalar_select %p183, %s18, 1
      %s185 = smul.addr %s184, 2
      %s186 = smul.addr %s185, 4
      %s187 = scalar_lea.vmem %s0, %s186
      %p188 = pneg %p47
      %p189 = pneg %p44
      %p190 = scmp.lt.s32.totalorder %s18, 1
      %s191 = scalar_select %p190, %s18, 1
      %p192 = scmp.lt.s32.totalorder %s19, 0
      %s193 = scalar_select %p192, %s19, 0
      %s194 = sadd.s32 %s193, %s191
      %s195 = smul.addr %s194, 4
      %s196 = scalar_lea.vmem %s1, %s195
      %p197 = pneg %p75
      %p198 = pneg %p72
      %p199 = scmp.lt.s32.totalorder %s18, 1
      %s200 = scalar_select %p199, %s18, 1
      %p201 = scmp.lt.s32.totalorder %s19, 0
      %s202 = scalar_select %p201, %s19, 0
      %s203 = sadd.s32 %s202, %s200
      %s204 = smul.addr %s203, 4
      %s205 = scalar_lea.vmem %s2, %s204
      %p206 = pneg %p103
      %p207 = pneg %p100
      %p208 = pneg %p129
      %p209 = pneg %p126
      %p210 = scmp.lt.s32.totalorder %s18, 1
      %s211 = scalar_select %p210, %s18, 1
      %s212 = smul.addr %s211, 2
      %s213 = smul.addr %s212, 4
      %s214 = scalar_lea.vmem %s3, %s213
      %p215 = scmp.lt.s32.totalorder %s18, 1
      %s216 = scalar_select %p215, %s18, 1
      %s217 = smul.addr %s216, 2
      %s218 = smul.addr %s217, 4
      %s219 = scalar_lea.vmem %s0, %s218
      %p220 = scmp.lt.s32.totalorder %s18, 1
      %s221 = scalar_select %p220, %s18, 1
      %p222 = scmp.lt.s32.totalorder %s19, 0
      %s223 = scalar_select %p222, %s19, 0
      %s224 = sadd.s32 %s223, %s221
      %s225 = smul.addr %s224, 4
      %s226 = scalar_lea.vmem %s1, %s225
      %p227 = scmp.lt.s32.totalorder %s18, 1
      %s228 = scalar_select %p227, %s18, 1
      %p229 = scmp.lt.s32.totalorder %s19, 0
      %s230 = scalar_select %p229, %s19, 0
      %s231 = sadd.s32 %s230, %s228
      %s232 = smul.addr %s231, 4
      %s233 = scalar_lea.vmem %s2, %s232
      %p234 = scmp.lt.s32.totalorder %s18, 1
      %s235 = scalar_select %p234, %s18, 1
      %s236 = smul.addr %s235, 2
      %s237 = smul.addr %s236, 4
      %s238 = scalar_lea.vmem %s3, %s237
      %p240 = scmp.eq.s32.totalorder %s19, 0
      // Predicated region
      $region33: #{transformer_forward.13} parent=31 // pred_check
        %p241 = pneg %p240
      $region34: #{transformer_forward.13} parent=31 // pred_check_branch
        %243 = sbr.rel (%p241) target = $region36
      $region35: #{transformer_forward.13} parent=31 // pred_region
        %vm244 = vcmask 7168
        %245 = vst.msk [vmem:[#allocation2] sm:$0xff] %vm244, -inf
        %246 = vst.msk [vmem:[#allocation2 + $0x8] sm:$0xff] %vm244, -inf
        %247 = vst.msk [vmem:[#allocation3] sm:$0xff] %vm244, 0.0
        %248 = vst.msk [vmem:[#allocation3 + $0x8] sm:$0xff] %vm244, 0.0
        %249 = vst [vmem:[#allocation4] sm:$0xff] 0.0
        %250 = vst [vmem:[#allocation4 + $0x8] sm:$0xff] 0.0
      $region36: #{transformer_forward.13} parent=31 // pred_fallthru
        _
      %v251 = vld [vmem:[%s219] sm:$0xf]
      %v252 = vld [vmem:[%s219 + $0x4] sm:$0xf]
      %v253 = vld [vmem:[%s226] sm:$0xf]
      %v254 = vld [vmem:[%s233] sm:$0xf]
      %v257 = vunpack.c.l.b16 %v251
      %v258 = vunpack.c.l.b16 %v252
      %v259 = vpack.c.b16 %v258, %v257
      %261 = vmatpush.bf16.xpose.msra.mxu0 0
      %262 = vmatpush.bf16.xpose.msra.mxu0 0
      %263 = vmatpush.bf16.xpose.msra.mxu0 0
      %264 = vmatpush.bf16.xpose.msra.mxu0 0
      %265 = vmatpush.bf16.xpose.msra.mxu0 0
      %266 = vmatpush.bf16.xpose.msra.mxu0 0
      %267 = vmatpush.bf16.xpose.msra.mxu0 0
      %268 = vmatpush.bf16.xpose.msra.mxu0 %v253
      %269 = vmatmul.bf16.gmra.mxu0 %v259
      %v270 = vpop.f32.mrf.mxu0
      %v271 = vadd.f32 0.0, %v270
      %v272 = vpop.f32.mrf.mxu0
      %v273 = vadd.f32 0.0, %v272
      %274 = vdwg.mxu0
      %v275 = vmul.f32 %v271, 0.088388346
      %v276 = vmul.f32 %v273, 0.088388346
      %v277 = vld [vmem:[#allocation2] sm:$0xff]
      %v278 = vld [vmem:[#allocation2 + $0x8] sm:$0xff]
      %vm279 = vcmask 64512
      %v280 = vsel %vm279, %v275, -inf
      %281 = vmax.xlane.f32.xlu0 %v280
      %v282 = vpop.xlane.xlu0 %281
      %v283 = vsel %vm279, %v276, -inf
      %284 = vmax.xlane.f32.xlu0 %v283
      %v285 = vpop.xlane.xlu0 %284
      %v286 = vmax.f32 %v277, %v282
      %v287 = vmax.f32 %v278, %v285
      %v288 = vsub.f32 %v277, %v286
      %v289 = vsub.f32 %v278, %v287
      %v290 = vmul.f32 %v288, 1.442695
      %v291 = vpow.pop %v290
      %v292 = vmul.f32 %v289, 1.442695
      %v293 = vpow.pop %v292
      %295 = vset.pattern.permute.xlu0 0
      %296 = vperm.xlu0 %295, %v286
      %v297 = vpop.permute.xlu0 %296
      %300 = vset.pattern.permute.xlu0 0
      %301 = vperm.xlu0 %300, %v287
      %v302 = vpop.permute.xlu0 %301
      %v304 = vsub.f32 %v275, %v297
      %v305 = vsub.f32 %v276, %v302
      %v306 = vmul.f32 %v304, 1.442695
      %v307 = vpow.pop %v306
      %v308 = vmul.f32 %v305, 1.442695
      %v309 = vpow.pop %v308
      %v310 = vld [vmem:[#allocation3] sm:$0xff]
      %v311 = vld [vmem:[#allocation3 + $0x8] sm:$0xff]
      %v312 = vmul.f32 %v291, %v310
      %v313 = vmul.f32 %v293, %v311
      %v314 = vsel %vm279, %v307, 0.0
      %315 = vadd.xlane.f32.xlu0 %v314
      %v316 = vpop.xlane.xlu0 %315
      %v317 = vsel %vm279, %v309, 0.0
      %318 = vadd.xlane.f32.xlu0 %v317
      %v319 = vpop.xlane.xlu0 %318
      %v320 = vadd.f32 %v312, %v316
      %v321 = vadd.f32 %v313, %v319
      %vm322 = vcmask 7168
      %323 = vst.msk [vmem:[#allocation3] sm:$0xff] %vm322, %v320
      %324 = vst.msk [vmem:[#allocation3 + $0x8] sm:$0xff] %vm322, %v321
      %v325 = vld [vmem:[#allocation4] sm:$0xff]
      %v326 = vld [vmem:[#allocation4 + $0x8] sm:$0xff]
      %328 = vset.pattern.permute.xlu0 0
      %329 = vperm.xlu0 %328, %v291
      %v330 = vpop.permute.xlu0 %329
      %333 = vset.pattern.permute.xlu0 0
      %334 = vperm.xlu0 %333, %v293
      %v335 = vpop.permute.xlu0 %334
      %v337 = vmul.f32 %v330, %v325
      %v338 = vmul.f32 %v335, %v326
      %v339 = vpack.c.bf16 %v309, %v307
      %v341 = vsel %vm279, %v339, 0
      %vm343 = vcmask 1043456
      %v345 = vsel %vm343, %v254, 0
      %347 = vmatpush.bf16.msra.mxu0 0
      %348 = vmatpush.bf16.msra.mxu0 0
      %349 = vmatpush.bf16.msra.mxu0 0
      %350 = vmatpush.bf16.msra.mxu0 0
      %351 = vmatpush.bf16.msra.mxu0 0
      %352 = vmatpush.bf16.msra.mxu0 0
      %353 = vmatpush.bf16.msra.mxu0 0
      %354 = vmatpush.bf16.msra.mxu0 %v345
      %355 = vmatmul.bf16.gmra.mxu0 %v341
      %v356 = vpop.f32.mrf.mxu0
      %v357 = vadd.f32 0.0, %v356
      %v358 = vpop.f32.mrf.mxu0
      %v359 = vadd.f32 0.0, %v358
      %360 = vdwg.mxu0
      %v361 = vadd.f32 %v337, %v357
      %v362 = vadd.f32 %v338, %v359
      %363 = vst [vmem:[#allocation4] sm:$0xff] %v361
      %364 = vst [vmem:[#allocation4 + $0x8] sm:$0xff] %v362
      %365 = vst.msk [vmem:[#allocation2] sm:$0xff] %vm322, %v286
      %366 = vst.msk [vmem:[#allocation2 + $0x8] sm:$0xff] %vm322, %v287
      // Predicated region
      $region37: #{transformer_forward.13} parent=31 // pred_check
        %p367 = pneg %p240
      $region38: #{transformer_forward.13} parent=31 // pred_check_branch
        %369 = sbr.rel (%p367) target = $region40
      $region39: #{transformer_forward.13} parent=31 // pred_region
        %v370 = vld [vmem:[#allocation4] sm:$0xff]
        %v371 = vld [vmem:[#allocation4 + $0x8] sm:$0xff]
        %v372 = vld [vmem:[#allocation3] sm:$0xff]
        %v373 = vld [vmem:[#allocation3 + $0x8] sm:$0xff]
        %v374 = vrcp.pop %v372
        %v375 = vrcp.pop %v373
        %377 = vset.pattern.permute.xlu0 0
        %378 = vperm.xlu0 %377, %v374
        %v379 = vpop.permute.xlu0 %378
        %382 = vset.pattern.permute.xlu0 0
        %383 = vperm.xlu0 %382, %v375
        %v384 = vpop.permute.xlu0 %383
        %v386 = vmul.f32 %v370, %v379
        %v387 = vmul.f32 %v371, %v384
        %v388 = vpack.c.bf16 %v386, %v386
        %v389 = vpack.c.bf16 %v387, %v387
        %390 = vst [vmem:[%s238] sm:$0xf] %v388
        %391 = vst [vmem:[%s238 + $0x4] sm:$0xf] %v389
      $region40: #{transformer_forward.13} parent=31 // pred_fallthru
        _
      %p392 = scmp.lt.s32.totalorder %s18, 1
      %s393 = scalar_select %p392, %s18, 1
      %s394 = smul.addr %s393, 2
      %s395 = smul.addr %s394, 4
      %s396 = scalar_lea.vmem %s3, %s395
      // Predicated region
      $region41: #{transformer_forward.13} parent=31 // pred_check
        %p397 = pneg %p126
      $region42: #{transformer_forward.13} parent=31 // pred_check_branch
        %399 = sbr.rel (%p397) target = $region44
      $region43: #{transformer_forward.13} parent=31 // pred_region
        _
      $region44: #{transformer_forward.13} parent=31 // pred_fallthru
        _
    $region32: #{transformer_forward.13} parent=5 // pred_fallthru
      _
    %p400 = scmp.le.s32.totalorder 2, %s9
    // Predicated region
    $region45: #{transformer_forward.13} parent=5 // pred_check
      %p401 = pneg %p400
    $region46: #{transformer_forward.13} parent=5 // pred_check_branch
      %403 = sbr.rel (%p401) target = $region48
    $region47: #{transformer_forward.13} parent=5 // pred_region
      %s404 = ssub.s32 %s9, 2
      // Predicated region
      $region49: #{transformer_forward.13} parent=47 // pred_check
        %p405 = pneg %p132
      $region50: #{transformer_forward.13} parent=47 // pred_check_branch
        %407 = sbr.rel (%p405) target = $region52
      $region51: #{transformer_forward.13} parent=47 // pred_region
        %p408 = scmp.lt.s32.totalorder %s20, 1
        %s409 = scalar_select %p408, %s20, 1
        %s410 = smul.addr %s409, 2
        %s411 = smul.addr %s410, 4
        %s412 = scalar_lea.vmem %s3, %s411
      $region52: #{transformer_forward.13} parent=47 // pred_fallthru
        _
    $region48: #{transformer_forward.13} parent=5 // pred_fallthru
      _
  $region6: #{transformer_forward.13} parent=0 // loop_footer
    %s13 = sadd.s32 1, %s9
  $region7: #{transformer_forward.13} parent=0 // loop_footer_branch
    %8 = sbr.rel target = $region3
  $region8: #{transformer_forward.13} parent=0 // loop_exit
    _

// kernel: transformer_forward.15
$region0: #{transformer_forward.15}
  #allocation0 [shape = 'u32[]', space=smem, size = 0x4, offset = 0x4, fixed_abs, tag = 'smem constant byte address 0x4 - core index']
  #allocation1 [shape = 'u32[72,128]{1,0:T(1,128)}', space=vmem, size = 0x9000, scoped, tag = 'internal scratch']
  #allocation2 [shape = 'f32[16,256]{1,0:T(8,128)}', space=vmem, size = 0x4000, scoped, tag = 'scratch operand']
  #allocation3 [shape = 'bf16[16,256]{1,0:T(8,128)(2,1)}', space=vmem, size = 0x2000, scoped, tag = 'scratch operand']
  %s0 = inlined_call_operand.vmem [shape: bf16[16,256], index: 0, kind: input, shape index: {}]
  %s1 = inlined_call_operand.vmem [shape: bf16[256,768], index: 1, kind: input, shape index: {}]
  %s2 = inlined_call_operand.vmem [shape: bf16[256,768], index: 2, kind: input, shape index: {}]
  %s3 = inlined_call_operand.vmem [shape: bf16[768,256], index: 3, kind: input, shape index: {}]
  %s4 = inlined_call_operand.vmem [shape: bf16[16,256], index: 4, kind: output, shape index: {}]
  %s5 = sld [smem:[#allocation0]]
  $region109: #{transformer_forward.15} parent=0
    _
  %s7 = ssub.s32 1, %s5
  %s8 = scalar_select 0, %s7, %s5
  $region1: #{transformer_forward.15} parent=0
    #allocation4 [shape = 'u8[393216]{0}', space=vmem, size = 0x60000, scoped, tag = 'input window, operand 1']
    #allocation5 [shape = 'u8[393216]{0}', space=vmem, size = 0x60000, scoped, tag = 'input window, operand 2']
    loop: start=0, step=1, limit=4
    $region2: #{transformer_forward.15} parent=1 // loop_pre_header
      _
    $region3: #{transformer_forward.15} parent=1 // loop_header
      %s10 = sphi 0, %s14
      %p11 = scmp.ge.s32.totalorder %s10, 4
      %s17 = sphi 0, %s29
      %s18 = sphi 0, %s25
      %s19 = sphi 0, %s17
      %s20 = sphi 0, %s18
      %s21 = sphi 0, %s19
      %s22 = sphi 0, %s20
      %s32 = sphi 0, %s34
      %s35 = sphi 0, %s32
      %s36 = sphi 0, %s35
      %s52 = sphi 0, %s36
      %s58 = sphi 0, %s60
      %s61 = sphi 0, %s58
      %s62 = sphi 0, %s61
      %s78 = sphi 0, %s62
      %s84 = sphi 0, %s86
      %s87 = sphi 0, %s84
      %s88 = sphi 0, %s87
      %s104 = sphi 0, %s88
      %s110 = sphi 0, %s112
      %s113 = sphi 0, %s110
      %s114 = sphi 0, %s113
      %s130 = sphi 0, %s114
      %s136 = sphi 0, %s138
      %s139 = sphi 0, %s136
      %s140 = sphi 0, %s139
      %s156 = sphi 0, %s140
    $region4: #{transformer_forward.15} parent=1 // loop_header_branch
      %13 = sbr.rel (%p11) target = $region8
    $region5: #{transformer_forward.15} parent=1 // loop_body
      %s15 = ssub.s32 %s10, 1
      %s16 = ssub.s32 %s10, 2
      %s23 = sadd.s32 1, %s18
      %p24 = scmp.ge.s32.totalorder %s23, 2
      %s25 = scalar_select %p24, 0, %s23
      %s26 = sadd.s32 1, %s17
      %s27 = scalar_select %p24, %s26, %s17
      %p28 = scmp.ge.s32.totalorder %s27, 1
      %s29 = scalar_select %p28, 0, %s27
      %s30 = ssub.s32 %s17, %s29
      %p31 = scmp.eq.s32.totalorder %s30, 0
      %s33 = sadd.s32 %s32, 1
      %s34 = scalar_select %p31, %s32, %s33
      %p37 = pneg %p31
      %p38 = scmp.eq.s32.totalorder %s10, 1
      %p39 = por %p37, %p38
      %p40 = scmp.ne.s32.totalorder %s32, %s35
      %p41 = scmp.eq.s32.totalorder %s10, 0
      %p42 = por %p40, %p41
      %p43 = scmp.ne.s32.totalorder %s32, %s35
      %p44 = scmp.eq.s32.totalorder %s15, 1
      %p45 = por %p43, %p44
      %p46 = scmp.ne.s32.totalorder %s35, %s36
      %p47 = scmp.eq.s32.totalorder %s15, 0
      %p48 = por %p46, %p47
      %p49 = scmp.ne.s32.totalorder %s35, %s36
      %p50 = scmp.eq.s32.totalorder %s16, 1
      %p51 = por %p49, %p50
      %p53 = scmp.ne.s32.totalorder %s36, %s52
      %p54 = scmp.eq.s32.totalorder %s16, 0
      %p55 = por %p53, %p54
      %s56 = ssub.s32 %s18, %s25
      %p57 = scmp.eq.s32.totalorder %s56, 0
      %s59 = sadd.s32 %s58, 1
      %s60 = scalar_select %p57, %s58, %s59
      %p63 = pneg %p57
      %p64 = scmp.eq.s32.totalorder %s10, 1
      %p65 = por %p63, %p64
      %p66 = scmp.ne.s32.totalorder %s58, %s61
      %p67 = scmp.eq.s32.totalorder %s10, 0
      %p68 = por %p66, %p67
      %p69 = scmp.ne.s32.totalorder %s58, %s61
      %p70 = scmp.eq.s32.totalorder %s15, 1
      %p71 = por %p69, %p70
      %p72 = scmp.ne.s32.totalorder %s61, %s62
      %p73 = scmp.eq.s32.totalorder %s15, 0
      %p74 = por %p72, %p73
      %p75 = scmp.ne.s32.totalorder %s61, %s62
      %p76 = scmp.eq.s32.totalorder %s16, 1
      %p77 = por %p75, %p76
      %p79 = scmp.ne.s32.totalorder %s62, %s78
      %p80 = scmp.eq.s32.totalorder %s16, 0
      %p81 = por %p79, %p80
      %s82 = ssub.s32 %s18, %s25
      %p83 = scmp.eq.s32.totalorder %s82, 0
      %s85 = sadd.s32 %s84, 1
      %s86 = scalar_select %p83, %s84, %s85
      %p89 = pneg %p83
      %p90 = scmp.eq.s32.totalorder %s10, 1
      %p91 = por %p89, %p90
      %p92 = scmp.ne.s32.totalorder %s84, %s87
      %p93 = scmp.eq.s32.totalorder %s10, 0
      %p94 = por %p92, %p93
      %p95 = scmp.ne.s32.totalorder %s84, %s87
      %p96 = scmp.eq.s32.totalorder %s15, 1
      %p97 = por %p95, %p96
      %p98 = scmp.ne.s32.totalorder %s87, %s88
      %p99 = scmp.eq.s32.totalorder %s15, 0
      %p100 = por %p98, %p99
      %p101 = scmp.ne.s32.totalorder %s87, %s88
      %p102 = scmp.eq.s32.totalorder %s16, 1
      %p103 = por %p101, %p102
      %p105 = scmp.ne.s32.totalorder %s88, %s104
      %p106 = scmp.eq.s32.totalorder %s16, 0
      %p107 = por %p105, %p106
      %s108 = ssub.s32 %s18, %s25
      %p109 = scmp.eq.s32.totalorder %s108, 0
      %s111 = sadd.s32 %s110, 1
      %s112 = scalar_select %p109, %s110, %s111
      %p115 = pneg %p109
      %p116 = scmp.eq.s32.totalorder %s10, 1
      %p117 = por %p115, %p116
      %p118 = scmp.ne.s32.totalorder %s110, %s113
      %p119 = scmp.eq.s32.totalorder %s10, 0
      %p120 = por %p118, %p119
      %p121 = scmp.ne.s32.totalorder %s110, %s113
      %p122 = scmp.eq.s32.totalorder %s15, 1
      %p123 = por %p121, %p122
      %p124 = scmp.ne.s32.totalorder %s113, %s114
      %p125 = scmp.eq.s32.totalorder %s15, 0
      %p126 = por %p124, %p125
      %p127 = scmp.ne.s32.totalorder %s113, %s114
      %p128 = scmp.eq.s32.totalorder %s16, 1
      %p129 = por %p127, %p128
      %p131 = scmp.ne.s32.totalorder %s114, %s130
      %p132 = scmp.eq.s32.totalorder %s16, 0
      %p133 = por %p131, %p132
      %s134 = ssub.s32 %s17, %s29
      %p135 = scmp.eq.s32.totalorder %s134, 0
      %s137 = sadd.s32 %s136, 1
      %s138 = scalar_select %p135, %s136, %s137
      %p141 = pneg %p135
      %p142 = scmp.eq.s32.totalorder %s10, 1
      %p143 = por %p141, %p142
      %p144 = scmp.ne.s32.totalorder %s136, %s139
      %p145 = scmp.eq.s32.totalorder %s10, 0
      %p146 = por %p144, %p145
      %p147 = scmp.ne.s32.totalorder %s136, %s139
      %p148 = scmp.eq.s32.totalorder %s15, 1
      %p149 = por %p147, %p148
      %p150 = scmp.ne.s32.totalorder %s139, %s140
      %p151 = scmp.eq.s32.totalorder %s15, 0
      %p152 = por %p150, %p151
      %p153 = scmp.ne.s32.totalorder %s139, %s140
      %p154 = scmp.eq.s32.totalorder %s16, 1
      %p155 = por %p153, %p154
      %p157 = scmp.ne.s32.totalorder %s140, %s156
      %p158 = scmp.eq.s32.totalorder %s16, 0
      %p159 = por %p157, %p158
      %p160 = scmp.le.s32.totalorder 1, %s10
      %p161 = scmp.lt.s32.totalorder %s10, 3
      %p162 = pnand %p160, %p161
      %p163 = pneg %p162
      // Predicated region
      $region9: #{transformer_forward.15} parent=5 // pred_check
        _
      $region10: #{transformer_forward.15} parent=5 // pred_check_branch
        %165 = sbr.rel (%p162) target = $region12
      $region11: #{transformer_forward.15} parent=5 // pred_region
        %s166 = ssub.s32 %s10, 1
        // Predicated region
        $region13: #{transformer_forward.15} parent=11 // pred_check
          %p167 = pneg %p48
        $region14: #{transformer_forward.15} parent=11 // pred_check_branch
          %169 = sbr.rel (%p167) target = $region16
        $region15: #{transformer_forward.15} parent=11 // pred_region
          %s170 = smul.u32 2, %s19
          %p171 = scmp.lt.s32.totalorder %s170, 1
          %s172 = scalar_select %p171, %s170, 1
          %s173 = smul.addr %s172, 2
          %s174 = smul.addr %s173, 4
          %s175 = scalar_lea.vmem %s0, %s174
          %s176 = smul.u32 2, %s19
        $region16: #{transformer_forward.15} parent=11 // pred_fallthru
          _
      $region12: #{transformer_forward.15} parent=5 // pred_fallthru
        _
      %p177 = scmp.lt.s32.totalorder %s10, 2
      // Predicated region
      $region17: #{transformer_forward.15} parent=5 // pred_check
        %p178 = pneg %p177
      $region18: #{transformer_forward.15} parent=5 // pred_check_branch
        %180 = sbr.rel (%p178) target = $region20
      $region19: #{transformer_forward.15} parent=5 // pred_region
        // Predicated region
        $region21: #{transformer_forward.15} parent=19 // pred_check
          %p181 = pneg %p68
        $region22: #{transformer_forward.15} parent=19 // pred_check_branch
          %183 = sbr.rel (%p181) target = $region24
        $region23: #{transformer_forward.15} parent=19 // pred_region
          %s184 = sand.u32 %s58, 1
          %s185 = sand.u32 %s58, 1
          %s186 = smul.addr %s185, 384
          %s187 = scalar_lea.vmem [#allocation4], %s186
          %s188 = smul.u32 3, %s18
          %s189 = smul.addr %s188, 4
          %s190 = scalar_lea.vmem %s1, %s189
          // Predicated region
          $region25: #{transformer_forward.15} parent=23 // pred_check
            _
          $region26: #{transformer_forward.15} parent=23 // pred_check_branch
            %192 = sbr.rel (0) target = $region28
          $region27: #{transformer_forward.15} parent=23 // pred_region
            // Predicated region
            $region29: #{transformer_forward.15} parent=27 // pred_check
              _
            $region30: #{transformer_forward.15} parent=27 // pred_check_branch
              %194 = sbr.rel (0) target = $region32
            $region31: #{transformer_forward.15} parent=27 // pred_region
              %s195 = scalar_lea.vmem %s190, 8
              %s196 = scalar_lea.vmem %s187, 8 [#allocation4]
              loop: start=0, step=1, limit=1
              $region33: #{transformer_forward.15} parent=31 // loop_pre_header
                _
              $region34: #{transformer_forward.15} parent=31 // loop_header
                %s198 = sphi 0, %s202
                %p199 = scmp.ge.s32.totalorder %s198, 1
                %s203 = sphi %s190, %s190
                %s204 = sphi %s187, %s187
              $region35: #{transformer_forward.15} parent=31 // loop_header_branch
                %201 = sbr.rel (%p199) target = $region39
              $region36: #{transformer_forward.15} parent=31 // loop_body
                %v205 = vld [vmem:[%s203] sm:$0xff]
                %206 = vst [vmem:[%s204] sm:$0xff] %v205
                %v207 = vld [vmem:[%s203 + $0x18] sm:$0xff]
                %208 = vst [vmem:[%s204 + $0xc] sm:$0xff] %v207
                %v209 = vld [vmem:[%s203 + $0x30] sm:$0xff]
                %210 = vst [vmem:[%s204 + $0x18] sm:$0xff] %v209
                %v211 = vld [vmem:[%s203 + $0x48] sm:$0xff]
                %212 = vst [vmem:[%s204 + $0x24] sm:$0xff] %v211
                %v213 = vld [vmem:[%s203 + $0x60] sm:$0xff]
                %214 = vst [vmem:[%s204 + $0x30] sm:$0xff] %v213
                %v215 = vld [vmem:[%s203 + $0x78] sm:$0xff]
                %216 = vst [vmem:[%s204 + $0x3c] sm:$0xff] %v215
                %v217 = vld [vmem:[%s203 + $0x90] sm:$0xff]
                %218 = vst [vmem:[%s204 + $0x48] sm:$0xff] %v217
                %v219 = vld [vmem:[%s203 + $0xa8] sm:$0xff]
                %220 = vst [vmem:[%s204 + $0x54] sm:$0xff] %v219
                %v221 = vld [vmem:[%s203 + $0xc0] sm:$0xff]
                %222 = vst [vmem:[%s204 + $0x60] sm:$0xff] %v221
                %v223 = vld [vmem:[%s203 + $0xd8] sm:$0xff]
                %224 = vst [vmem:[%s204 + $0x6c] sm:$0xff] %v223
                %v225 = vld [vmem:[%s203 + $0xf0] sm:$0xff]
                %226 = vst [vmem:[%s204 + $0x78] sm:$0xff] %v225
                %v227 = vld [vmem:[%s203 + $0x108] sm:$0xff]
                %228 = vst [vmem:[%s204 + $0x84] sm:$0xff] %v227
                %v229 = vld [vmem:[%s203 + $0x120] sm:$0xff]
                %230 = vst [vmem:[%s204 + $0x90] sm:$0xff] %v229
                %v231 = vld [vmem:[%s203 + $0x138] sm:$0xff]
                %232 = vst [vmem:[%s204 + $0x9c] sm:$0xff] %v231
                %v233 = vld [vmem:[%s203 + $0x150] sm:$0xff]
                %234 = vst [vmem:[%s204 + $0xa8] sm:$0xff] %v233
                %v235 = vld [vmem:[%s203 + $0x168] sm:$0xff]
                %236 = vst [vmem:[%s204 + $0xb4] sm:$0xff] %v235
                %v237 = vld [vmem:[%s203 + $0x180] sm:$0xff]
                %238 = vst [vmem:[%s204 + $0xc0] sm:$0xff] %v237
                %v239 = vld [vmem:[%s203 + $0x198] sm:$0xff]
                %240 = vst [vmem:[%s204 + $0xcc] sm:$0xff] %v239
                %v241 = vld [vmem:[%s203 + $0x1b0] sm:$0xff]
                %242 = vst [vmem:[%s204 + $0xd8] sm:$0xff] %v241
                %v243 = vld [vmem:[%s203 + $0x1c8] sm:$0xff]
                %244 = vst [vmem:[%s204 + $0xe4] sm:$0xff] %v243
                %v245 = vld [vmem:[%s203 + $0x1e0] sm:$0xff]
                %246 = vst [vmem:[%s204 + $0xf0] sm:$0xff] %v245
                %v247 = vld [vmem:[%s203 + $0x1f8] sm:$0xff]
                %248 = vst [vmem:[%s204 + $0xfc] sm:$0xff] %v247
                %v249 = vld [vmem:[%s203 + $0x210] sm:$0xff]
                %250 = vst [vmem:[%s204 + $0x108] sm:$0xff] %v249
                %v251 = vld [vmem:[%s203 + $0x228] sm:$0xff]
                %252 = vst [vmem:[%s204 + $0x114] sm:$0xff] %v251
                %v253 = vld [vmem:[%s203 + $0x240] sm:$0xff]
                %254 = vst [vmem:[%s204 + $0x120] sm:$0xff] %v253
                %v255 = vld [vmem:[%s203 + $0x258] sm:$0xff]
                %256 = vst [vmem:[%s204 + $0x12c] sm:$0xff] %v255
                %v257 = vld [vmem:[%s203 + $0x270] sm:$0xff]
                %258 = vst [vmem:[%s204 + $0x138] sm:$0xff] %v257
                %v259 = vld [vmem:[%s203 + $0x288] sm:$0xff]
                %260 = vst [vmem:[%s204 + $0x144] sm:$0xff] %v259
                %v261 = vld [vmem:[%s203 + $0x2a0] sm:$0xff]
                %262 = vst [vmem:[%s204 + $0x150] sm:$0xff] %v261
                %v263 = vld [vmem:[%s203 + $0x2b8] sm:$0xff]
                %264 = vst [vmem:[%s204 + $0x15c] sm:$0xff] %v263
                %v265 = vld [vmem:[%s203 + $0x2d0] sm:$0xff]
                %266 = vst [vmem:[%s204 + $0x168] sm:$0xff] %v265
                %v267 = vld [vmem:[%s203 + $0x2e8] sm:$0xff]
                %268 = vst [vmem:[%s204 + $0x174] sm:$0xff] %v267
              $region37: #{transformer_forward.15} parent=31 // loop_footer
                %s202 = sadd.s32 1, %s198
              $region38: #{transformer_forward.15} parent=31 // loop_footer_branch
                %197 = sbr.rel target = $region34
              $region39: #{transformer_forward.15} parent=31 // loop_exit
                _
              %s270 = ssub.s32 16, 1
              loop: start=0, step=1, limit=1
              $region40: #{transformer_forward.15} parent=31 // loop_pre_header
                _
              $region41: #{transformer_forward.15} parent=31 // loop_header
                %s272 = sphi 0, %s276
                %p273 = scmp.ge.s32.totalorder %s272, 1
                %s277 = sphi %s195, %s195
                %s278 = sphi %s196, %s196
              $region42: #{transformer_forward.15} parent=31 // loop_header_branch
                %275 = sbr.rel (%p273) target = $region46
              $region43: #{transformer_forward.15} parent=31 // loop_body
                %v279 = vld [vmem:[%s277] sm:%s270]
                %280 = vst [vmem:[%s278] sm:%s270] %v279
                %v281 = vld [vmem:[%s277 + $0x18] sm:%s270]
                %282 = vst [vmem:[%s278 + $0xc] sm:%s270] %v281
                %v283 = vld [vmem:[%s277 + $0x30] sm:%s270]
                %284 = vst [vmem:[%s278 + $0x18] sm:%s270] %v283
                %v285 = vld [vmem:[%s277 + $0x48] sm:%s270]
                %286 = vst [vmem:[%s278 + $0x24] sm:%s270] %v285
                %v287 = vld [vmem:[%s277 + $0x60] sm:%s270]
                %288 = vst [vmem:[%s278 + $0x30] sm:%s270] %v287
                %v289 = vld [vmem:[%s277 + $0x78] sm:%s270]
                %290 = vst [vmem:[%s278 + $0x3c] sm:%s270] %v289
                %v291 = vld [vmem:[%s277 + $0x90] sm:%s270]
                %292 = vst [vmem:[%s278 + $0x48] sm:%s270] %v291
                %v293 = vld [vmem:[%s277 + $0xa8] sm:%s270]
                %294 = vst [vmem:[%s278 + $0x54] sm:%s270] %v293
                %v295 = vld [vmem:[%s277 + $0xc0] sm:%s270]
                %296 = vst [vmem:[%s278 + $0x60] sm:%s270] %v295
                %v297 = vld [vmem:[%s277 + $0xd8] sm:%s270]
                %298 = vst [vmem:[%s278 + $0x6c] sm:%s270] %v297
                %v299 = vld [vmem:[%s277 + $0xf0] sm:%s270]
                %300 = vst [vmem:[%s278 + $0x78] sm:%s270] %v299
                %v301 = vld [vmem:[%s277 + $0x108] sm:%s270]
                %302 = vst [vmem:[%s278 + $0x84] sm:%s270] %v301
                %v303 = vld [vmem:[%s277 + $0x120] sm:%s270]
                %304 = vst [vmem:[%s278 + $0x90] sm:%s270] %v303
                %v305 = vld [vmem:[%s277 + $0x138] sm:%s270]
                %306 = vst [vmem:[%s278 + $0x9c] sm:%s270] %v305
                %v307 = vld [vmem:[%s277 + $0x150] sm:%s270]
                %308 = vst [vmem:[%s278 + $0xa8] sm:%s270] %v307
                %v309 = vld [vmem:[%s277 + $0x168] sm:%s270]
                %310 = vst [vmem:[%s278 + $0xb4] sm:%s270] %v309
                %v311 = vld [vmem:[%s277 + $0x180] sm:%s270]
                %312 = vst [vmem:[%s278 + $0xc0] sm:%s270] %v311
                %v313 = vld [vmem:[%s277 + $0x198] sm:%s270]
                %314 = vst [vmem:[%s278 + $0xcc] sm:%s270] %v313
                %v315 = vld [vmem:[%s277 + $0x1b0] sm:%s270]
                %316 = vst [vmem:[%s278 + $0xd8] sm:%s270] %v315
                %v317 = vld [vmem:[%s277 + $0x1c8] sm:%s270]
                %318 = vst [vmem:[%s278 + $0xe4] sm:%s270] %v317
                %v319 = vld [vmem:[%s277 + $0x1e0] sm:%s270]
                %320 = vst [vmem:[%s278 + $0xf0] sm:%s270] %v319
                %v321 = vld [vmem:[%s277 + $0x1f8] sm:%s270]
                %322 = vst [vmem:[%s278 + $0xfc] sm:%s270] %v321
                %v323 = vld [vmem:[%s277 + $0x210] sm:%s270]
                %324 = vst [vmem:[%s278 + $0x108] sm:%s270] %v323
                %v325 = vld [vmem:[%s277 + $0x228] sm:%s270]
                %326 = vst [vmem:[%s278 + $0x114] sm:%s270] %v325
                %v327 = vld [vmem:[%s277 + $0x240] sm:%s270]
                %328 = vst [vmem:[%s278 + $0x120] sm:%s270] %v327
                %v329 = vld [vmem:[%s277 + $0x258] sm:%s270]
                %330 = vst [vmem:[%s278 + $0x12c] sm:%s270] %v329
                %v331 = vld [vmem:[%s277 + $0x270] sm:%s270]
                %332 = vst [vmem:[%s278 + $0x138] sm:%s270] %v331
                %v333 = vld [vmem:[%s277 + $0x288] sm:%s270]
                %334 = vst [vmem:[%s278 + $0x144] sm:%s270] %v333
                %v335 = vld [vmem:[%s277 + $0x2a0] sm:%s270]
                %336 = vst [vmem:[%s278 + $0x150] sm:%s270] %v335
                %v337 = vld [vmem:[%s277 + $0x2b8] sm:%s270]
                %338 = vst [vmem:[%s278 + $0x15c] sm:%s270] %v337
                %v339 = vld [vmem:[%s277 + $0x2d0] sm:%s270]
                %340 = vst [vmem:[%s278 + $0x168] sm:%s270] %v339
                %v341 = vld [vmem:[%s277 + $0x2e8] sm:%s270]
                %342 = vst [vmem:[%s278 + $0x174] sm:%s270] %v341
              $region44: #{transformer_forward.15} parent=31 // loop_footer
                %s276 = sadd.s32 1, %s272
              $region45: #{transformer_forward.15} parent=31 // loop_footer_branch
                %271 = sbr.rel target = $region41
              $region46: #{transformer_forward.15} parent=31 // loop_exit
                _
            $region32: #{transformer_forward.15} parent=27 // pred_fallthru
              _
          $region28: #{transformer_forward.15} parent=23 // pred_fallthru
            _
          %343 = vnop
        $region24: #{transformer_forward.15} parent=19 // pred_fallthru
          _
        // Predicated region
        $region47: #{transformer_forward.15} parent=19 // pred_check
          %p344 = pneg %p94
        $region48: #{transformer_forward.15} parent=19 // pred_check_branch
          %346 = sbr.rel (%p344) target = $region50
        $region49: #{transformer_forward.15} parent=19 // pred_region
          %s347 = sand.u32 %s84, 1
          %s348 = sand.u32 %s84, 1
          %s349 = smul.addr %s348, 384
          %s350 = scalar_lea.vmem [#allocation5], %s349
          %s351 = smul.u32 3, %s18
          %s352 = smul.addr %s351, 4
          %s353 = scalar_lea.vmem %s2, %s352
          // Predicated region
          $region51: #{transformer_forward.15} parent=49 // pred_check
            _
          $region52: #{transformer_forward.15} parent=49 // pred_check_branch
            %355 = sbr.rel (0) target = $region54
          $region53: #{transformer_forward.15} parent=49 // pred_region
            // Predicated region
            $region55: #{transformer_forward.15} parent=53 // pred_check
              _
            $region56: #{transformer_forward.15} parent=53 // pred_check_branch
              %357 = sbr.rel (0) target = $region58
            $region57: #{transformer_forward.15} parent=53 // pred_region
              %s358 = scalar_lea.vmem %s353, 8
              %s359 = scalar_lea.vmem %s350, 8 [#allocation5]
              loop: start=0, step=1, limit=1
              $region59: #{transformer_forward.15} parent=57 // loop_pre_header
                _
              $region60: #{transformer_forward.15} parent=57 // loop_header
                %s361 = sphi 0, %s365
                %p362 = scmp.ge.s32.totalorder %s361, 1
                %s366 = sphi %s353, %s353
                %s367 = sphi %s350, %s350
              $region61: #{transformer_forward.15} parent=57 // loop_header_branch
                %364 = sbr.rel (%p362) target = $region65
              $region62: #{transformer_forward.15} parent=57 // loop_body
                %v368 = vld [vmem:[%s366] sm:$0xff]
                %369 = vst [vmem:[%s367] sm:$0xff] %v368
                %v370 = vld [vmem:[%s366 + $0x18] sm:$0xff]
                %371 = vst [vmem:[%s367 + $0xc] sm:$0xff] %v370
                %v372 = vld [vmem:[%s366 + $0x30] sm:$0xff]
                %373 = vst [vmem:[%s367 + $0x18] sm:$0xff] %v372
                %v374 = vld [vmem:[%s366 + $0x48] sm:$0xff]
                %375 = vst [vmem:[%s367 + $0x24] sm:$0xff] %v374
                %v376 = vld [vmem:[%s366 + $0x60] sm:$0xff]
                %377 = vst [vmem:[%s367 + $0x30] sm:$0xff] %v376
                %v378 = vld [vmem:[%s366 + $0x78] sm:$0xff]
                %379 = vst [vmem:[%s367 + $0x3c] sm:$0xff] %v378
                %v380 = vld [vmem:[%s366 + $0x90] sm:$0xff]
                %381 = vst [vmem:[%s367 + $0x48] sm:$0xff] %v380
                %v382 = vld [vmem:[%s366 + $0xa8] sm:$0xff]
                %383 = vst [vmem:[%s367 + $0x54] sm:$0xff] %v382
                %v384 = vld [vmem:[%s366 + $0xc0] sm:$0xff]
                %385 = vst [vmem:[%s367 + $0x60] sm:$0xff] %v384
                %v386 = vld [vmem:[%s366 + $0xd8] sm:$0xff]
                %387 = vst [vmem:[%s367 + $0x6c] sm:$0xff] %v386
                %v388 = vld [vmem:[%s366 + $0xf0] sm:$0xff]
                %389 = vst [vmem:[%s367 + $0x78] sm:$0xff] %v388
                %v390 = vld [vmem:[%s366 + $0x108] sm:$0xff]
                %391 = vst [vmem:[%s367 + $0x84] sm:$0xff] %v390
                %v392 = vld [vmem:[%s366 + $0x120] sm:$0xff]
                %393 = vst [vmem:[%s367 + $0x90] sm:$0xff] %v392
                %v394 = vld [vmem:[%s366 + $0x138] sm:$0xff]
                %395 = vst [vmem:[%s367 + $0x9c] sm:$0xff] %v394
                %v396 = vld [vmem:[%s366 + $0x150] sm:$0xff]
                %397 = vst [vmem:[%s367 + $0xa8] sm:$0xff] %v396
                %v398 = vld [vmem:[%s366 + $0x168] sm:$0xff]
                %399 = vst [vmem:[%s367 + $0xb4] sm:$0xff] %v398
                %v400 = vld [vmem:[%s366 + $0x180] sm:$0xff]
                %401 = vst [vmem:[%s367 + $0xc0] sm:$0xff] %v400
                %v402 = vld [vmem:[%s366 + $0x198] sm:$0xff]
                %403 = vst [vmem:[%s367 + $0xcc] sm:$0xff] %v402
                %v404 = vld [vmem:[%s366 + $0x1b0] sm:$0xff]
                %405 = vst [vmem:[%s367 + $0xd8] sm:$0xff] %v404
                %v406 = vld [vmem:[%s366 + $0x1c8] sm:$0xff]
                %407 = vst [vmem:[%s367 + $0xe4] sm:$0xff] %v406
                %v408 = vld [vmem:[%s366 + $0x1e0] sm:$0xff]
                %409 = vst [vmem:[%s367 + $0xf0] sm:$0xff] %v408
                %v410 = vld [vmem:[%s366 + $0x1f8] sm:$0xff]
                %411 = vst [vmem:[%s367 + $0xfc] sm:$0xff] %v410
                %v412 = vld [vmem:[%s366 + $0x210] sm:$0xff]
                %413 = vst [vmem:[%s367 + $0x108] sm:$0xff] %v412
                %v414 = vld [vmem:[%s366 + $0x228] sm:$0xff]
                %415 = vst [vmem:[%s367 + $0x114] sm:$0xff] %v414
                %v416 = vld [vmem:[%s366 + $0x240] sm:$0xff]
                %417 = vst [vmem:[%s367 + $0x120] sm:$0xff] %v416
                %v418 = vld [vmem:[%s366 + $0x258] sm:$0xff]
                %419 = vst [vmem:[%s367 + $0x12c] sm:$0xff] %v418
                %v420 = vld [vmem:[%s366 + $0x270] sm:$0xff]
                %421 = vst [vmem:[%s367 + $0x138] sm:$0xff] %v420
                %v422 = vld [vmem:[%s366 + $0x288] sm:$0xff]
                %423 = vst [vmem:[%s367 + $0x144] sm:$0xff] %v422
                %v424 = vld [vmem:[%s366 + $0x2a0] sm:$0xff]
                %425 = vst [vmem:[%s367 + $0x150] sm:$0xff] %v424
                %v426 = vld [vmem:[%s366 + $0x2b8] sm:$0xff]
                %427 = vst [vmem:[%s367 + $0x15c] sm:$0xff] %v426
                %v428 = vld [vmem:[%s366 + $0x2d0] sm:$0xff]
                %429 = vst [vmem:[%s367 + $0x168] sm:$0xff] %v428
                %v430 = vld [vmem:[%s366 + $0x2e8] sm:$0xff]
                %431 = vst [vmem:[%s367 + $0x174] sm:$0xff] %v430
              $region63: #{transformer_forward.15} parent=57 // loop_footer
                %s365 = sadd.s32 1, %s361
              $region64: #{transformer_forward.15} parent=57 // loop_footer_branch
                %360 = sbr.rel target = $region60
              $region65: #{transformer_forward.15} parent=57 // loop_exit
                _
              %s433 = ssub.s32 16, 1
              loop: start=0, step=1, limit=1
              $region66: #{transformer_forward.15} parent=57 // loop_pre_header
                _
              $region67: #{transformer_forward.15} parent=57 // loop_header
                %s435 = sphi 0, %s439
                %p436 = scmp.ge.s32.totalorder %s435, 1
                %s440 = sphi %s358, %s358
                %s441 = sphi %s359, %s359
              $region68: #{transformer_forward.15} parent=57 // loop_header_branch
                %438 = sbr.rel (%p436) target = $region72
              $region69: #{transformer_forward.15} parent=57 // loop_body
                %v442 = vld [vmem:[%s440] sm:%s433]
                %443 = vst [vmem:[%s441] sm:%s433] %v442
                %v444 = vld [vmem:[%s440 + $0x18] sm:%s433]
                %445 = vst [vmem:[%s441 + $0xc] sm:%s433] %v444
                %v446 = vld [vmem:[%s440 + $0x30] sm:%s433]
                %447 = vst [vmem:[%s441 + $0x18] sm:%s433] %v446
                %v448 = vld [vmem:[%s440 + $0x48] sm:%s433]
                %449 = vst [vmem:[%s441 + $0x24] sm:%s433] %v448
                %v450 = vld [vmem:[%s440 + $0x60] sm:%s433]
                %451 = vst [vmem:[%s441 + $0x30] sm:%s433] %v450
                %v452 = vld [vmem:[%s440 + $0x78] sm:%s433]
                %453 = vst [vmem:[%s441 + $0x3c] sm:%s433] %v452
                %v454 = vld [vmem:[%s440 + $0x90] sm:%s433]
                %455 = vst [vmem:[%s441 + $0x48] sm:%s433] %v454
                %v456 = vld [vmem:[%s440 + $0xa8] sm:%s433]
                %457 = vst [vmem:[%s441 + $0x54] sm:%s433] %v456
                %v458 = vld [vmem:[%s440 + $0xc0] sm:%s433]
                %459 = vst [vmem:[%s441 + $0x60] sm:%s433] %v458
                %v460 = vld [vmem:[%s440 + $0xd8] sm:%s433]
                %461 = vst [vmem:[%s441 + $0x6c] sm:%s433] %v460
                %v462 = vld [vmem:[%s440 + $0xf0] sm:%s433]
                %463 = vst [vmem:[%s441 + $0x78] sm:%s433] %v462
                %v464 = vld [vmem:[%s440 + $0x108] sm:%s433]
                %465 = vst [vmem:[%s441 + $0x84] sm:%s433] %v464
                %v466 = vld [vmem:[%s440 + $0x120] sm:%s433]
                %467 = vst [vmem:[%s441 + $0x90] sm:%s433] %v466
                %v468 = vld [vmem:[%s440 + $0x138] sm:%s433]
                %469 = vst [vmem:[%s441 + $0x9c] sm:%s433] %v468
                %v470 = vld [vmem:[%s440 + $0x150] sm:%s433]
                %471 = vst [vmem:[%s441 + $0xa8] sm:%s433] %v470
                %v472 = vld [vmem:[%s440 + $0x168] sm:%s433]
                %473 = vst [vmem:[%s441 + $0xb4] sm:%s433] %v472
                %v474 = vld [vmem:[%s440 + $0x180] sm:%s433]
                %475 = vst [vmem:[%s441 + $0xc0] sm:%s433] %v474
                %v476 = vld [vmem:[%s440 + $0x198] sm:%s433]
                %477 = vst [vmem:[%s441 + $0xcc] sm:%s433] %v476
                %v478 = vld [vmem:[%s440 + $0x1b0] sm:%s433]
                %479 = vst [vmem:[%s441 + $0xd8] sm:%s433] %v478
                %v480 = vld [vmem:[%s440 + $0x1c8] sm:%s433]
                %481 = vst [vmem:[%s441 + $0xe4] sm:%s433] %v480
                %v482 = vld [vmem:[%s440 + $0x1e0] sm:%s433]
                %483 = vst [vmem:[%s441 + $0xf0] sm:%s433] %v482
                %v484 = vld [vmem:[%s440 + $0x1f8] sm:%s433]
                %485 = vst [vmem:[%s441 + $0xfc] sm:%s433] %v484
                %v486 = vld [vmem:[%s440 + $0x210] sm:%s433]
                %487 = vst [vmem:[%s441 + $0x108] sm:%s433] %v486
                %v488 = vld [vmem:[%s440 + $0x228] sm:%s433]
                %489 = vst [vmem:[%s441 + $0x114] sm:%s433] %v488
                %v490 = vld [vmem:[%s440 + $0x240] sm:%s433]
                %491 = vst [vmem:[%s441 + $0x120] sm:%s433] %v490
                %v492 = vld [vmem:[%s440 + $0x258] sm:%s433]
                %493 = vst [vmem:[%s441 + $0x12c] sm:%s433] %v492
                %v494 = vld [vmem:[%s440 + $0x270] sm:%s433]
                %495 = vst [vmem:[%s441 + $0x138] sm:%s433] %v494
                %v496 = vld [vmem:[%s440 + $0x288] sm:%s433]
                %497 = vst [vmem:[%s441 + $0x144] sm:%s433] %v496
                %v498 = vld [vmem:[%s440 + $0x2a0] sm:%s433]
                %499 = vst [vmem:[%s441 + $0x150] sm:%s433] %v498
                %v500 = vld [vmem:[%s440 + $0x2b8] sm:%s433]
                %501 = vst [vmem:[%s441 + $0x15c] sm:%s433] %v500
                %v502 = vld [vmem:[%s440 + $0x2d0] sm:%s433]
                %503 = vst [vmem:[%s441 + $0x168] sm:%s433] %v502
                %v504 = vld [vmem:[%s440 + $0x2e8] sm:%s433]
                %505 = vst [vmem:[%s441 + $0x174] sm:%s433] %v504
              $region70: #{transformer_forward.15} parent=57 // loop_footer
                %s439 = sadd.s32 1, %s435
              $region71: #{transformer_forward.15} parent=57 // loop_footer_branch
                %434 = sbr.rel target = $region67
              $region72: #{transformer_forward.15} parent=57 // loop_exit
                _
            $region58: #{transformer_forward.15} parent=53 // pred_fallthru
              _
          $region54: #{transformer_forward.15} parent=49 // pred_fallthru
            _
          %506 = vnop
        $region50: #{transformer_forward.15} parent=19 // pred_fallthru
          _
        // Predicated region
        $region73: #{transformer_forward.15} parent=19 // pred_check
          %p507 = pneg %p120
        $region74: #{transformer_forward.15} parent=19 // pred_check_branch
          %509 = sbr.rel (%p507) target = $region76
        $region75: #{transformer_forward.15} parent=19 // pred_region
          %s510 = smul.u32 48, %s18
          %p511 = scmp.lt.s32.totalorder %s510, 95
          %s512 = scalar_select %p511, %s510, 95
          %s513 = smul.addr %s512, 2
          %s514 = smul.addr %s513, 4
          %s515 = scalar_lea.vmem %s3, %s514
          %s516 = smul.u32 48, %s18
        $region76: #{transformer_forward.15} parent=19 // pred_fallthru
          _
      $region20: #{transformer_forward.15} parent=5 // pred_fallthru
        _
      %p517 = scmp.le.s32.totalorder 1, %s10
      %p518 = scmp.lt.s32.totalorder %s10, 3
      %p519 = pnand %p517, %p518
      %p520 = pneg %p519
      // Predicated region
      $region77: #{transformer_forward.15} parent=5 // pred_check
        _
      $region78: #{transformer_forward.15} parent=5 // pred_check_branch
        %522 = sbr.rel (%p519) target = $region80
      $region79: #{transformer_forward.15} parent=5 // pred_region
        %s523 = ssub.s32 %s10, 1
        %s524 = sand.u32 %s61, 1
        %s525 = sand.u32 %s61, 1
        %s526 = smul.addr %s525, 384
        %s527 = scalar_lea.vmem [#allocation4], %s526
        // Predicated region
        $region81: #{transformer_forward.15} parent=79 // pred_check
          %p528 = pneg %p74
        $region82: #{transformer_forward.15} parent=79 // pred_check_branch
          %530 = sbr.rel (%p528) target = $region84
        $region83: #{transformer_forward.15} parent=79 // pred_region
          _
        $region84: #{transformer_forward.15} parent=79 // pred_fallthru
          _
        %s531 = sand.u32 %s87, 1
        %s532 = sand.u32 %s87, 1
        %s533 = smul.addr %s532, 384
        %s534 = scalar_lea.vmem [#allocation5], %s533
        // Predicated region
        $region85: #{transformer_forward.15} parent=79 // pred_check
          %p535 = pneg %p100
        $region86: #{transformer_forward.15} parent=79 // pred_check_branch
          %537 = sbr.rel (%p535) target = $region88
        $region87: #{transformer_forward.15} parent=79 // pred_region
          _
        $region88: #{transformer_forward.15} parent=79 // pred_fallthru
          _
        %s538 = smul.u32 2, %s19
        %p539 = scmp.lt.s32.totalorder %s538, 1
        %s540 = scalar_select %p539, %s538, 1
        %s541 = smul.addr %s540, 2
        %s542 = smul.addr %s541, 4
        %s543 = scalar_lea.vmem %s0, %s542
        %p544 = pneg %p48
        %p545 = pneg %p45
        %s546 = sand.u32 %s61, 1
        %s547 = sand.u32 %s61, 1
        %s548 = smul.addr %s547, 384
        %s549 = scalar_lea.vmem [#allocation4], %s548
        %p550 = pneg %p74
        %p551 = pneg %p71
        %s552 = sand.u32 %s87, 1
        %s553 = sand.u32 %s87, 1
        %s554 = smul.addr %s553, 384
        %s555 = scalar_lea.vmem [#allocation5], %s554
        %p556 = pneg %p100
        %p557 = pneg %p97
        %s558 = smul.u32 48, %s20
        %p559 = scmp.lt.s32.totalorder %s558, 95
        %s560 = scalar_select %p559, %s558, 95
        %s561 = smul.addr %s560, 2
        %s562 = smul.addr %s561, 4
        %s563 = scalar_lea.vmem %s3, %s562
        %p564 = pneg %p126
        %p565 = pneg %p123
        %p566 = pneg %p152
        %p567 = pneg %p149
        %s568 = smul.u32 2, %s19
        %p569 = scmp.lt.s32.totalorder %s568, 1
        %s570 = scalar_select %p569, %s568, 1
        %s571 = smul.addr %s570, 2
        %s572 = smul.addr %s571, 4
        %s573 = scalar_lea.vmem %s4, %s572
        %s574 = smul.u32 2, %s19
        %p575 = scmp.lt.s32.totalorder %s574, 1
        %s576 = scalar_select %p575, %s574, 1
        %s577 = smul.addr %s576, 2
        %s578 = smul.addr %s577, 4
        %s579 = scalar_lea.vmem %s0, %s578
        %s580 = smul.u32 2, %s19
        %s581 = smul.u32 3, %s20
        %s582 = smul.u32 3, %s20
        %s583 = smul.u32 48, %s20
        %p584 = scmp.lt.s32.totalorder %s583, 95
        %s585 = scalar_select %p584, %s583, 95
        %s586 = smul.addr %s585, 2
        %s587 = smul.addr %s586, 4
        %s588 = scalar_lea.vmem %s3, %s587
        %s589 = smul.u32 48, %s20
        %s590 = smul.u32 2, %s19
        %p591 = scmp.lt.s32.totalorder %s590, 1
        %s592 = scalar_select %p591, %s590, 1
        %s593 = smul.addr %s592, 2
        %s594 = smul.addr %s593, 4
        %s595 = scalar_lea.vmem %s4, %s594
        %s596 = smul.u32 2, %s19
        %p597 = scmp.eq.s32.totalorder %s20, 0
        // Predicated region
        $region89: #{transformer_forward.15} parent=79 // pred_check
          %p598 = pneg %p597
        $region90: #{transformer_forward.15} parent=79 // pred_check_branch
          %600 = sbr.rel (%p598) target = $region92
        $region91: #{transformer_forward.15} parent=79 // pred_region
          %v601 = vld [vmem:[%s579] sm:$0xff]
          %v602 = vld [vmem:[%s579 + $0x8] sm:$0xff]
          %v603 = vunpack.c.l.bf16 %v601
          %v604 = vunpack.c.h.bf16 %v601
          %v605 = vunpack.c.l.bf16 %v602
          %v606 = vunpack.c.h.bf16 %v602
          %v607 = vmul.f32 %v603, %v603
          %v608 = vmul.f32 %v604, %v604
          %v609 = vmul.f32 %v605, %v605
          %v610 = vmul.f32 %v606, %v606
          %v611 = vadd.f32 %v607, %v608
          %612 = vadd.xlane.f32.xlu0 %v611
          %v613 = vpop.xlane.xlu0 %612
          %v614 = vadd.f32 %v609, %v610
          %615 = vadd.xlane.f32.xlu0 %v614
          %v616 = vpop.xlane.xlu0 %615
          %v617 = vrcp.pop 256.0
          %v618 = vmul.f32 256.0, %v617
          %v619 = vsub.f32 1.0, %v618
          %v620 = vmul.f32 %v617, %v619
          %v621 = vadd.f32 %v617, %v620
          %vm622 = vweird.f32 %v617
          %v623 = vsel %vm622, %v617, %v621
          %v624 = vmul.f32 %v613, %v623
          %v625 = vmul.f32 %v616, %v623
          %v626 = vrsqrt.pop %v624
          %v627 = vmul.f32 %v626, %v624
          %v628 = vmul.f32 %v627, %v626
          %v629 = vmul.f32 0.5, %v628
          %v630 = vsub.f32 1.5, %v629
          %v631 = vmul.f32 %v626, %v630
          %v632 = vmul.f32 %v624, %v631
          %vm633 = vcmp.eq.f32.partialorder %v624, inf
          %v634 = vsel %vm633, %v624, %v632
          %vm635 = vcmp.eq.f32.partialorder %v624, 0.0
          %v636 = vand.u32 %v624, 2147483648
          %v637 = vsel %vm635, %v636, %v634
          %v638 = vrsqrt.pop %v625
          %v639 = vmul.f32 %v638, %v625
          %v640 = vmul.f32 %v639, %v638
          %v641 = vmul.f32 0.5, %v640
          %v642 = vsub.f32 1.5, %v641
          %v643 = vmul.f32 %v638, %v642
          %v644 = vmul.f32 %v625, %v643
          %vm645 = vcmp.eq.f32.partialorder %v625, inf
          %v646 = vsel %vm645, %v625, %v644
          %vm647 = vcmp.eq.f32.partialorder %v625, 0.0
          %v648 = vand.u32 %v625, 2147483648
          %v649 = vsel %vm647, %v648, %v646
          %v650 = vadd.f32 %v637, 1e-05
          %v651 = vadd.f32 %v649, 1e-05
          %v652 = vrcp.pop %v650
          %v653 = vmul.f32 %v650, %v652
          %v654 = vsub.f32 1.0, %v653
          %v655 = vmul.f32 %v652, %v654
          %v656 = vadd.f32 %v652, %v655
          %vm657 = vweird.f32 %v650
          %vm658 = vweird.f32 %v652
          %vm659 = vmor %vm657, %vm658
          %v660 = vsel %vm659, %v652, %v656
          %v661 = vand.u32 2147483647, %v650
          %vm662 = vcmp.eq.f32.partialorder %v661, 8.507059e+37
          %v663 = vand.u32 %v650, 2147483648
          %v664 = vor.u32 1.1754944e-38, %v663
          %v665 = vsel %vm662, %v664, %v660
          %v666 = vmul.f32 %v603, %v665
          %v667 = vmul.f32 %v604, %v665
          %v668 = vrcp.pop %v651
          %v669 = vmul.f32 %v651, %v668
          %v670 = vsub.f32 1.0, %v669
          %v671 = vmul.f32 %v668, %v670
          %v672 = vadd.f32 %v668, %v671
          %vm673 = vweird.f32 %v651
          %vm674 = vweird.f32 %v668
          %vm675 = vmor %vm673, %vm674
          %v676 = vsel %vm675, %v668, %v672
          %v677 = vand.u32 2147483647, %v651
          %vm678 = vcmp.eq.f32.partialorder %v677, 8.507059e+37
          %v679 = vand.u32 %v651, 2147483648
          %v680 = vor.u32 1.1754944e-38, %v679
          %v681 = vsel %vm678, %v680, %v676
          %v682 = vmul.f32 %v605, %v681
          %v683 = vmul.f32 %v606, %v681
          %v684 = vpack.c.bf16 %v667, %v666
          %v685 = vpack.c.bf16 %v683, %v682
          %686 = vst [vmem:[#allocation3] sm:$0xff] %v684
          %687 = vst [vmem:[#allocation3 + $0x8] sm:$0xff] %v685
          %688 = vst [vmem:[#allocation2] sm:$0xff] 0.0
          %689 = vst [vmem:[#allocation2 + $0x8] sm:$0xff] 0.0
          %690 = vst [vmem:[#allocation2 + $0x10] sm:$0xff] 0.0
          %691 = vst [vmem:[#allocation2 + $0x18] sm:$0xff] 0.0
        $region92: #{transformer_forward.15} parent=79 // pred_fallthru
          _
        %v692 = vld [vmem:[#allocation3] sm:$0xff]
        %v693 = vld [vmem:[#allocation3 + $0x8] sm:$0xff]
        %v694 = vld [vmem:[%s527] sm:$0xff]
        %v695 = vld [vmem:[%s527 + $0x8] sm:$0xf]
        %v696 = vld [vmem:[%s527 + $0xc] sm:$0xff]
        %v697 = vld [vmem:[%s527 + $0x14] sm:$0xf]
        %v698 = vld [vmem:[%s527 + $0x18] sm:$0xff]
        %v699 = vld [vmem:[%s527 + $0x20] sm:$0xf]
        %v700 = vld [vmem:[%s527 + $0x24] sm:$0xff]
        %v701 = vld [vmem:[%s527 + $0x2c] sm:$0xf]
        %v702 = vld [vmem:[%s527 + $0x30] sm:$0xff]
        %v703 = vld [vmem:[%s527 + $0x38] sm:$0xf]
        %v704 = vld [vmem:[%s527 + $0x3c] sm:$0xff]
        %v705 = vld [vmem:[%s527 + $0x44] sm:$0xf]
        %v706 = vld [vmem:[%s527 + $0x48] sm:$0xff]
        %v707 = vld [vmem:[%s527 + $0x50] sm:$0xf]
        %v708 = vld [vmem:[%s527 + $0x54] sm:$0xff]
        %v709 = vld [vmem:[%s527 + $0x5c] sm:$0xf]
        %v710 = vld [vmem:[%s527 + $0x60] sm:$0xff]
        %v711 = vld [vmem:[%s527 + $0x68] sm:$0xf]
        %v712 = vld [vmem:[%s527 + $0x6c] sm:$0xff]
        %v713 = vld [vmem:[%s527 + $0x74] sm:$0xf]
        %v714 = vld [vmem:[%s527 + $0x78] sm:$0xff]
        %v715 = vld [vmem:[%s527 + $0x80] sm:$0xf]
        %v716 = vld [vmem:[%s527 + $0x84] sm:$0xff]
        %v717 = vld [vmem:[%s527 + $0x8c] sm:$0xf]
        %v718 = vld [vmem:[%s527 + $0x90] sm:$0xff]
        %v719 = vld [vmem:[%s527 + $0x98] sm:$0xf]
        %v720 = vld [vmem:[%s527 + $0x9c] sm:$0xff]
        %v721 = vld [vmem:[%s527 + $0xa4] sm:$0xf]
        %v722 = vld [vmem:[%s527 + $0xa8] sm:$0xff]
        %v723 = vld [vmem:[%s527 + $0xb0] sm:$0xf]
        %v724 = vld [vmem:[%s527 + $0xb4] sm:$0xff]
        %v725 = vld [vmem:[%s527 + $0xbc] sm:$0xf]
        %v726 = vld [vmem:[%s527 + $0xc0] sm:$0xff]
        %v727 = vld [vmem:[%s527 + $0xc8] sm:$0xf]
        %v728 = vld [vmem:[%s527 + $0xcc] sm:$0xff]
        %v729 = vld [vmem:[%s527 + $0xd4] sm:$0xf]
        %v730 = vld [vmem:[%s527 + $0xd8] sm:$0xff]
        %v731 = vld [vmem:[%s527 + $0xe0] sm:$0xf]
        %v732 = vld [vmem:[%s527 + $0xe4] sm:$0xff]
        %v733 = vld [vmem:[%s527 + $0xec] sm:$0xf]
        %v734 = vld [vmem:[%s527 + $0xf0] sm:$0xff]
        %v735 = vld [vmem:[%s527 + $0xf8] sm:$0xf]
        %v736 = vld [vmem:[%s527 + $0xfc] sm:$0xff]
        %v737 = vld [vmem:[%s527 + $0x104] sm:$0xf]
        %v738 = vld [vmem:[%s527 + $0x108] sm:$0xff]
        %v739 = vld [vmem:[%s527 + $0x110] sm:$0xf]
        %v740 = vld [vmem:[%s527 + $0x114] sm:$0xff]
        %v741 = vld [vmem:[%s527 + $0x11c] sm:$0xf]
        %v742 = vld [vmem:[%s527 + $0x120] sm:$0xff]
        %v743 = vld [vmem:[%s527 + $0x128] sm:$0xf]
        %v744 = vld [vmem:[%s527 + $0x12c] sm:$0xff]
        %v745 = vld [vmem:[%s527 + $0x134] sm:$0xf]
        %v746 = vld [vmem:[%s527 + $0x138] sm:$0xff]
        %v747 = vld [vmem:[%s527 + $0x140] sm:$0xf]
        %v748 = vld [vmem:[%s527 + $0x144] sm:$0xff]
        %v749 = vld [vmem:[%s527 + $0x14c] sm:$0xf]
        %v750 = vld [vmem:[%s527 + $0x150] sm:$0xff]
        %v751 = vld [vmem:[%s527 + $0x158] sm:$0xf]
        %v752 = vld [vmem:[%s527 + $0x15c] sm:$0xff]
        %v753 = vld [vmem:[%s527 + $0x164] sm:$0xf]
        %v754 = vld [vmem:[%s527 + $0x168] sm:$0xff]
        %v755 = vld [vmem:[%s527 + $0x170] sm:$0xf]
        %v756 = vld [vmem:[%s527 + $0x174] sm:$0xff]
        %v757 = vld [vmem:[%s527 + $0x17c] sm:$0xf]
        %v760 = vunpack.c.l.b16 %v692
        %v761 = vunpack.c.h.b16 %v692
        %v762 = vunpack.c.l.b16 %v693
        %v763 = vunpack.c.h.b16 %v693
        %v764 = vpack.c.b16 %v762, %v760
        %v765 = vpack.c.b16 %v763, %v761
        %v832 = vunpack.c.l.b16 %v694
        %v833 = vunpack.c.h.b16 %v694
        %v834 = vunpack.c.l.b16 %v695
        %v835 = vunpack.c.l.b16 %v696
        %v836 = vunpack.c.h.b16 %v696
        %v837 = vunpack.c.l.b16 %v697
        %v838 = vunpack.c.l.b16 %v698
        %v839 = vunpack.c.h.b16 %v698
        %v840 = vunpack.c.l.b16 %v699
        %v841 = vunpack.c.l.b16 %v700
        %v842 = vunpack.c.h.b16 %v700
        %v843 = vunpack.c.l.b16 %v701
        %v844 = vunpack.c.l.b16 %v702
        %v845 = vunpack.c.h.b16 %v702
        %v846 = vunpack.c.l.b16 %v703
        %v847 = vunpack.c.l.b16 %v704
        %v848 = vunpack.c.h.b16 %v704
        %v849 = vunpack.c.l.b16 %v705
        %v850 = vunpack.c.l.b16 %v706
        %v851 = vunpack.c.h.b16 %v706
        %v852 = vunpack.c.l.b16 %v707
        %v853 = vunpack.c.l.b16 %v708
        %v854 = vunpack.c.h.b16 %v708
        %v855 = vunpack.c.l.b16 %v709
        %v856 = vunpack.c.l.b16 %v710
        %v857 = vunpack.c.h.b16 %v710
        %v858 = vunpack.c.l.b16 %v711
        %v859 = vunpack.c.l.b16 %v712
        %v860 = vunpack.c.h.b16 %v712
        %v861 = vunpack.c.l.b16 %v713
        %v862 = vunpack.c.l.b16 %v714
        %v863 = vunpack.c.h.b16 %v714
        %v864 = vunpack.c.l.b16 %v715
        %v865 = vunpack.c.l.b16 %v716
        %v866 = vunpack.c.h.b16 %v716
        %v867 = vunpack.c.l.b16 %v717
        %v868 = vunpack.c.l.b16 %v718
        %v869 = vunpack.c.h.b16 %v718
        %v870 = vunpack.c.l.b16 %v719
        %v871 = vunpack.c.l.b16 %v720
        %v872 = vunpack.c.h.b16 %v720
        %v873 = vunpack.c.l.b16 %v721
        %v874 = vunpack.c.l.b16 %v722
        %v875 = vunpack.c.h.b16 %v722
        %v876 = vunpack.c.l.b16 %v723
        %v877 = vunpack.c.l.b16 %v724
        %v878 = vunpack.c.h.b16 %v724
        %v879 = vunpack.c.l.b16 %v725
        %v880 = vunpack.c.l.b16 %v726
        %v881 = vunpack.c.h.b16 %v726
        %v882 = vunpack.c.l.b16 %v727
        %v883 = vunpack.c.l.b16 %v728
        %v884 = vunpack.c.h.b16 %v728
        %v885 = vunpack.c.l.b16 %v729
        %v886 = vunpack.c.l.b16 %v730
        %v887 = vunpack.c.h.b16 %v730
        %v888 = vunpack.c.l.b16 %v731
        %v889 = vunpack.c.l.b16 %v732
        %v890 = vunpack.c.h.b16 %v732
        %v891 = vunpack.c.l.b16 %v733
        %v892 = vunpack.c.l.b16 %v734
        %v893 = vunpack.c.h.b16 %v734
        %v894 = vunpack.c.l.b16 %v735
        %v895 = vunpack.c.l.b16 %v736
        %v896 = vunpack.c.h.b16 %v736
        %v897 = vunpack.c.l.b16 %v737
        %v898 = vunpack.c.l.b16 %v738
        %v899 = vunpack.c.h.b16 %v738
        %v900 = vunpack.c.l.b16 %v739
        %v901 = vunpack.c.l.b16 %v740
        %v902 = vunpack.c.h.b16 %v740
        %v903 = vunpack.c.l.b16 %v741
        %v904 = vunpack.c.l.b16 %v742
        %v905 = vunpack.c.h.b16 %v742
        %v906 = vunpack.c.l.b16 %v743
        %v907 = vunpack.c.l.b16 %v744
        %v908 = vunpack.c.h.b16 %v744
        %v909 = vunpack.c.l.b16 %v745
        %v910 = vunpack.c.l.b16 %v746
        %v911 = vunpack.c.h.b16 %v746
        %v912 = vunpack.c.l.b16 %v747
        %v913 = vunpack.c.l.b16 %v748
        %v914 = vunpack.c.h.b16 %v748
        %v915 = vunpack.c.l.b16 %v749
        %v916 = vunpack.c.l.b16 %v750
        %v917 = vunpack.c.h.b16 %v750
        %v918 = vunpack.c.l.b16 %v751
        %v919 = vunpack.c.l.b16 %v752
        %v920 = vunpack.c.h.b16 %v752
        %v921 = vunpack.c.l.b16 %v753
        %v922 = vunpack.c.l.b16 %v754
        %v923 = vunpack.c.h.b16 %v754
        %v924 = vunpack.c.l.b16 %v755
        %v925 = vunpack.c.l.b16 %v756
        %v926 = vunpack.c.h.b16 %v756
        %v927 = vunpack.c.l.b16 %v757
        %v928 = vpack.c.b16 %v835, %v832
        %v929 = vpack.c.b16 %v836, %v833
        %v930 = vpack.c.b16 %v837, %v834
        %v931 = vpack.c.b16 %v841, %v838
        %v932 = vpack.c.b16 %v842, %v839
        %v933 = vpack.c.b16 %v843, %v840
        %v934 = vpack.c.b16 %v847, %v844
        %v935 = vpack.c.b16 %v848, %v845
        %v936 = vpack.c.b16 %v849, %v846
        %v937 = vpack.c.b16 %v853, %v850
        %v938 = vpack.c.b16 %v854, %v851
        %v939 = vpack.c.b16 %v855, %v852
        %v940 = vpack.c.b16 %v859, %v856
        %v941 = vpack.c.b16 %v860, %v857
        %v942 = vpack.c.b16 %v861, %v858
        %v943 = vpack.c.b16 %v865, %v862
        %v944 = vpack.c.b16 %v866, %v863
        %v945 = vpack.c.b16 %v867, %v864
        %v946 = vpack.c.b16 %v871, %v868
        %v947 = vpack.c.b16 %v872, %v869
        %v948 = vpack.c.b16 %v873, %v870
        %v949 = vpack.c.b16 %v877, %v874
        %v950 = vpack.c.b16 %v878, %v875
        %v951 = vpack.c.b16 %v879, %v876
        %v952 = vpack.c.b16 %v883, %v880
        %v953 = vpack.c.b16 %v884, %v881
        %v954 = vpack.c.b16 %v885, %v882
        %v955 = vpack.c.b16 %v889, %v886
        %v956 = vpack.c.b16 %v890, %v887
        %v957 = vpack.c.b16 %v891, %v888
        %v958 = vpack.c.b16 %v895, %v892
        %v959 = vpack.c.b16 %v896, %v893
        %v960 = vpack.c.b16 %v897, %v894
        %v961 = vpack.c.b16 %v901, %v898
        %v962 = vpack.c.b16 %v902, %v899
        %v963 = vpack.c.b16 %v903, %v900
        %v964 = vpack.c.b16 %v907, %v904
        %v965 = vpack.c.b16 %v908, %v905
        %v966 = vpack.c.b16 %v909, %v906
        %v967 = vpack.c.b16 %v913, %v910
        %v968 = vpack.c.b16 %v914, %v911
        %v969 = vpack.c.b16 %v915, %v912
        %v970 = vpack.c.b16 %v919, %v916
        %v971 = vpack.c.b16 %v920, %v917
        %v972 = vpack.c.b16 %v921, %v918
        %v973 = vpack.c.b16 %v925, %v922
        %v974 = vpack.c.b16 %v926, %v923
        %v975 = vpack.c.b16 %v927, %v924
        %1024 = vmatpush.bf16.msra.mxu0 %v949
        %1025 = vmatpush.bf16.msra.mxu0 %v946
        %1026 = vmatpush.bf16.msra.mxu0 %v943
        %1027 = vmatpush.bf16.msra.mxu0 %v940
        %1028 = vmatpush.bf16.msra.mxu0 %v937
        %1029 = vmatpush.bf16.msra.mxu0 %v934
        %1030 = vmatpush.bf16.msra.mxu0 %v931
        %1031 = vmatpush.bf16.msra.mxu0 %v928
        %1032 = vmatmul.bf16.gmra.mxu0 %v764
        %v1033 = vpop.f32.mrf.mxu0
        %v1034 = vadd.f32 0.0, %v1033
        %v1035 = vpop.f32.mrf.mxu0
        %v1036 = vadd.f32 0.0, %v1035
        %1037 = vdwg.mxu0
        %1038 = vmatpush.bf16.msra.mxu0 %v973
        %1039 = vmatpush.bf16.msra.mxu0 %v970
        %1040 = vmatpush.bf16.msra.mxu0 %v967
        %1041 = vmatpush.bf16.msra.mxu0 %v964
        %1042 = vmatpush.bf16.msra.mxu0 %v961
        %1043 = vmatpush.bf16.msra.mxu0 %v958
        %1044 = vmatpush.bf16.msra.mxu0 %v955
        %1045 = vmatpush.bf16.msra.mxu0 %v952
        %1046 = vmatmul.bf16.gmra.mxu0 %v765
        %v1047 = vpop.f32.mrf.mxu0
        %v1048 = vadd.f32 %v1034, %v1047
        %v1049 = vpop.f32.mrf.mxu0
        %v1050 = vadd.f32 %v1036, %v1049
        %1051 = vdwg.mxu0
        %1052 = vmatpush.bf16.msra.mxu0 %v950
        %1053 = vmatpush.bf16.msra.mxu0 %v947
        %1054 = vmatpush.bf16.msra.mxu0 %v944
        %1055 = vmatpush.bf16.msra.mxu0 %v941
        %1056 = vmatpush.bf16.msra.mxu0 %v938
        %1057 = vmatpush.bf16.msra.mxu0 %v935
        %1058 = vmatpush.bf16.msra.mxu0 %v932
        %1059 = vmatpush.bf16.msra.mxu0 %v929
        %1060 = vmatmul.bf16.gmra.mxu0 %v764
        %v1061 = vpop.f32.mrf.mxu0
        %v1062 = vadd.f32 0.0, %v1061
        %v1063 = vpop.f32.mrf.mxu0
        %v1064 = vadd.f32 0.0, %v1063
        %1065 = vdwg.mxu0
        %1066 = vmatpush.bf16.msra.mxu0 %v974
        %1067 = vmatpush.bf16.msra.mxu0 %v971
        %1068 = vmatpush.bf16.msra.mxu0 %v968
        %1069 = vmatpush.bf16.msra.mxu0 %v965
        %1070 = vmatpush.bf16.msra.mxu0 %v962
        %1071 = vmatpush.bf16.msra.mxu0 %v959
        %1072 = vmatpush.bf16.msra.mxu0 %v956
        %1073 = vmatpush.bf16.msra.mxu0 %v953
        %1074 = vmatmul.bf16.gmra.mxu0 %v765
        %v1075 = vpop.f32.mrf.mxu0
        %v1076 = vadd.f32 %v1062, %v1075
        %v1077 = vpop.f32.mrf.mxu0
        %v1078 = vadd.f32 %v1064, %v1077
        %1079 = vdwg.mxu0
        %1080 = vmatpush.bf16.msra.mxu0 %v951
        %1081 = vmatpush.bf16.msra.mxu0 %v948
        %1082 = vmatpush.bf16.msra.mxu0 %v945
        %1083 = vmatpush.bf16.msra.mxu0 %v942
        %1084 = vmatpush.bf16.msra.mxu0 %v939
        %1085 = vmatpush.bf16.msra.mxu0 %v936
        %1086 = vmatpush.bf16.msra.mxu0 %v933
        %1087 = vmatpush.bf16.msra.mxu0 %v930
        %1088 = vmatmul.bf16.gmra.mxu0 %v764
        %v1089 = vpop.f32.mrf.mxu0
        %v1090 = vadd.f32 0.0, %v1089
        %v1091 = vpop.f32.mrf.mxu0
        %v1092 = vadd.f32 0.0, %v1091
        %1093 = vdwg.mxu0
        %1094 = vmatpush.bf16.msra.mxu0 %v975
        %1095 = vmatpush.bf16.msra.mxu0 %v972
        %1096 = vmatpush.bf16.msra.mxu0 %v969
        %1097 = vmatpush.bf16.msra.mxu0 %v966
        %1098 = vmatpush.bf16.msra.mxu0 %v963
        %1099 = vmatpush.bf16.msra.mxu0 %v960
        %1100 = vmatpush.bf16.msra.mxu0 %v957
        %1101 = vmatpush.bf16.msra.mxu0 %v954
        %1102 = vmatmul.bf16.gmra.mxu0 %v765
        %v1103 = vpop.f32.mrf.mxu0
        %v1104 = vadd.f32 %v1090, %v1103
        %v1105 = vpop.f32.mrf.mxu0
        %v1106 = vadd.f32 %v1092, %v1105
        %1107 = vdwg.mxu0
        %v1108 = vld [vmem:[%s534] sm:$0xff]
        %v1109 = vld [vmem:[%s534 + $0x8] sm:$0xf]
        %v1110 = vld [vmem:[%s534 + $0xc] sm:$0xff]
        %v1111 = vld [vmem:[%s534 + $0x14] sm:$0xf]
        %v1112 = vld [vmem:[%s534 + $0x18] sm:$0xff]
        %v1113 = vld [vmem:[%s534 + $0x20] sm:$0xf]
        %v1114 = vld [vmem:[%s534 + $0x24] sm:$0xff]
        %v1115 = vld [vmem:[%s534 + $0x2c] sm:$0xf]
        %v1116 = vld [vmem:[%s534 + $0x30] sm:$0xff]
        %v1117 = vld [vmem:[%s534 + $0x38] sm:$0xf]
        %v1118 = vld [vmem:[%s534 + $0x3c] sm:$0xff]
        %v1119 = vld [vmem:[%s534 + $0x44] sm:$0xf]
        %v1120 = vld [vmem:[%s534 + $0x48] sm:$0xff]
        %v1121 = vld [vmem:[%s534 + $0x50] sm:$0xf]
        %v1122 = vld [vmem:[%s534 + $0x54] sm:$0xff]
        %v1123 = vld [vmem:[%s534 + $0x5c] sm:$0xf]
        %v1124 = vld [vmem:[%s534 + $0x60] sm:$0xff]
        %v1125 = vld [vmem:[%s534 + $0x68] sm:$0xf]
        %v1126 = vld [vmem:[%s534 + $0x6c] sm:$0xff]
        %v1127 = vld [vmem:[%s534 + $0x74] sm:$0xf]
        %v1128 = vld [vmem:[%s534 + $0x78] sm:$0xff]
        %v1129 = vld [vmem:[%s534 + $0x80] sm:$0xf]
        %v1130 = vld [vmem:[%s534 + $0x84] sm:$0xff]
        %v1131 = vld [vmem:[%s534 + $0x8c] sm:$0xf]
        %v1132 = vld [vmem:[%s534 + $0x90] sm:$0xff]
        %v1133 = vld [vmem:[%s534 + $0x98] sm:$0xf]
        %v1134 = vld [vmem:[%s534 + $0x9c] sm:$0xff]
        %v1135 = vld [vmem:[%s534 + $0xa4] sm:$0xf]
        %v1136 = vld [vmem:[%s534 + $0xa8] sm:$0xff]
        %v1137 = vld [vmem:[%s534 + $0xb0] sm:$0xf]
        %v1138 = vld [vmem:[%s534 + $0xb4] sm:$0xff]
        %v1139 = vld [vmem:[%s534 + $0xbc] sm:$0xf]
        %v1140 = vld [vmem:[%s534 + $0xc0] sm:$0xff]
        %v1141 = vld [vmem:[%s534 + $0xc8] sm:$0xf]
        %v1142 = vld [vmem:[%s534 + $0xcc] sm:$0xff]
        %v1143 = vld [vmem:[%s534 + $0xd4] sm:$0xf]
        %v1144 = vld [vmem:[%s534 + $0xd8] sm:$0xff]
        %v1145 = vld [vmem:[%s534 + $0xe0] sm:$0xf]
        %v1146 = vld [vmem:[%s534 + $0xe4] sm:$0xff]
        %v1147 = vld [vmem:[%s534 + $0xec] sm:$0xf]
        %v1148 = vld [vmem:[%s534 + $0xf0] sm:$0xff]
        %v1149 = vld [vmem:[%s534 + $0xf8] sm:$0xf]
        %v1150 = vld [vmem:[%s534 + $0xfc] sm:$0xff]
        %v1151 = vld [vmem:[%s534 + $0x104] sm:$0xf]
        %v1152 = vld [vmem:[%s534 + $0x108] sm:$0xff]
        %v1153 = vld [vmem:[%s534 + $0x110] sm:$0xf]
        %v1154 = vld [vmem:[%s534 + $0x114] sm:$0xff]
        %v1155 = vld [vmem:[%s534 + $0x11c] sm:$0xf]
        %v1156 = vld [vmem:[%s534 + $0x120] sm:$0xff]
        %v1157 = vld [vmem:[%s534 + $0x128] sm:$0xf]
        %v1158 = vld [vmem:[%s534 + $0x12c] sm:$0xff]
        %v1159 = vld [vmem:[%s534 + $0x134] sm:$0xf]
        %v1160 = vld [vmem:[%s534 + $0x138] sm:$0xff]
        %v1161 = vld [vmem:[%s534 + $0x140] sm:$0xf]
        %v1162 = vld [vmem:[%s534 + $0x144] sm:$0xff]
        %v1163 = vld [vmem:[%s534 + $0x14c] sm:$0xf]
        %v1164 = vld [vmem:[%s534 + $0x150] sm:$0xff]
        %v1165 = vld [vmem:[%s534 + $0x158] sm:$0xf]
        %v1166 = vld [vmem:[%s534 + $0x15c] sm:$0xff]
        %v1167 = vld [vmem:[%s534 + $0x164] sm:$0xf]
        %v1168 = vld [vmem:[%s534 + $0x168] sm:$0xff]
        %v1169 = vld [vmem:[%s534 + $0x170] sm:$0xf]
        %v1170 = vld [vmem:[%s534 + $0x174] sm:$0xff]
        %v1171 = vld [vmem:[%s534 + $0x17c] sm:$0xf]
        %v1236 = vunpack.c.l.b16 %v1108
        %v1237 = vunpack.c.h.b16 %v1108
        %v1238 = vunpack.c.l.b16 %v1109
        %v1239 = vunpack.c.l.b16 %v1110
        %v1240 = vunpack.c.h.b16 %v1110
        %v1241 = vunpack.c.l.b16 %v1111
        %v1242 = vunpack.c.l.b16 %v1112
        %v1243 = vunpack.c.h.b16 %v1112
        %v1244 = vunpack.c.l.b16 %v1113
        %v1245 = vunpack.c.l.b16 %v1114
        %v1246 = vunpack.c.h.b16 %v1114
        %v1247 = vunpack.c.l.b16 %v1115
        %v1248 = vunpack.c.l.b16 %v1116
        %v1249 = vunpack.c.h.b16 %v1116
        %v1250 = vunpack.c.l.b16 %v1117
        %v1251 = vunpack.c.l.b16 %v1118
        %v1252 = vunpack.c.h.b16 %v1118
        %v1253 = vunpack.c.l.b16 %v1119
        %v1254 = vunpack.c.l.b16 %v1120
        %v1255 = vunpack.c.h.b16 %v1120
        %v1256 = vunpack.c.l.b16 %v1121
        %v1257 = vunpack.c.l.b16 %v1122
        %v1258 = vunpack.c.h.b16 %v1122
        %v1259 = vunpack.c.l.b16 %v1123
        %v1260 = vunpack.c.l.b16 %v1124
        %v1261 = vunpack.c.h.b16 %v1124
        %v1262 = vunpack.c.l.b16 %v1125
        %v1263 = vunpack.c.l.b16 %v1126
        %v1264 = vunpack.c.h.b16 %v1126
        %v1265 = vunpack.c.l.b16 %v1127
        %v1266 = vunpack.c.l.b16 %v1128
        %v1267 = vunpack.c.h.b16 %v1128
        %v1268 = vunpack.c.l.b16 %v1129
        %v1269 = vunpack.c.l.b16 %v1130
        %v1270 = vunpack.c.h.b16 %v1130
        %v1271 = vunpack.c.l.b16 %v1131
        %v1272 = vunpack.c.l.b16 %v1132
        %v1273 = vunpack.c.h.b16 %v1132
        %v1274 = vunpack.c.l.b16 %v1133
        %v1275 = vunpack.c.l.b16 %v1134
        %v1276 = vunpack.c.h.b16 %v1134
        %v1277 = vunpack.c.l.b16 %v1135
        %v1278 = vunpack.c.l.b16 %v1136
        %v1279 = vunpack.c.h.b16 %v1136
        %v1280 = vunpack.c.l.b16 %v1137
        %v1281 = vunpack.c.l.b16 %v1138
        %v1282 = vunpack.c.h.b16 %v1138
        %v1283 = vunpack.c.l.b16 %v1139
        %v1284 = vunpack.c.l.b16 %v1140
        %v1285 = vunpack.c.h.b16 %v1140
        %v1286 = vunpack.c.l.b16 %v1141
        %v1287 = vunpack.c.l.b16 %v1142
        %v1288 = vunpack.c.h.b16 %v1142
        %v1289 = vunpack.c.l.b16 %v1143
        %v1290 = vunpack.c.l.b16 %v1144
        %v1291 = vunpack.c.h.b16 %v1144
        %v1292 = vunpack.c.l.b16 %v1145
        %v1293 = vunpack.c.l.b16 %v1146
        %v1294 = vunpack.c.h.b16 %v1146
        %v1295 = vunpack.c.l.b16 %v1147
        %v1296 = vunpack.c.l.b16 %v1148
        %v1297 = vunpack.c.h.b16 %v1148
        %v1298 = vunpack.c.l.b16 %v1149
        %v1299 = vunpack.c.l.b16 %v1150
        %v1300 = vunpack.c.h.b16 %v1150
        %v1301 = vunpack.c.l.b16 %v1151
        %v1302 = vunpack.c.l.b16 %v1152
        %v1303 = vunpack.c.h.b16 %v1152
        %v1304 = vunpack.c.l.b16 %v1153
        %v1305 = vunpack.c.l.b16 %v1154
        %v1306 = vunpack.c.h.b16 %v1154
        %v1307 = vunpack.c.l.b16 %v1155
        %v1308 = vunpack.c.l.b16 %v1156
        %v1309 = vunpack.c.h.b16 %v1156
        %v1310 = vunpack.c.l.b16 %v1157
        %v1311 = vunpack.c.l.b16 %v1158
        %v1312 = vunpack.c.h.b16 %v1158
        %v1313 = vunpack.c.l.b16 %v1159
        %v1314 = vunpack.c.l.b16 %v1160
        %v1315 = vunpack.c.h.b16 %v1160
        %v1316 = vunpack.c.l.b16 %v1161
        %v1317 = vunpack.c.l.b16 %v1162
        %v1318 = vunpack.c.h.b16 %v1162
        %v1319 = vunpack.c.l.b16 %v1163
        %v1320 = vunpack.c.l.b16 %v1164
        %v1321 = vunpack.c.h.b16 %v1164
        %v1322 = vunpack.c.l.b16 %v1165
        %v1323 = vunpack.c.l.b16 %v1166
        %v1324 = vunpack.c.h.b16 %v1166
        %v1325 = vunpack.c.l.b16 %v1167
        %v1326 = vunpack.c.l.b16 %v1168
        %v1327 = vunpack.c.h.b16 %v1168
        %v1328 = vunpack.c.l.b16 %v1169
        %v1329 = vunpack.c.l.b16 %v1170
        %v1330 = vunpack.c.h.b16 %v1170
        %v1331 = vunpack.c.l.b16 %v1171
        %v1332 = vpack.c.b16 %v1239, %v1236
        %v1333 = vpack.c.b16 %v1240, %v1237
        %v1334 = vpack.c.b16 %v1241, %v1238
        %v1335 = vpack.c.b16 %v1245, %v1242
        %v1336 = vpack.c.b16 %v1246, %v1243
        %v1337 = vpack.c.b16 %v1247, %v1244
        %v1338 = vpack.c.b16 %v1251, %v1248
        %v1339 = vpack.c.b16 %v1252, %v1249
        %v1340 = vpack.c.b16 %v1253, %v1250
        %v1341 = vpack.c.b16 %v1257, %v1254
        %v1342 = vpack.c.b16 %v1258, %v1255
        %v1343 = vpack.c.b16 %v1259, %v1256
        %v1344 = vpack.c.b16 %v1263, %v1260
        %v1345 = vpack.c.b16 %v1264, %v1261
        %v1346 = vpack.c.b16 %v1265, %v1262
        %v1347 = vpack.c.b16 %v1269, %v1266
        %v1348 = vpack.c.b16 %v1270, %v1267
        %v1349 = vpack.c.b16 %v1271, %v1268
        %v1350 = vpack.c.b16 %v1275, %v1272
        %v1351 = vpack.c.b16 %v1276, %v1273
        %v1352 = vpack.c.b16 %v1277, %v1274
        %v1353 = vpack.c.b16 %v1281, %v1278
        %v1354 = vpack.c.b16 %v1282, %v1279
        %v1355 = vpack.c.b16 %v1283, %v1280
        %v1356 = vpack.c.b16 %v1287, %v1284
        %v1357 = vpack.c.b16 %v1288, %v1285
        %v1358 = vpack.c.b16 %v1289, %v1286
        %v1359 = vpack.c.b16 %v1293, %v1290
        %v1360 = vpack.c.b16 %v1294, %v1291
        %v1361 = vpack.c.b16 %v1295, %v1292
        %v1362 = vpack.c.b16 %v1299, %v1296
        %v1363 = vpack.c.b16 %v1300, %v1297
        %v1364 = vpack.c.b16 %v1301, %v1298
        %v1365 = vpack.c.b16 %v1305, %v1302
        %v1366 = vpack.c.b16 %v1306, %v1303
        %v1367 = vpack.c.b16 %v1307, %v1304
        %v1368 = vpack.c.b16 %v1311, %v1308
        %v1369 = vpack.c.b16 %v1312, %v1309
        %v1370 = vpack.c.b16 %v1313, %v1310
        %v1371 = vpack.c.b16 %v1317, %v1314
        %v1372 = vpack.c.b16 %v1318, %v1315
        %v1373 = vpack.c.b16 %v1319, %v1316
        %v1374 = vpack.c.b16 %v1323, %v1320
        %v1375 = vpack.c.b16 %v1324, %v1321
        %v1376 = vpack.c.b16 %v1325, %v1322
        %v1377 = vpack.c.b16 %v1329, %v1326
        %v1378 = vpack.c.b16 %v1330, %v1327
        %v1379 = vpack.c.b16 %v1331, %v1328
        %1428 = vmatpush.bf16.msra.mxu0 %v1353
        %1429 = vmatpush.bf16.msra.mxu0 %v1350
        %1430 = vmatpush.bf16.msra.mxu0 %v1347
        %1431 = vmatpush.bf16.msra.mxu0 %v1344
        %1432 = vmatpush.bf16.msra.mxu0 %v1341
        %1433 = vmatpush.bf16.msra.mxu0 %v1338
        %1434 = vmatpush.bf16.msra.mxu0 %v1335
        %1435 = vmatpush.bf16.msra.mxu0 %v1332
        %1436 = vmatmul.bf16.gmra.mxu0 %v764
        %v1437 = vpop.f32.mrf.mxu0
        %v1438 = vadd.f32 0.0, %v1437
        %v1439 = vpop.f32.mrf.mxu0
        %v1440 = vadd.f32 0.0, %v1439
        %1441 = vdwg.mxu0
        %1442 = vmatpush.bf16.msra.mxu0 %v1377
        %1443 = vmatpush.bf16.msra.mxu0 %v1374
        %1444 = vmatpush.bf16.msra.mxu0 %v1371
        %1445 = vmatpush.bf16.msra.mxu0 %v1368
        %1446 = vmatpush.bf16.msra.mxu0 %v1365
        %1447 = vmatpush.bf16.msra.mxu0 %v1362
        %1448 = vmatpush.bf16.msra.mxu0 %v1359
        %1449 = vmatpush.bf16.msra.mxu0 %v1356
        %1450 = vmatmul.bf16.gmra.mxu0 %v765
        %v1451 = vpop.f32.mrf.mxu0
        %v1452 = vadd.f32 %v1438, %v1451
        %v1453 = vpop.f32.mrf.mxu0
        %v1454 = vadd.f32 %v1440, %v1453
        %1455 = vdwg.mxu0
        %1456 = vmatpush.bf16.msra.mxu0 %v1354
        %1457 = vmatpush.bf16.msra.mxu0 %v1351
        %1458 = vmatpush.bf16.msra.mxu0 %v1348
        %1459 = vmatpush.bf16.msra.mxu0 %v1345
        %1460 = vmatpush.bf16.msra.mxu0 %v1342
        %1461 = vmatpush.bf16.msra.mxu0 %v1339
        %1462 = vmatpush.bf16.msra.mxu0 %v1336
        %1463 = vmatpush.bf16.msra.mxu0 %v1333
        %1464 = vmatmul.bf16.gmra.mxu0 %v764
        %v1465 = vpop.f32.mrf.mxu0
        %v1466 = vadd.f32 0.0, %v1465
        %v1467 = vpop.f32.mrf.mxu0
        %v1468 = vadd.f32 0.0, %v1467
        %1469 = vdwg.mxu0
        %1470 = vmatpush.bf16.msra.mxu0 %v1378
        %1471 = vmatpush.bf16.msra.mxu0 %v1375
        %1472 = vmatpush.bf16.msra.mxu0 %v1372
        %1473 = vmatpush.bf16.msra.mxu0 %v1369
        %1474 = vmatpush.bf16.msra.mxu0 %v1366
        %1475 = vmatpush.bf16.msra.mxu0 %v1363
        %1476 = vmatpush.bf16.msra.mxu0 %v1360
        %1477 = vmatpush.bf16.msra.mxu0 %v1357
        %1478 = vmatmul.bf16.gmra.mxu0 %v765
        %v1479 = vpop.f32.mrf.mxu0
        %v1480 = vadd.f32 %v1466, %v1479
        %v1481 = vpop.f32.mrf.mxu0
        %v1482 = vadd.f32 %v1468, %v1481
        %1483 = vdwg.mxu0
        %1484 = vmatpush.bf16.msra.mxu0 %v1355
        %1485 = vmatpush.bf16.msra.mxu0 %v1352
        %1486 = vmatpush.bf16.msra.mxu0 %v1349
        %1487 = vmatpush.bf16.msra.mxu0 %v1346
        %1488 = vmatpush.bf16.msra.mxu0 %v1343
        %1489 = vmatpush.bf16.msra.mxu0 %v1340
        %1490 = vmatpush.bf16.msra.mxu0 %v1337
        %1491 = vmatpush.bf16.msra.mxu0 %v1334
        %1492 = vmatmul.bf16.gmra.mxu0 %v764
        %v1493 = vpop.f32.mrf.mxu0
        %v1494 = vadd.f32 0.0, %v1493
        %v1495 = vpop.f32.mrf.mxu0
        %v1496 = vadd.f32 0.0, %v1495
        %1497 = vdwg.mxu0
        %1498 = vmatpush.bf16.msra.mxu0 %v1379
        %1499 = vmatpush.bf16.msra.mxu0 %v1376
        %1500 = vmatpush.bf16.msra.mxu0 %v1373
        %1501 = vmatpush.bf16.msra.mxu0 %v1370
        %1502 = vmatpush.bf16.msra.mxu0 %v1367
        %1503 = vmatpush.bf16.msra.mxu0 %v1364
        %1504 = vmatpush.bf16.msra.mxu0 %v1361
        %1505 = vmatpush.bf16.msra.mxu0 %v1358
        %1506 = vmatmul.bf16.gmra.mxu0 %v765
        %v1507 = vpop.f32.mrf.mxu0
        %v1508 = vadd.f32 %v1494, %v1507
        %v1509 = vpop.f32.mrf.mxu0
        %v1510 = vadd.f32 %v1496, %v1509
        %1511 = vdwg.mxu0
        %v1512 = vxor.u32 %v1048, 2147483648
        %v1513 = vxor.u32 %v1076, 2147483648
        %v1514 = vxor.u32 %v1104, 2147483648
        %v1515 = vxor.u32 %v1050, 2147483648
        %v1516 = vxor.u32 %v1078, 2147483648
        %v1517 = vxor.u32 %v1106, 2147483648
        %v1518 = vmul.f32 %v1512, 1.442695
        %v1519 = vpow.pop %v1518
        %v1520 = vmul.f32 %v1513, 1.442695
        %v1521 = vpow.pop %v1520
        %v1522 = vmul.f32 %v1514, 1.442695
        %v1523 = vpow.pop %v1522
        %v1524 = vmul.f32 %v1515, 1.442695
        %v1525 = vpow.pop %v1524
        %v1526 = vmul.f32 %v1516, 1.442695
        %v1527 = vpow.pop %v1526
        %v1528 = vmul.f32 %v1517, 1.442695
        %v1529 = vpow.pop %v1528
        %v1530 = vadd.f32 %v1519, 1.0
        %v1531 = vadd.f32 %v1521, 1.0
        %v1532 = vadd.f32 %v1523, 1.0
        %v1533 = vadd.f32 %v1525, 1.0
        %v1534 = vadd.f32 %v1527, 1.0
        %v1535 = vadd.f32 %v1529, 1.0
        %v1536 = vrcp.pop %v1530
        %v1537 = vmul.f32 %v1530, %v1536
        %v1538 = vsub.f32 1.0, %v1537
        %v1539 = vmul.f32 %v1536, %v1538
        %v1540 = vadd.f32 %v1536, %v1539
        %vm1541 = vweird.f32 %v1530
        %vm1542 = vweird.f32 %v1536
        %vm1543 = vmor %vm1541, %vm1542
        %v1544 = vsel %vm1543, %v1536, %v1540
        %v1545 = vand.u32 2147483647, %v1530
        %vm1546 = vcmp.eq.f32.partialorder %v1545, 8.507059e+37
        %v1547 = vand.u32 %v1530, 2147483648
        %v1548 = vor.u32 1.1754944e-38, %v1547
        %v1549 = vsel %vm1546, %v1548, %v1544
        %v1550 = vmul.f32 1.0, %v1549
        %v1551 = vrcp.pop %v1531
        %v1552 = vmul.f32 %v1531, %v1551
        %v1553 = vsub.f32 1.0, %v1552
        %v1554 = vmul.f32 %v1551, %v1553
        %v1555 = vadd.f32 %v1551, %v1554
        %vm1556 = vweird.f32 %v1531
        %vm1557 = vweird.f32 %v1551
        %vm1558 = vmor %vm1556, %vm1557
        %v1559 = vsel %vm1558, %v1551, %v1555
        %v1560 = vand.u32 2147483647, %v1531
        %vm1561 = vcmp.eq.f32.partialorder %v1560, 8.507059e+37
        %v1562 = vand.u32 %v1531, 2147483648
        %v1563 = vor.u32 1.1754944e-38, %v1562
        %v1564 = vsel %vm1561, %v1563, %v1559
        %v1565 = vmul.f32 1.0, %v1564
        %v1566 = vrcp.pop %v1532
        %v1567 = vmul.f32 %v1532, %v1566
        %v1568 = vsub.f32 1.0, %v1567
        %v1569 = vmul.f32 %v1566, %v1568
        %v1570 = vadd.f32 %v1566, %v1569
        %vm1571 = vweird.f32 %v1532
        %vm1572 = vweird.f32 %v1566
        %vm1573 = vmor %vm1571, %vm1572
        %v1574 = vsel %vm1573, %v1566, %v1570
        %v1575 = vand.u32 2147483647, %v1532
        %vm1576 = vcmp.eq.f32.partialorder %v1575, 8.507059e+37
        %v1577 = vand.u32 %v1532, 2147483648
        %v1578 = vor.u32 1.1754944e-38, %v1577
        %v1579 = vsel %vm1576, %v1578, %v1574
        %v1580 = vmul.f32 1.0, %v1579
        %v1581 = vrcp.pop %v1533
        %v1582 = vmul.f32 %v1533, %v1581
        %v1583 = vsub.f32 1.0, %v1582
        %v1584 = vmul.f32 %v1581, %v1583
        %v1585 = vadd.f32 %v1581, %v1584
        %vm1586 = vweird.f32 %v1533
        %vm1587 = vweird.f32 %v1581
        %vm1588 = vmor %vm1586, %vm1587
        %v1589 = vsel %vm1588, %v1581, %v1585
        %v1590 = vand.u32 2147483647, %v1533
        %vm1591 = vcmp.eq.f32.partialorder %v1590, 8.507059e+37
        %v1592 = vand.u32 %v1533, 2147483648
        %v1593 = vor.u32 1.1754944e-38, %v1592
        %v1594 = vsel %vm1591, %v1593, %v1589
        %v1595 = vmul.f32 1.0, %v1594
        %v1596 = vrcp.pop %v1534
        %v1597 = vmul.f32 %v1534, %v1596
        %v1598 = vsub.f32 1.0, %v1597
        %v1599 = vmul.f32 %v1596, %v1598
        %v1600 = vadd.f32 %v1596, %v1599
        %vm1601 = vweird.f32 %v1534
        %vm1602 = vweird.f32 %v1596
        %vm1603 = vmor %vm1601, %vm1602
        %v1604 = vsel %vm1603, %v1596, %v1600
        %v1605 = vand.u32 2147483647, %v1534
        %vm1606 = vcmp.eq.f32.partialorder %v1605, 8.507059e+37
        %v1607 = vand.u32 %v1534, 2147483648
        %v1608 = vor.u32 1.1754944e-38, %v1607
        %v1609 = vsel %vm1606, %v1608, %v1604
        %v1610 = vmul.f32 1.0, %v1609
        %v1611 = vrcp.pop %v1535
        %v1612 = vmul.f32 %v1535, %v1611
        %v1613 = vsub.f32 1.0, %v1612
        %v1614 = vmul.f32 %v1611, %v1613
        %v1615 = vadd.f32 %v1611, %v1614
        %vm1616 = vweird.f32 %v1535
        %vm1617 = vweird.f32 %v1611
        %vm1618 = vmor %vm1616, %vm1617
        %v1619 = vsel %vm1618, %v1611, %v1615
        %v1620 = vand.u32 2147483647, %v1535
        %vm1621 = vcmp.eq.f32.partialorder %v1620, 8.507059e+37
        %v1622 = vand.u32 %v1535, 2147483648
        %v1623 = vor.u32 1.1754944e-38, %v1622
        %v1624 = vsel %vm1621, %v1623, %v1619
        %v1625 = vmul.f32 1.0, %v1624
        %v1626 = vmul.f32 %v1048, %v1550
        %v1627 = vmul.f32 %v1076, %v1565
        %v1628 = vmul.f32 %v1104, %v1580
        %v1629 = vmul.f32 %v1050, %v1595
        %v1630 = vmul.f32 %v1078, %v1610
        %v1631 = vmul.f32 %v1106, %v1625
        %v1632 = vmul.f32 %v1626, %v1452
        %v1633 = vmul.f32 %v1627, %v1480
        %v1634 = vmul.f32 %v1628, %v1508
        %v1635 = vmul.f32 %v1629, %v1454
        %v1636 = vmul.f32 %v1630, %v1482
        %v1637 = vmul.f32 %v1631, %v1510
        %v1638 = vld [vmem:[#allocation2] sm:$0xff]
        %v1639 = vld [vmem:[#allocation2 + $0x8] sm:$0xff]
        %v1640 = vld [vmem:[#allocation2 + $0x10] sm:$0xff]
        %v1641 = vld [vmem:[#allocation2 + $0x18] sm:$0xff]
        %v1642 = vpack.c.bf16 %v1635, %v1632
        %v1643 = vpack.c.bf16 %v1636, %v1633
        %v1644 = vpack.c.bf16 %v1637, %v1634
        %v1645 = vld [vmem:[%s588] sm:$0xff]
        %v1646 = vld [vmem:[%s588 + $0x8] sm:$0xff]
        %v1647 = vld [vmem:[%s588 + $0x10] sm:$0xff]
        %v1648 = vld [vmem:[%s588 + $0x18] sm:$0xff]
        %v1649 = vld [vmem:[%s588 + $0x20] sm:$0xff]
        %v1650 = vld [vmem:[%s588 + $0x28] sm:$0xff]
        %v1651 = vld [vmem:[%s588 + $0x30] sm:$0xff]
        %v1652 = vld [vmem:[%s588 + $0x38] sm:$0xff]
        %v1653 = vld [vmem:[%s588 + $0x40] sm:$0xff]
        %v1654 = vld [vmem:[%s588 + $0x48] sm:$0xff]
        %v1655 = vld [vmem:[%s588 + $0x50] sm:$0xff]
        %v1656 = vld [vmem:[%s588 + $0x58] sm:$0xff]
        %v1657 = vld [vmem:[%s588 + $0x60] sm:$0xff]
        %v1658 = vld [vmem:[%s588 + $0x68] sm:$0xff]
        %v1659 = vld [vmem:[%s588 + $0x70] sm:$0xff]
        %v1660 = vld [vmem:[%s588 + $0x78] sm:$0xff]
        %v1661 = vld [vmem:[%s588 + $0x80] sm:$0xff]
        %v1662 = vld [vmem:[%s588 + $0x88] sm:$0xff]
        %v1663 = vld [vmem:[%s588 + $0x90] sm:$0xff]
        %v1664 = vld [vmem:[%s588 + $0x98] sm:$0xff]
        %v1665 = vld [vmem:[%s588 + $0xa0] sm:$0xff]
        %v1666 = vld [vmem:[%s588 + $0xa8] sm:$0xff]
        %v1667 = vld [vmem:[%s588 + $0xb0] sm:$0xff]
        %v1668 = vld [vmem:[%s588 + $0xb8] sm:$0xff]
        %v1669 = vld [vmem:[%s588 + $0xc0] sm:$0xff]
        %v1670 = vld [vmem:[%s588 + $0xc8] sm:$0xff]
        %v1671 = vld [vmem:[%s588 + $0xd0] sm:$0xff]
        %v1672 = vld [vmem:[%s588 + $0xd8] sm:$0xff]
        %v1673 = vld [vmem:[%s588 + $0xe0] sm:$0xff]
        %v1674 = vld [vmem:[%s588 + $0xe8] sm:$0xff]
        %v1675 = vld [vmem:[%s588 + $0xf0] sm:$0xff]
        %v1676 = vld [vmem:[%s588 + $0xf8] sm:$0xff]
        %v1677 = vld [vmem:[%s588 + $0x100] sm:$0xff]
        %v1678 = vld [vmem:[%s588 + $0x108] sm:$0xff]
        %v1679 = vld [vmem:[%s588 + $0x110] sm:$0xff]
        %v1680 = vld [vmem:[%s588 + $0x118] sm:$0xff]
        %v1681 = vld [vmem:[%s588 + $0x120] sm:$0xff]
        %v1682 = vld [vmem:[%s588 + $0x128] sm:$0xff]
        %v1683 = vld [vmem:[%s588 + $0x130] sm:$0xff]
        %v1684 = vld [vmem:[%s588 + $0x138] sm:$0xff]
        %v1685 = vld [vmem:[%s588 + $0x140] sm:$0xff]
        %v1686 = vld [vmem:[%s588 + $0x148] sm:$0xff]
        %v1687 = vld [vmem:[%s588 + $0x150] sm:$0xff]
        %v1688 = vld [vmem:[%s588 + $0x158] sm:$0xff]
        %v1689 = vld [vmem:[%s588 + $0x160] sm:$0xff]
        %v1690 = vld [vmem:[%s588 + $0x168] sm:$0xff]
        %v1691 = vld [vmem:[%s588 + $0x170] sm:$0xff]
        %v1692 = vld [vmem:[%s588 + $0x178] sm:$0xff]
        %v1741 = vunpack.c.l.b16 %v1645
        %v1742 = vunpack.c.h.b16 %v1645
        %v1743 = vunpack.c.l.b16 %v1646
        %v1744 = vunpack.c.h.b16 %v1646
        %v1745 = vunpack.c.l.b16 %v1647
        %v1746 = vunpack.c.h.b16 %v1647
        %v1747 = vunpack.c.l.b16 %v1648
        %v1748 = vunpack.c.h.b16 %v1648
        %v1749 = vunpack.c.l.b16 %v1649
        %v1750 = vunpack.c.h.b16 %v1649
        %v1751 = vunpack.c.l.b16 %v1650
        %v1752 = vunpack.c.h.b16 %v1650
        %v1753 = vunpack.c.l.b16 %v1651
        %v1754 = vunpack.c.h.b16 %v1651
        %v1755 = vunpack.c.l.b16 %v1652
        %v1756 = vunpack.c.h.b16 %v1652
        %v1757 = vunpack.c.l.b16 %v1653
        %v1758 = vunpack.c.h.b16 %v1653
        %v1759 = vunpack.c.l.b16 %v1654
        %v1760 = vunpack.c.h.b16 %v1654
        %v1761 = vunpack.c.l.b16 %v1655
        %v1762 = vunpack.c.h.b16 %v1655
        %v1763 = vunpack.c.l.b16 %v1656
        %v1764 = vunpack.c.h.b16 %v1656
        %v1765 = vunpack.c.l.b16 %v1657
        %v1766 = vunpack.c.h.b16 %v1657
        %v1767 = vunpack.c.l.b16 %v1658
        %v1768 = vunpack.c.h.b16 %v1658
        %v1769 = vunpack.c.l.b16 %v1659
        %v1770 = vunpack.c.h.b16 %v1659
        %v1771 = vunpack.c.l.b16 %v1660
        %v1772 = vunpack.c.h.b16 %v1660
        %v1773 = vunpack.c.l.b16 %v1661
        %v1774 = vunpack.c.h.b16 %v1661
        %v1775 = vunpack.c.l.b16 %v1662
        %v1776 = vunpack.c.h.b16 %v1662
        %v1777 = vunpack.c.l.b16 %v1663
        %v1778 = vunpack.c.h.b16 %v1663
        %v1779 = vunpack.c.l.b16 %v1664
        %v1780 = vunpack.c.h.b16 %v1664
        %v1781 = vunpack.c.l.b16 %v1665
        %v1782 = vunpack.c.h.b16 %v1665
        %v1783 = vunpack.c.l.b16 %v1666
        %v1784 = vunpack.c.h.b16 %v1666
        %v1785 = vunpack.c.l.b16 %v1667
        %v1786 = vunpack.c.h.b16 %v1667
        %v1787 = vunpack.c.l.b16 %v1668
        %v1788 = vunpack.c.h.b16 %v1668
        %v1789 = vunpack.c.l.b16 %v1669
        %v1790 = vunpack.c.h.b16 %v1669
        %v1791 = vunpack.c.l.b16 %v1670
        %v1792 = vunpack.c.h.b16 %v1670
        %v1793 = vunpack.c.l.b16 %v1671
        %v1794 = vunpack.c.h.b16 %v1671
        %v1795 = vunpack.c.l.b16 %v1672
        %v1796 = vunpack.c.h.b16 %v1672
        %v1797 = vunpack.c.l.b16 %v1673
        %v1798 = vunpack.c.h.b16 %v1673
        %v1799 = vunpack.c.l.b16 %v1674
        %v1800 = vunpack.c.h.b16 %v1674
        %v1801 = vunpack.c.l.b16 %v1675
        %v1802 = vunpack.c.h.b16 %v1675
        %v1803 = vunpack.c.l.b16 %v1676
        %v1804 = vunpack.c.h.b16 %v1676
        %v1805 = vunpack.c.l.b16 %v1677
        %v1806 = vunpack.c.h.b16 %v1677
        %v1807 = vunpack.c.l.b16 %v1678
        %v1808 = vunpack.c.h.b16 %v1678
        %v1809 = vunpack.c.l.b16 %v1679
        %v1810 = vunpack.c.h.b16 %v1679
        %v1811 = vunpack.c.l.b16 %v1680
        %v1812 = vunpack.c.h.b16 %v1680
        %v1813 = vunpack.c.l.b16 %v1681
        %v1814 = vunpack.c.h.b16 %v1681
        %v1815 = vunpack.c.l.b16 %v1682
        %v1816 = vunpack.c.h.b16 %v1682
        %v1817 = vunpack.c.l.b16 %v1683
        %v1818 = vunpack.c.h.b16 %v1683
        %v1819 = vunpack.c.l.b16 %v1684
        %v1820 = vunpack.c.h.b16 %v1684
        %v1821 = vunpack.c.l.b16 %v1685
        %v1822 = vunpack.c.h.b16 %v1685
        %v1823 = vunpack.c.l.b16 %v1686
        %v1824 = vunpack.c.h.b16 %v1686
        %v1825 = vunpack.c.l.b16 %v1687
        %v1826 = vunpack.c.h.b16 %v1687
        %v1827 = vunpack.c.l.b16 %v1688
        %v1828 = vunpack.c.h.b16 %v1688
        %v1829 = vunpack.c.l.b16 %v1689
        %v1830 = vunpack.c.h.b16 %v1689
        %v1831 = vunpack.c.l.b16 %v1690
        %v1832 = vunpack.c.h.b16 %v1690
        %v1833 = vunpack.c.l.b16 %v1691
        %v1834 = vunpack.c.h.b16 %v1691
        %v1835 = vunpack.c.l.b16 %v1692
        %v1836 = vunpack.c.h.b16 %v1692
        %v1837 = vpack.c.b16 %v1743, %v1741
        %v1838 = vpack.c.b16 %v1744, %v1742
        %v1839 = vpack.c.b16 %v1747, %v1745
        %v1840 = vpack.c.b16 %v1748, %v1746
        %v1841 = vpack.c.b16 %v1751, %v1749
        %v1842 = vpack.c.b16 %v1752, %v1750
        %v1843 = vpack.c.b16 %v1755, %v1753
        %v1844 = vpack.c.b16 %v1756, %v1754
        %v1845 = vpack.c.b16 %v1759, %v1757
        %v1846 = vpack.c.b16 %v1760, %v1758
        %v1847 = vpack.c.b16 %v1763, %v1761
        %v1848 = vpack.c.b16 %v1764, %v1762
        %v1849 = vpack.c.b16 %v1767, %v1765
        %v1850 = vpack.c.b16 %v1768, %v1766
        %v1851 = vpack.c.b16 %v1771, %v1769
        %v1852 = vpack.c.b16 %v1772, %v1770
        %v1853 = vpack.c.b16 %v1775, %v1773
        %v1854 = vpack.c.b16 %v1776, %v1774
        %v1855 = vpack.c.b16 %v1779, %v1777
        %v1856 = vpack.c.b16 %v1780, %v1778
        %v1857 = vpack.c.b16 %v1783, %v1781
        %v1858 = vpack.c.b16 %v1784, %v1782
        %v1859 = vpack.c.b16 %v1787, %v1785
        %v1860 = vpack.c.b16 %v1788, %v1786
        %v1861 = vpack.c.b16 %v1791, %v1789
        %v1862 = vpack.c.b16 %v1792, %v1790
        %v1863 = vpack.c.b16 %v1795, %v1793
        %v1864 = vpack.c.b16 %v1796, %v1794
        %v1865 = vpack.c.b16 %v1799, %v1797
        %v1866 = vpack.c.b16 %v1800, %v1798
        %v1867 = vpack.c.b16 %v1803, %v1801
        %v1868 = vpack.c.b16 %v1804, %v1802
        %v1869 = vpack.c.b16 %v1807, %v1805
        %v1870 = vpack.c.b16 %v1808, %v1806
        %v1871 = vpack.c.b16 %v1811, %v1809
        %v1872 = vpack.c.b16 %v1812, %v1810
        %v1873 = vpack.c.b16 %v1815, %v1813
        %v1874 = vpack.c.b16 %v1816, %v1814
        %v1875 = vpack.c.b16 %v1819, %v1817
        %v1876 = vpack.c.b16 %v1820, %v1818
        %v1877 = vpack.c.b16 %v1823, %v1821
        %v1878 = vpack.c.b16 %v1824, %v1822
        %v1879 = vpack.c.b16 %v1827, %v1825
        %v1880 = vpack.c.b16 %v1828, %v1826
        %v1881 = vpack.c.b16 %v1831, %v1829
        %v1882 = vpack.c.b16 %v1832, %v1830
        %v1883 = vpack.c.b16 %v1835, %v1833
        %v1884 = vpack.c.b16 %v1836, %v1834
        %1933 = vmatpush.bf16.msra.mxu0 %v1851
        %1934 = vmatpush.bf16.msra.mxu0 %v1849
        %1935 = vmatpush.bf16.msra.mxu0 %v1847
        %1936 = vmatpush.bf16.msra.mxu0 %v1845
        %1937 = vmatpush.bf16.msra.mxu0 %v1843
        %1938 = vmatpush.bf16.msra.mxu0 %v1841
        %1939 = vmatpush.bf16.msra.mxu0 %v1839
        %1940 = vmatpush.bf16.msra.mxu0 %v1837
        %1941 = vmatmul.bf16.gmra.mxu0 %v1642
        %v1942 = vpop.f32.mrf.mxu0
        %v1943 = vadd.f32 0.0, %v1942
        %v1944 = vpop.f32.mrf.mxu0
        %v1945 = vadd.f32 0.0, %v1944
        %1946 = vdwg.mxu0
        %1947 = vmatpush.bf16.msra.mxu0 %v1867
        %1948 = vmatpush.bf16.msra.mxu0 %v1865
        %1949 = vmatpush.bf16.msra.mxu0 %v1863
        %1950 = vmatpush.bf16.msra.mxu0 %v1861
        %1951 = vmatpush.bf16.msra.mxu0 %v1859
        %1952 = vmatpush.bf16.msra.mxu0 %v1857
        %1953 = vmatpush.bf16.msra.mxu0 %v1855
        %1954 = vmatpush.bf16.msra.mxu0 %v1853
        %1955 = vmatmul.bf16.gmra.mxu0 %v1643
        %v1956 = vpop.f32.mrf.mxu0
        %v1957 = vadd.f32 %v1943, %v1956
        %v1958 = vpop.f32.mrf.mxu0
        %v1959 = vadd.f32 %v1945, %v1958
        %1960 = vdwg.mxu0
        %1961 = vmatpush.bf16.msra.mxu0 %v1883
        %1962 = vmatpush.bf16.msra.mxu0 %v1881
        %1963 = vmatpush.bf16.msra.mxu0 %v1879
        %1964 = vmatpush.bf16.msra.mxu0 %v1877
        %1965 = vmatpush.bf16.msra.mxu0 %v1875
        %1966 = vmatpush.bf16.msra.mxu0 %v1873
        %1967 = vmatpush.bf16.msra.mxu0 %v1871
        %1968 = vmatpush.bf16.msra.mxu0 %v1869
        %1969 = vmatmul.bf16.gmra.mxu0 %v1644
        %v1970 = vpop.f32.mrf.mxu0
        %v1971 = vadd.f32 %v1957, %v1970
        %v1972 = vpop.f32.mrf.mxu0
        %v1973 = vadd.f32 %v1959, %v1972
        %1974 = vdwg.mxu0
        %1975 = vmatpush.bf16.msra.mxu0 %v1852
        %1976 = vmatpush.bf16.msra.mxu0 %v1850
        %1977 = vmatpush.bf16.msra.mxu0 %v1848
        %1978 = vmatpush.bf16.msra.mxu0 %v1846
        %1979 = vmatpush.bf16.msra.mxu0 %v1844
        %1980 = vmatpush.bf16.msra.mxu0 %v1842
        %1981 = vmatpush.bf16.msra.mxu0 %v1840
        %1982 = vmatpush.bf16.msra.mxu0 %v1838
        %1983 = vmatmul.bf16.gmra.mxu0 %v1642
        %v1984 = vpop.f32.mrf.mxu0
        %v1985 = vadd.f32 0.0, %v1984
        %v1986 = vpop.f32.mrf.mxu0
        %v1987 = vadd.f32 0.0, %v1986
        %1988 = vdwg.mxu0
        %1989 = vmatpush.bf16.msra.mxu0 %v1868
        %1990 = vmatpush.bf16.msra.mxu0 %v1866
        %1991 = vmatpush.bf16.msra.mxu0 %v1864
        %1992 = vmatpush.bf16.msra.mxu0 %v1862
        %1993 = vmatpush.bf16.msra.mxu0 %v1860
        %1994 = vmatpush.bf16.msra.mxu0 %v1858
        %1995 = vmatpush.bf16.msra.mxu0 %v1856
        %1996 = vmatpush.bf16.msra.mxu0 %v1854
        %1997 = vmatmul.bf16.gmra.mxu0 %v1643
        %v1998 = vpop.f32.mrf.mxu0
        %v1999 = vadd.f32 %v1985, %v1998
        %v2000 = vpop.f32.mrf.mxu0
        %v2001 = vadd.f32 %v1987, %v2000
        %2002 = vdwg.mxu0
        %2003 = vmatpush.bf16.msra.mxu0 %v1884
        %2004 = vmatpush.bf16.msra.mxu0 %v1882
        %2005 = vmatpush.bf16.msra.mxu0 %v1880
        %2006 = vmatpush.bf16.msra.mxu0 %v1878
        %2007 = vmatpush.bf16.msra.mxu0 %v1876
        %2008 = vmatpush.bf16.msra.mxu0 %v1874
        %2009 = vmatpush.bf16.msra.mxu0 %v1872
        %2010 = vmatpush.bf16.msra.mxu0 %v1870
        %2011 = vmatmul.bf16.gmra.mxu0 %v1644
        %v2012 = vpop.f32.mrf.mxu0
        %v2013 = vadd.f32 %v1999, %v2012
        %v2014 = vpop.f32.mrf.mxu0
        %v2015 = vadd.f32 %v2001, %v2014
        %2016 = vdwg.mxu0
        %v2017 = vadd.f32 %v1638, %v1971
        %v2018 = vadd.f32 %v1639, %v2013
        %v2019 = vadd.f32 %v1640, %v1973
        %v2020 = vadd.f32 %v1641, %v2015
        %2021 = vst [vmem:[#allocation2] sm:$0xff] %v2017
        %2022 = vst [vmem:[#allocation2 + $0x8] sm:$0xff] %v2018
        %2023 = vst [vmem:[#allocation2 + $0x10] sm:$0xff] %v2019
        %2024 = vst [vmem:[#allocation2 + $0x18] sm:$0xff] %v2020
        %p2025 = scmp.eq.s32.totalorder %s20, 1
        // Predicated region
        $region93: #{transformer_forward.15} parent=79 // pred_check
          %p2026 = pneg %p2025
        $region94: #{transformer_forward.15} parent=79 // pred_check_branch
          %2028 = sbr.rel (%p2026) target = $region96
        $region95: #{transformer_forward.15} parent=79 // pred_region
          %v2029 = vld [vmem:[%s579] sm:$0xff]
          %v2030 = vld [vmem:[%s579 + $0x8] sm:$0xff]
          %v2031 = vunpack.c.l.bf16 %v2029
          %v2032 = vunpack.c.h.bf16 %v2029
          %v2033 = vunpack.c.l.bf16 %v2030
          %v2034 = vunpack.c.h.bf16 %v2030
          %v2035 = vld [vmem:[#allocation2] sm:$0xff]
          %v2036 = vld [vmem:[#allocation2 + $0x8] sm:$0xff]
          %v2037 = vld [vmem:[#allocation2 + $0x10] sm:$0xff]
          %v2038 = vld [vmem:[#allocation2 + $0x18] sm:$0xff]
          %v2039 = vadd.f32 %v2031, %v2035
          %v2040 = vadd.f32 %v2032, %v2036
          %v2041 = vadd.f32 %v2033, %v2037
          %v2042 = vadd.f32 %v2034, %v2038
          %v2043 = vpack.c.bf16 %v2040, %v2039
          %v2044 = vpack.c.bf16 %v2042, %v2041
          %2045 = vst [vmem:[%s595] sm:$0xff] %v2043
          %2046 = vst [vmem:[%s595 + $0x8] sm:$0xff] %v2044
        $region96: #{transformer_forward.15} parent=79 // pred_fallthru
          _
        %s2047 = smul.u32 2, %s19
        %p2048 = scmp.lt.s32.totalorder %s2047, 1
        %s2049 = scalar_select %p2048, %s2047, 1
        %s2050 = smul.addr %s2049, 2
        %s2051 = smul.addr %s2050, 4
        %s2052 = scalar_lea.vmem %s4, %s2051
        // Predicated region
        $region97: #{transformer_forward.15} parent=79 // pred_check
          %p2053 = pneg %p149
        $region98: #{transformer_forward.15} parent=79 // pred_check_branch
          %2055 = sbr.rel (%p2053) target = $region100
        $region99: #{transformer_forward.15} parent=79 // pred_region
          %s2056 = smul.u32 2, %s19
        $region100: #{transformer_forward.15} parent=79 // pred_fallthru
          _
        // Predicated region
        $region101: #{transformer_forward.15} parent=79 // pred_check
          %p2057 = pneg %p149
        $region102: #{transformer_forward.15} parent=79 // pred_check_branch
          %2059 = sbr.rel (%p2057) target = $region104
        $region103: #{transformer_forward.15} parent=79 // pred_region
          %s2060 = smul.u32 2, %s19
          %p2061 = scmp.lt.s32.totalorder %s2060, 1
          %s2062 = scalar_select %p2061, %s2060, 1
          %s2063 = smul.addr %s2062, 2
          %s2064 = smul.addr %s2063, 4
          %s2065 = scalar_lea.vmem %s4, %s2064
        $region104: #{transformer_forward.15} parent=79 // pred_fallthru
          _
      $region80: #{transformer_forward.15} parent=5 // pred_fallthru
        _
      %p2066 = scmp.le.s32.totalorder 2, %s10
      // Predicated region
      $region105: #{transformer_forward.15} parent=5 // pred_check
        %p2067 = pneg %p2066
      $region106: #{transformer_forward.15} parent=5 // pred_check_branch
        %2069 = sbr.rel (%p2067) target = $region108
      $region107: #{transformer_forward.15} parent=5 // pred_region
        %s2070 = ssub.s32 %s10, 2
      $region108: #{transformer_forward.15} parent=5 // pred_fallthru
        _
    $region6: #{transformer_forward.15} parent=1 // loop_footer
      %s14 = sadd.s32 1, %s10
    $region7: #{transformer_forward.15} parent=1 // loop_footer_branch
      %9 = sbr.rel target = $region3
    $region8: #{transformer_forward.15} parent=1 // loop_exit
      _

// kernel: transformer_forward.16
$region0: #{transformer_forward.16}
  #allocation0 [shape = 'u32[]', space=smem, size = 0x4, offset = 0x4, fixed_abs, tag = 'smem constant byte address 0x4 - core index']
  #allocation1 [shape = 'u32[72,128]{1,0:T(1,128)}', space=vmem, size = 0x9000, scoped, tag = 'internal scratch']
  #allocation2 [shape = 'bf16[16,256]{1,0:T(8,128)(2,1)}', space=vmem, size = 0x2000, scoped, tag = 'scratch operand']
  %s0 = inlined_call_operand.vmem [shape: bf16[16,256], index: 0, kind: input, shape index: {}]
  %s1 = inlined_call_operand.vmem [shape: bf16[256,512], index: 1, kind: input, shape index: {}]
  %s2 = inlined_call_operand.vmem [shape: bf16[16,512], index: 2, kind: output, shape index: {}]
  %s3 = sld [smem:[#allocation0]]
  $region117: #{transformer_forward.16} parent=0
    _
  %s5 = ssub.s32 1, %s3
  %s6 = scalar_select 0, %s5, %s3
  $region1: #{transformer_forward.16} parent=0
    #allocation3 [shape = 'u8[262144]{0}', space=vmem, size = 0x40000, scoped, tag = 'input window, operand 1']
    #allocation4 [shape = 'u8[16384]{0}', space=vmem, size = 0x4000, scoped, tag = 'output window, operand 0']
    loop: start=0, step=1, limit=4
    $region2: #{transformer_forward.16} parent=1 // loop_pre_header
      _
    $region3: #{transformer_forward.16} parent=1 // loop_header
      %s8 = sphi 0, %s12
      %p9 = scmp.ge.s32.totalorder %s8, 4
      %s15 = sphi 0, %s27
      %s16 = sphi 0, %s23
      %s17 = sphi 0, %s15
      %s18 = sphi 0, %s16
      %s19 = sphi 0, %s17
      %s20 = sphi 0, %s18
      %s30 = sphi 0, %s32
      %s33 = sphi 0, %s30
      %s34 = sphi 0, %s33
      %s50 = sphi 0, %s34
      %s56 = sphi 0, %s58
      %s59 = sphi 0, %s56
      %s60 = sphi 0, %s59
      %s76 = sphi 0, %s60
      %s84 = sphi 0, %s86
      %s87 = sphi 0, %s84
      %s88 = sphi 0, %s87
      %s104 = sphi 0, %s88
    $region4: #{transformer_forward.16} parent=1 // loop_header_branch
      %11 = sbr.rel (%p9) target = $region8
    $region5: #{transformer_forward.16} parent=1 // loop_body
      %s13 = ssub.s32 %s8, 1
      %s14 = ssub.s32 %s8, 2
      %s21 = sadd.s32 1, %s16
      %p22 = scmp.ge.s32.totalorder %s21, 2
      %s23 = scalar_select %p22, 0, %s21
      %s24 = sadd.s32 1, %s15
      %s25 = scalar_select %p22, %s24, %s15
      %p26 = scmp.ge.s32.totalorder %s25, 1
      %s27 = scalar_select %p26, 0, %s25
      %s28 = ssub.s32 %s15, %s27
      %p29 = scmp.eq.s32.totalorder %s28, 0
      %s31 = sadd.s32 %s30, 1
      %s32 = scalar_select %p29, %s30, %s31
      %p35 = pneg %p29
      %p36 = scmp.eq.s32.totalorder %s8, 1
      %p37 = por %p35, %p36
      %p38 = scmp.ne.s32.totalorder %s30, %s33
      %p39 = scmp.eq.s32.totalorder %s8, 0
      %p40 = por %p38, %p39
      %p41 = scmp.ne.s32.totalorder %s30, %s33
      %p42 = scmp.eq.s32.totalorder %s13, 1
      %p43 = por %p41, %p42
      %p44 = scmp.ne.s32.totalorder %s33, %s34
      %p45 = scmp.eq.s32.totalorder %s13, 0
      %p46 = por %p44, %p45
      %p47 = scmp.ne.s32.totalorder %s33, %s34
      %p48 = scmp.eq.s32.totalorder %s14, 1
      %p49 = por %p47, %p48
      %p51 = scmp.ne.s32.totalorder %s34, %s50
      %p52 = scmp.eq.s32.totalorder %s14, 0
      %p53 = por %p51, %p52
      %s54 = ssub.s32 %s16, %s23
      %p55 = scmp.eq.s32.totalorder %s54, 0
      %s57 = sadd.s32 %s56, 1
      %s58 = scalar_select %p55, %s56, %s57
      %p61 = pneg %p55
      %p62 = scmp.eq.s32.totalorder %s8, 1
      %p63 = por %p61, %p62
      %p64 = scmp.ne.s32.totalorder %s56, %s59
      %p65 = scmp.eq.s32.totalorder %s8, 0
      %p66 = por %p64, %p65
      %p67 = scmp.ne.s32.totalorder %s56, %s59
      %p68 = scmp.eq.s32.totalorder %s13, 1
      %p69 = por %p67, %p68
      %p70 = scmp.ne.s32.totalorder %s59, %s60
      %p71 = scmp.eq.s32.totalorder %s13, 0
      %p72 = por %p70, %p71
      %p73 = scmp.ne.s32.totalorder %s59, %s60
      %p74 = scmp.eq.s32.totalorder %s14, 1
      %p75 = por %p73, %p74
      %p77 = scmp.ne.s32.totalorder %s60, %s76
      %p78 = scmp.eq.s32.totalorder %s14, 0
      %p79 = por %p77, %p78
      %s80 = ssub.s32 %s15, %s27
      %s81 = ssub.s32 %s16, %s23
      %s82 = sor.u32 %s80, %s81
      %p83 = scmp.eq.s32.totalorder %s82, 0
      %s85 = sadd.s32 %s84, 1
      %s86 = scalar_select %p83, %s84, %s85
      %p89 = pneg %p83
      %p90 = scmp.eq.s32.totalorder %s8, 1
      %p91 = por %p89, %p90
      %p92 = scmp.ne.s32.totalorder %s84, %s87
      %p93 = scmp.eq.s32.totalorder %s8, 0
      %p94 = por %p92, %p93
      %p95 = scmp.ne.s32.totalorder %s84, %s87
      %p96 = scmp.eq.s32.totalorder %s13, 1
      %p97 = por %p95, %p96
      %p98 = scmp.ne.s32.totalorder %s87, %s88
      %p99 = scmp.eq.s32.totalorder %s13, 0
      %p100 = por %p98, %p99
      %p101 = scmp.ne.s32.totalorder %s87, %s88
      %p102 = scmp.eq.s32.totalorder %s14, 1
      %p103 = por %p101, %p102
      %p105 = scmp.ne.s32.totalorder %s88, %s104
      %p106 = scmp.eq.s32.totalorder %s14, 0
      %p107 = por %p105, %p106
      %p108 = scmp.le.s32.totalorder 1, %s8
      %p109 = scmp.lt.s32.totalorder %s8, 3
      %p110 = pnand %p108, %p109
      %p111 = pneg %p110
      // Predicated region
      $region9: #{transformer_forward.16} parent=5 // pred_check
        _
      $region10: #{transformer_forward.16} parent=5 // pred_check_branch
        %113 = sbr.rel (%p110) target = $region12
      $region11: #{transformer_forward.16} parent=5 // pred_region
        %s114 = ssub.s32 %s8, 1
        // Predicated region
        $region13: #{transformer_forward.16} parent=11 // pred_check
          %p115 = pneg %p46
        $region14: #{transformer_forward.16} parent=11 // pred_check_branch
          %117 = sbr.rel (%p115) target = $region16
        $region15: #{transformer_forward.16} parent=11 // pred_region
          %s118 = smul.u32 2, %s17
          %p119 = scmp.lt.s32.totalorder %s118, 1
          %s120 = scalar_select %p119, %s118, 1
          %s121 = smul.addr %s120, 2
          %s122 = smul.addr %s121, 4
          %s123 = scalar_lea.vmem %s0, %s122
          %s124 = smul.u32 2, %s17
        $region16: #{transformer_forward.16} parent=11 // pred_fallthru
          _
      $region12: #{transformer_forward.16} parent=5 // pred_fallthru
        _
      %p125 = scmp.lt.s32.totalorder %s8, 2
      // Predicated region
      $region17: #{transformer_forward.16} parent=5 // pred_check
        %p126 = pneg %p125
      $region18: #{transformer_forward.16} parent=5 // pred_check_branch
        %128 = sbr.rel (%p126) target = $region20
      $region19: #{transformer_forward.16} parent=5 // pred_region
        // Predicated region
        $region21: #{transformer_forward.16} parent=19 // pred_check
          %p129 = pneg %p66
        $region22: #{transformer_forward.16} parent=19 // pred_check_branch
          %131 = sbr.rel (%p129) target = $region24
        $region23: #{transformer_forward.16} parent=19 // pred_region
          %s132 = sand.u32 %s56, 1
          %s133 = sand.u32 %s56, 1
          %s134 = smul.addr %s133, 256
          %s135 = scalar_lea.vmem [#allocation3], %s134
          %s136 = smul.u32 2, %s16
          %s137 = smul.addr %s136, 4
          %s138 = scalar_lea.vmem %s1, %s137
          // Predicated region
          $region25: #{transformer_forward.16} parent=23 // pred_check
            _
          $region26: #{transformer_forward.16} parent=23 // pred_check_branch
            %140 = sbr.rel (0) target = $region28
          $region27: #{transformer_forward.16} parent=23 // pred_region
            // Predicated region
            $region29: #{transformer_forward.16} parent=27 // pred_check
              _
            $region30: #{transformer_forward.16} parent=27 // pred_check_branch
              %142 = sbr.rel (0) target = $region32
            $region31: #{transformer_forward.16} parent=27 // pred_region
              // Predicated region
              $region44: #{transformer_forward.16} parent=31 // pred_check
                _
              $region45: #{transformer_forward.16} parent=31 // pred_check_branch
                %220 = sbr.rel (0) target = $region47
              $region46: #{transformer_forward.16} parent=31 // pred_region
                loop: start=0, step=1, limit=1
                $region48: #{transformer_forward.16} parent=46 // loop_pre_header
                  _
                $region49: #{transformer_forward.16} parent=46 // loop_header
                  %s222 = sphi 0, %s226
                  %p223 = scmp.ge.s32.totalorder %s222, 1
                  %s227 = sphi %s138, %s138
                  %s228 = sphi %s135, %s135
                $region50: #{transformer_forward.16} parent=46 // loop_header_branch
                  %225 = sbr.rel (%p223) target = $region54
                $region51: #{transformer_forward.16} parent=46 // loop_body
                  %v229 = vld [vmem:[%s227] sm:$0xff]
                  %230 = vst [vmem:[%s228] sm:$0xff] %v229
                  %v231 = vld [vmem:[%s227 + $0x10] sm:$0xff]
                  %232 = vst [vmem:[%s228 + $0x8] sm:$0xff] %v231
                  %v233 = vld [vmem:[%s227 + $0x20] sm:$0xff]
                  %234 = vst [vmem:[%s228 + $0x10] sm:$0xff] %v233
                  %v235 = vld [vmem:[%s227 + $0x30] sm:$0xff]
                  %236 = vst [vmem:[%s228 + $0x18] sm:$0xff] %v235
                  %v237 = vld [vmem:[%s227 + $0x40] sm:$0xff]
                  %238 = vst [vmem:[%s228 + $0x20] sm:$0xff] %v237
                  %v239 = vld [vmem:[%s227 + $0x50] sm:$0xff]
                  %240 = vst [vmem:[%s228 + $0x28] sm:$0xff] %v239
                  %v241 = vld [vmem:[%s227 + $0x60] sm:$0xff]
                  %242 = vst [vmem:[%s228 + $0x30] sm:$0xff] %v241
                  %v243 = vld [vmem:[%s227 + $0x70] sm:$0xff]
                  %244 = vst [vmem:[%s228 + $0x38] sm:$0xff] %v243
                  %v245 = vld [vmem:[%s227 + $0x80] sm:$0xff]
                  %246 = vst [vmem:[%s228 + $0x40] sm:$0xff] %v245
                  %v247 = vld [vmem:[%s227 + $0x90] sm:$0xff]
                  %248 = vst [vmem:[%s228 + $0x48] sm:$0xff] %v247
                  %v249 = vld [vmem:[%s227 + $0xa0] sm:$0xff]
                  %250 = vst [vmem:[%s228 + $0x50] sm:$0xff] %v249
                  %v251 = vld [vmem:[%s227 + $0xb0] sm:$0xff]
                  %252 = vst [vmem:[%s228 + $0x58] sm:$0xff] %v251
                  %v253 = vld [vmem:[%s227 + $0xc0] sm:$0xff]
                  %254 = vst [vmem:[%s228 + $0x60] sm:$0xff] %v253
                  %v255 = vld [vmem:[%s227 + $0xd0] sm:$0xff]
                  %256 = vst [vmem:[%s228 + $0x68] sm:$0xff] %v255
                  %v257 = vld [vmem:[%s227 + $0xe0] sm:$0xff]
                  %258 = vst [vmem:[%s228 + $0x70] sm:$0xff] %v257
                  %v259 = vld [vmem:[%s227 + $0xf0] sm:$0xff]
                  %260 = vst [vmem:[%s228 + $0x78] sm:$0xff] %v259
                  %v261 = vld [vmem:[%s227 + $0x100] sm:$0xff]
                  %262 = vst [vmem:[%s228 + $0x80] sm:$0xff] %v261
                  %v263 = vld [vmem:[%s227 + $0x110] sm:$0xff]
                  %264 = vst [vmem:[%s228 + $0x88] sm:$0xff] %v263
                  %v265 = vld [vmem:[%s227 + $0x120] sm:$0xff]
                  %266 = vst [vmem:[%s228 + $0x90] sm:$0xff] %v265
                  %v267 = vld [vmem:[%s227 + $0x130] sm:$0xff]
                  %268 = vst [vmem:[%s228 + $0x98] sm:$0xff] %v267
                  %v269 = vld [vmem:[%s227 + $0x140] sm:$0xff]
                  %270 = vst [vmem:[%s228 + $0xa0] sm:$0xff] %v269
                  %v271 = vld [vmem:[%s227 + $0x150] sm:$0xff]
                  %272 = vst [vmem:[%s228 + $0xa8] sm:$0xff] %v271
                  %v273 = vld [vmem:[%s227 + $0x160] sm:$0xff]
                  %274 = vst [vmem:[%s228 + $0xb0] sm:$0xff] %v273
                  %v275 = vld [vmem:[%s227 + $0x170] sm:$0xff]
                  %276 = vst [vmem:[%s228 + $0xb8] sm:$0xff] %v275
                  %v277 = vld [vmem:[%s227 + $0x180] sm:$0xff]
                  %278 = vst [vmem:[%s228 + $0xc0] sm:$0xff] %v277
                  %v279 = vld [vmem:[%s227 + $0x190] sm:$0xff]
                  %280 = vst [vmem:[%s228 + $0xc8] sm:$0xff] %v279
                  %v281 = vld [vmem:[%s227 + $0x1a0] sm:$0xff]
                  %282 = vst [vmem:[%s228 + $0xd0] sm:$0xff] %v281
                  %v283 = vld [vmem:[%s227 + $0x1b0] sm:$0xff]
                  %284 = vst [vmem:[%s228 + $0xd8] sm:$0xff] %v283
                  %v285 = vld [vmem:[%s227 + $0x1c0] sm:$0xff]
                  %286 = vst [vmem:[%s228 + $0xe0] sm:$0xff] %v285
                  %v287 = vld [vmem:[%s227 + $0x1d0] sm:$0xff]
                  %288 = vst [vmem:[%s228 + $0xe8] sm:$0xff] %v287
                  %v289 = vld [vmem:[%s227 + $0x1e0] sm:$0xff]
                  %290 = vst [vmem:[%s228 + $0xf0] sm:$0xff] %v289
                  %v291 = vld [vmem:[%s227 + $0x1f0] sm:$0xff]
                  %292 = vst [vmem:[%s228 + $0xf8] sm:$0xff] %v291
                $region52: #{transformer_forward.16} parent=46 // loop_footer
                  %s226 = sadd.s32 1, %s222
                $region53: #{transformer_forward.16} parent=46 // loop_footer_branch
                  %221 = sbr.rel target = $region49
                $region54: #{transformer_forward.16} parent=46 // loop_exit
                  _
              $region47: #{transformer_forward.16} parent=31 // pred_fallthru
                _
              // Predicated region
              $region55: #{transformer_forward.16} parent=31 // pred_check
                _
              $region56: #{transformer_forward.16} parent=31 // pred_check_branch
                %294 = sbr.rel target = $region58
              $region57: #{transformer_forward.16} parent=31 // pred_region
                _
              $region58: #{transformer_forward.16} parent=31 // pred_fallthru
                _
            $region32: #{transformer_forward.16} parent=27 // pred_fallthru
              _
            // Predicated region
            $region33: #{transformer_forward.16} parent=27 // pred_check
              _
            $region34: #{transformer_forward.16} parent=27 // pred_check_branch
              %144 = sbr.rel target = $region36
            $region35: #{transformer_forward.16} parent=27 // pred_region
              %s146 = ssub.s32 256, 1
              loop: start=0, step=1, limit=1
              $region37: #{transformer_forward.16} parent=35 // loop_pre_header
                _
              $region38: #{transformer_forward.16} parent=35 // loop_header
                %s148 = sphi 0, %s152
                %p149 = scmp.ge.s32.totalorder %s148, 1
                %s153 = sphi %s138, %s138
                %s154 = sphi %s135, %s135
              $region39: #{transformer_forward.16} parent=35 // loop_header_branch
                %151 = sbr.rel (%p149) target = $region43
              $region40: #{transformer_forward.16} parent=35 // loop_body
                %v155 = vld [vmem:[%s153] sm:%s146]
                %156 = vst [vmem:[%s154] sm:%s146] %v155
                %v157 = vld [vmem:[%s153 + $0x10] sm:%s146]
                %158 = vst [vmem:[%s154 + $0x8] sm:%s146] %v157
                %v159 = vld [vmem:[%s153 + $0x20] sm:%s146]
                %160 = vst [vmem:[%s154 + $0x10] sm:%s146] %v159
                %v161 = vld [vmem:[%s153 + $0x30] sm:%s146]
                %162 = vst [vmem:[%s154 + $0x18] sm:%s146] %v161
                %v163 = vld [vmem:[%s153 + $0x40] sm:%s146]
                %164 = vst [vmem:[%s154 + $0x20] sm:%s146] %v163
                %v165 = vld [vmem:[%s153 + $0x50] sm:%s146]
                %166 = vst [vmem:[%s154 + $0x28] sm:%s146] %v165
                %v167 = vld [vmem:[%s153 + $0x60] sm:%s146]
                %168 = vst [vmem:[%s154 + $0x30] sm:%s146] %v167
                %v169 = vld [vmem:[%s153 + $0x70] sm:%s146]
                %170 = vst [vmem:[%s154 + $0x38] sm:%s146] %v169
                %v171 = vld [vmem:[%s153 + $0x80] sm:%s146]
                %172 = vst [vmem:[%s154 + $0x40] sm:%s146] %v171
                %v173 = vld [vmem:[%s153 + $0x90] sm:%s146]
                %174 = vst [vmem:[%s154 + $0x48] sm:%s146] %v173
                %v175 = vld [vmem:[%s153 + $0xa0] sm:%s146]
                %176 = vst [vmem:[%s154 + $0x50] sm:%s146] %v175
                %v177 = vld [vmem:[%s153 + $0xb0] sm:%s146]
                %178 = vst [vmem:[%s154 + $0x58] sm:%s146] %v177
                %v179 = vld [vmem:[%s153 + $0xc0] sm:%s146]
                %180 = vst [vmem:[%s154 + $0x60] sm:%s146] %v179
                %v181 = vld [vmem:[%s153 + $0xd0] sm:%s146]
                %182 = vst [vmem:[%s154 + $0x68] sm:%s146] %v181
                %v183 = vld [vmem:[%s153 + $0xe0] sm:%s146]
                %184 = vst [vmem:[%s154 + $0x70] sm:%s146] %v183
                %v185 = vld [vmem:[%s153 + $0xf0] sm:%s146]
                %186 = vst [vmem:[%s154 + $0x78] sm:%s146] %v185
                %v187 = vld [vmem:[%s153 + $0x100] sm:%s146]
                %188 = vst [vmem:[%s154 + $0x80] sm:%s146] %v187
                %v189 = vld [vmem:[%s153 + $0x110] sm:%s146]
                %190 = vst [vmem:[%s154 + $0x88] sm:%s146] %v189
                %v191 = vld [vmem:[%s153 + $0x120] sm:%s146]
                %192 = vst [vmem:[%s154 + $0x90] sm:%s146] %v191
                %v193 = vld [vmem:[%s153 + $0x130] sm:%s146]
                %194 = vst [vmem:[%s154 + $0x98] sm:%s146] %v193
                %v195 = vld [vmem:[%s153 + $0x140] sm:%s146]
                %196 = vst [vmem:[%s154 + $0xa0] sm:%s146] %v195
                %v197 = vld [vmem:[%s153 + $0x150] sm:%s146]
                %198 = vst [vmem:[%s154 + $0xa8] sm:%s146] %v197
                %v199 = vld [vmem:[%s153 + $0x160] sm:%s146]
                %200 = vst [vmem:[%s154 + $0xb0] sm:%s146] %v199
                %v201 = vld [vmem:[%s153 + $0x170] sm:%s146]
                %202 = vst [vmem:[%s154 + $0xb8] sm:%s146] %v201
                %v203 = vld [vmem:[%s153 + $0x180] sm:%s146]
                %204 = vst [vmem:[%s154 + $0xc0] sm:%s146] %v203
                %v205 = vld [vmem:[%s153 + $0x190] sm:%s146]
                %206 = vst [vmem:[%s154 + $0xc8] sm:%s146] %v205
                %v207 = vld [vmem:[%s153 + $0x1a0] sm:%s146]
                %208 = vst [vmem:[%s154 + $0xd0] sm:%s146] %v207
                %v209 = vld [vmem:[%s153 + $0x1b0] sm:%s146]
                %210 = vst [vmem:[%s154 + $0xd8] sm:%s146] %v209
                %v211 = vld [vmem:[%s153 + $0x1c0] sm:%s146]
                %212 = vst [vmem:[%s154 + $0xe0] sm:%s146] %v211
                %v213 = vld [vmem:[%s153 + $0x1d0] sm:%s146]
                %214 = vst [vmem:[%s154 + $0xe8] sm:%s146] %v213
                %v215 = vld [vmem:[%s153 + $0x1e0] sm:%s146]
                %216 = vst [vmem:[%s154 + $0xf0] sm:%s146] %v215
                %v217 = vld [vmem:[%s153 + $0x1f0] sm:%s146]
                %218 = vst [vmem:[%s154 + $0xf8] sm:%s146] %v217
              $region41: #{transformer_forward.16} parent=35 // loop_footer
                %s152 = sadd.s32 1, %s148
              $region42: #{transformer_forward.16} parent=35 // loop_footer_branch
                %147 = sbr.rel target = $region38
              $region43: #{transformer_forward.16} parent=35 // loop_exit
                _
            $region36: #{transformer_forward.16} parent=27 // pred_fallthru
              _
          $region28: #{transformer_forward.16} parent=23 // pred_fallthru
            _
          %295 = vnop
        $region24: #{transformer_forward.16} parent=19 // pred_fallthru
          _
      $region20: #{transformer_forward.16} parent=5 // pred_fallthru
        _
      %p296 = scmp.le.s32.totalorder 1, %s8
      %p297 = scmp.lt.s32.totalorder %s8, 3
      %p298 = pnand %p296, %p297
      %p299 = pneg %p298
      // Predicated region
      $region59: #{transformer_forward.16} parent=5 // pred_check
        _
      $region60: #{transformer_forward.16} parent=5 // pred_check_branch
        %301 = sbr.rel (%p298) target = $region62
      $region61: #{transformer_forward.16} parent=5 // pred_region
        %s302 = ssub.s32 %s8, 1
        %s303 = sand.u32 %s59, 1
        %s304 = sand.u32 %s59, 1
        %s305 = smul.addr %s304, 256
        %s306 = scalar_lea.vmem [#allocation3], %s305
        // Predicated region
        $region63: #{transformer_forward.16} parent=61 // pred_check
          %p307 = pneg %p72
        $region64: #{transformer_forward.16} parent=61 // pred_check_branch
          %309 = sbr.rel (%p307) target = $region66
        $region65: #{transformer_forward.16} parent=61 // pred_region
          _
        $region66: #{transformer_forward.16} parent=61 // pred_fallthru
          _
        %s310 = smul.u32 2, %s17
        %p311 = scmp.lt.s32.totalorder %s310, 1
        %s312 = scalar_select %p311, %s310, 1
        %s313 = smul.addr %s312, 2
        %s314 = smul.addr %s313, 4
        %s315 = scalar_lea.vmem %s0, %s314
        %p316 = pneg %p46
        %p317 = pneg %p43
        %s318 = sand.u32 %s59, 1
        %s319 = sand.u32 %s59, 1
        %s320 = smul.addr %s319, 256
        %s321 = scalar_lea.vmem [#allocation3], %s320
        %p322 = pneg %p72
        %p323 = pneg %p69
        %p324 = pneg %p100
        %p325 = pneg %p97
        %s326 = sand.u32 %s87, 1
        %s327 = sand.u32 %s87, 1
        %s328 = smul.addr %s327, 16
        %s329 = scalar_lea.vmem [#allocation4], %s328
        %s330 = smul.u32 2, %s17
        %p331 = scmp.lt.s32.totalorder %s330, 1
        %s332 = scalar_select %p331, %s330, 1
        %s333 = smul.addr %s332, 2
        %s334 = smul.addr %s333, 4
        %s335 = scalar_lea.vmem %s0, %s334
        %s336 = smul.u32 2, %s17
        %s337 = smul.u32 2, %s18
        %s338 = smul.u32 2, %s17
        %s339 = smul.u32 2, %s18
        %p340 = scmp.eq.s32.totalorder %s18, 0
        // Predicated region
        $region67: #{transformer_forward.16} parent=61 // pred_check
          %p341 = pneg %p340
        $region68: #{transformer_forward.16} parent=61 // pred_check_branch
          %343 = sbr.rel (%p341) target = $region70
        $region69: #{transformer_forward.16} parent=61 // pred_region
          %v344 = vld [vmem:[%s335] sm:$0xff]
          %v345 = vld [vmem:[%s335 + $0x8] sm:$0xff]
          %v346 = vunpack.c.l.bf16 %v344
          %v347 = vunpack.c.h.bf16 %v344
          %v348 = vunpack.c.l.bf16 %v345
          %v349 = vunpack.c.h.bf16 %v345
          %v350 = vmul.f32 %v346, %v346
          %v351 = vmul.f32 %v347, %v347
          %v352 = vmul.f32 %v348, %v348
          %v353 = vmul.f32 %v349, %v349
          %v354 = vadd.f32 %v350, %v351
          %355 = vadd.xlane.f32.xlu0 %v354
          %v356 = vpop.xlane.xlu0 %355
          %v357 = vadd.f32 %v352, %v353
          %358 = vadd.xlane.f32.xlu0 %v357
          %v359 = vpop.xlane.xlu0 %358
          %v360 = vrcp.pop 256.0
          %v361 = vmul.f32 256.0, %v360
          %v362 = vsub.f32 1.0, %v361
          %v363 = vmul.f32 %v360, %v362
          %v364 = vadd.f32 %v360, %v363
          %vm365 = vweird.f32 %v360
          %v366 = vsel %vm365, %v360, %v364
          %v367 = vmul.f32 %v356, %v366
          %v368 = vmul.f32 %v359, %v366
          %v369 = vrsqrt.pop %v367
          %v370 = vmul.f32 %v369, %v367
          %v371 = vmul.f32 %v370, %v369
          %v372 = vmul.f32 0.5, %v371
          %v373 = vsub.f32 1.5, %v372
          %v374 = vmul.f32 %v369, %v373
          %v375 = vmul.f32 %v367, %v374
          %vm376 = vcmp.eq.f32.partialorder %v367, inf
          %v377 = vsel %vm376, %v367, %v375
          %vm378 = vcmp.eq.f32.partialorder %v367, 0.0
          %v379 = vand.u32 %v367, 2147483648
          %v380 = vsel %vm378, %v379, %v377
          %v381 = vrsqrt.pop %v368
          %v382 = vmul.f32 %v381, %v368
          %v383 = vmul.f32 %v382, %v381
          %v384 = vmul.f32 0.5, %v383
          %v385 = vsub.f32 1.5, %v384
          %v386 = vmul.f32 %v381, %v385
          %v387 = vmul.f32 %v368, %v386
          %vm388 = vcmp.eq.f32.partialorder %v368, inf
          %v389 = vsel %vm388, %v368, %v387
          %vm390 = vcmp.eq.f32.partialorder %v368, 0.0
          %v391 = vand.u32 %v368, 2147483648
          %v392 = vsel %vm390, %v391, %v389
          %v393 = vadd.f32 %v380, 1e-05
          %v394 = vadd.f32 %v392, 1e-05
          %v395 = vrcp.pop %v393
          %v396 = vmul.f32 %v393, %v395
          %v397 = vsub.f32 1.0, %v396
          %v398 = vmul.f32 %v395, %v397
          %v399 = vadd.f32 %v395, %v398
          %vm400 = vweird.f32 %v393
          %vm401 = vweird.f32 %v395
          %vm402 = vmor %vm400, %vm401
          %v403 = vsel %vm402, %v395, %v399
          %v404 = vand.u32 2147483647, %v393
          %vm405 = vcmp.eq.f32.partialorder %v404, 8.507059e+37
          %v406 = vand.u32 %v393, 2147483648
          %v407 = vor.u32 1.1754944e-38, %v406
          %v408 = vsel %vm405, %v407, %v403
          %v409 = vmul.f32 %v346, %v408
          %v410 = vmul.f32 %v347, %v408
          %v411 = vrcp.pop %v394
          %v412 = vmul.f32 %v394, %v411
          %v413 = vsub.f32 1.0, %v412
          %v414 = vmul.f32 %v411, %v413
          %v415 = vadd.f32 %v411, %v414
          %vm416 = vweird.f32 %v394
          %vm417 = vweird.f32 %v411
          %vm418 = vmor %vm416, %vm417
          %v419 = vsel %vm418, %v411, %v415
          %v420 = vand.u32 2147483647, %v394
          %vm421 = vcmp.eq.f32.partialorder %v420, 8.507059e+37
          %v422 = vand.u32 %v394, 2147483648
          %v423 = vor.u32 1.1754944e-38, %v422
          %v424 = vsel %vm421, %v423, %v419
          %v425 = vmul.f32 %v348, %v424
          %v426 = vmul.f32 %v349, %v424
          %v427 = vpack.c.bf16 %v410, %v409
          %v428 = vpack.c.bf16 %v426, %v425
          %429 = vst [vmem:[#allocation2] sm:$0xff] %v427
          %430 = vst [vmem:[#allocation2 + $0x8] sm:$0xff] %v428
        $region70: #{transformer_forward.16} parent=61 // pred_fallthru
          _
        %v431 = vld [vmem:[#allocation2] sm:$0xff]
        %v432 = vld [vmem:[#allocation2 + $0x8] sm:$0xff]
        %v433 = vld [vmem:[%s306] sm:$0xff]
        %v434 = vld [vmem:[%s306 + $0x8] sm:$0xff]
        %v435 = vld [vmem:[%s306 + $0x10] sm:$0xff]
        %v436 = vld [vmem:[%s306 + $0x18] sm:$0xff]
        %v437 = vld [vmem:[%s306 + $0x20] sm:$0xff]
        %v438 = vld [vmem:[%s306 + $0x28] sm:$0xff]
        %v439 = vld [vmem:[%s306 + $0x30] sm:$0xff]
        %v440 = vld [vmem:[%s306 + $0x38] sm:$0xff]
        %v441 = vld [vmem:[%s306 + $0x40] sm:$0xff]
        %v442 = vld [vmem:[%s306 + $0x48] sm:$0xff]
        %v443 = vld [vmem:[%s306 + $0x50] sm:$0xff]
        %v444 = vld [vmem:[%s306 + $0x58] sm:$0xff]
        %v445 = vld [vmem:[%s306 + $0x60] sm:$0xff]
        %v446 = vld [vmem:[%s306 + $0x68] sm:$0xff]
        %v447 = vld [vmem:[%s306 + $0x70] sm:$0xff]
        %v448 = vld [vmem:[%s306 + $0x78] sm:$0xff]
        %v449 = vld [vmem:[%s306 + $0x80] sm:$0xff]
        %v450 = vld [vmem:[%s306 + $0x88] sm:$0xff]
        %v451 = vld [vmem:[%s306 + $0x90] sm:$0xff]
        %v452 = vld [vmem:[%s306 + $0x98] sm:$0xff]
        %v453 = vld [vmem:[%s306 + $0xa0] sm:$0xff]
        %v454 = vld [vmem:[%s306 + $0xa8] sm:$0xff]
        %v455 = vld [vmem:[%s306 + $0xb0] sm:$0xff]
        %v456 = vld [vmem:[%s306 + $0xb8] sm:$0xff]
        %v457 = vld [vmem:[%s306 + $0xc0] sm:$0xff]
        %v458 = vld [vmem:[%s306 + $0xc8] sm:$0xff]
        %v459 = vld [vmem:[%s306 + $0xd0] sm:$0xff]
        %v460 = vld [vmem:[%s306 + $0xd8] sm:$0xff]
        %v461 = vld [vmem:[%s306 + $0xe0] sm:$0xff]
        %v462 = vld [vmem:[%s306 + $0xe8] sm:$0xff]
        %v463 = vld [vmem:[%s306 + $0xf0] sm:$0xff]
        %v464 = vld [vmem:[%s306 + $0xf8] sm:$0xff]
        %v467 = vunpack.c.l.b16 %v431
        %v468 = vunpack.c.h.b16 %v431
        %v469 = vunpack.c.l.b16 %v432
        %v470 = vunpack.c.h.b16 %v432
        %v471 = vpack.c.b16 %v469, %v467
        %v472 = vpack.c.b16 %v470, %v468
        %v507 = vunpack.c.l.b16 %v433
        %v508 = vunpack.c.h.b16 %v433
        %v509 = vunpack.c.l.b16 %v434
        %v510 = vunpack.c.h.b16 %v434
        %v511 = vunpack.c.l.b16 %v435
        %v512 = vunpack.c.h.b16 %v435
        %v513 = vunpack.c.l.b16 %v436
        %v514 = vunpack.c.h.b16 %v436
        %v515 = vunpack.c.l.b16 %v437
        %v516 = vunpack.c.h.b16 %v437
        %v517 = vunpack.c.l.b16 %v438
        %v518 = vunpack.c.h.b16 %v438
        %v519 = vunpack.c.l.b16 %v439
        %v520 = vunpack.c.h.b16 %v439
        %v521 = vunpack.c.l.b16 %v440
        %v522 = vunpack.c.h.b16 %v440
        %v523 = vunpack.c.l.b16 %v441
        %v524 = vunpack.c.h.b16 %v441
        %v525 = vunpack.c.l.b16 %v442
        %v526 = vunpack.c.h.b16 %v442
        %v527 = vunpack.c.l.b16 %v443
        %v528 = vunpack.c.h.b16 %v443
        %v529 = vunpack.c.l.b16 %v444
        %v530 = vunpack.c.h.b16 %v444
        %v531 = vunpack.c.l.b16 %v445
        %v532 = vunpack.c.h.b16 %v445
        %v533 = vunpack.c.l.b16 %v446
        %v534 = vunpack.c.h.b16 %v446
        %v535 = vunpack.c.l.b16 %v447
        %v536 = vunpack.c.h.b16 %v447
        %v537 = vunpack.c.l.b16 %v448
        %v538 = vunpack.c.h.b16 %v448
        %v539 = vunpack.c.l.b16 %v449
        %v540 = vunpack.c.h.b16 %v449
        %v541 = vunpack.c.l.b16 %v450
        %v542 = vunpack.c.h.b16 %v450
        %v543 = vunpack.c.l.b16 %v451
        %v544 = vunpack.c.h.b16 %v451
        %v545 = vunpack.c.l.b16 %v452
        %v546 = vunpack.c.h.b16 %v452
        %v547 = vunpack.c.l.b16 %v453
        %v548 = vunpack.c.h.b16 %v453
        %v549 = vunpack.c.l.b16 %v454
        %v550 = vunpack.c.h.b16 %v454
        %v551 = vunpack.c.l.b16 %v455
        %v552 = vunpack.c.h.b16 %v455
        %v553 = vunpack.c.l.b16 %v456
        %v554 = vunpack.c.h.b16 %v456
        %v555 = vunpack.c.l.b16 %v457
        %v556 = vunpack.c.h.b16 %v457
        %v557 = vunpack.c.l.b16 %v458
        %v558 = vunpack.c.h.b16 %v458
        %v559 = vunpack.c.l.b16 %v459
        %v560 = vunpack.c.h.b16 %v459
        %v561 = vunpack.c.l.b16 %v460
        %v562 = vunpack.c.h.b16 %v460
        %v563 = vunpack.c.l.b16 %v461
        %v564 = vunpack.c.h.b16 %v461
        %v565 = vunpack.c.l.b16 %v462
        %v566 = vunpack.c.h.b16 %v462
        %v567 = vunpack.c.l.b16 %v463
        %v568 = vunpack.c.h.b16 %v463
        %v569 = vunpack.c.l.b16 %v464
        %v570 = vunpack.c.h.b16 %v464
        %v571 = vpack.c.b16 %v509, %v507
        %v572 = vpack.c.b16 %v510, %v508
        %v573 = vpack.c.b16 %v513, %v511
        %v574 = vpack.c.b16 %v514, %v512
        %v575 = vpack.c.b16 %v517, %v515
        %v576 = vpack.c.b16 %v518, %v516
        %v577 = vpack.c.b16 %v521, %v519
        %v578 = vpack.c.b16 %v522, %v520
        %v579 = vpack.c.b16 %v525, %v523
        %v580 = vpack.c.b16 %v526, %v524
        %v581 = vpack.c.b16 %v529, %v527
        %v582 = vpack.c.b16 %v530, %v528
        %v583 = vpack.c.b16 %v533, %v531
        %v584 = vpack.c.b16 %v534, %v532
        %v585 = vpack.c.b16 %v537, %v535
        %v586 = vpack.c.b16 %v538, %v536
        %v587 = vpack.c.b16 %v541, %v539
        %v588 = vpack.c.b16 %v542, %v540
        %v589 = vpack.c.b16 %v545, %v543
        %v590 = vpack.c.b16 %v546, %v544
        %v591 = vpack.c.b16 %v549, %v547
        %v592 = vpack.c.b16 %v550, %v548
        %v593 = vpack.c.b16 %v553, %v551
        %v594 = vpack.c.b16 %v554, %v552
        %v595 = vpack.c.b16 %v557, %v555
        %v596 = vpack.c.b16 %v558, %v556
        %v597 = vpack.c.b16 %v561, %v559
        %v598 = vpack.c.b16 %v562, %v560
        %v599 = vpack.c.b16 %v565, %v563
        %v600 = vpack.c.b16 %v566, %v564
        %v601 = vpack.c.b16 %v569, %v567
        %v602 = vpack.c.b16 %v570, %v568
        %635 = vmatpush.bf16.msra.mxu0 %v585
        %636 = vmatpush.bf16.msra.mxu0 %v583
        %637 = vmatpush.bf16.msra.mxu0 %v581
        %638 = vmatpush.bf16.msra.mxu0 %v579
        %639 = vmatpush.bf16.msra.mxu0 %v577
        %640 = vmatpush.bf16.msra.mxu0 %v575
        %641 = vmatpush.bf16.msra.mxu0 %v573
        %642 = vmatpush.bf16.msra.mxu0 %v571
        %643 = vmatmul.bf16.gmra.mxu0 %v471
        %v644 = vpop.f32.mrf.mxu0
        %v645 = vadd.f32 0.0, %v644
        %v646 = vpop.f32.mrf.mxu0
        %v647 = vadd.f32 0.0, %v646
        %648 = vdwg.mxu0
        %649 = vmatpush.bf16.msra.mxu0 %v601
        %650 = vmatpush.bf16.msra.mxu0 %v599
        %651 = vmatpush.bf16.msra.mxu0 %v597
        %652 = vmatpush.bf16.msra.mxu0 %v595
        %653 = vmatpush.bf16.msra.mxu0 %v593
        %654 = vmatpush.bf16.msra.mxu0 %v591
        %655 = vmatpush.bf16.msra.mxu0 %v589
        %656 = vmatpush.bf16.msra.mxu0 %v587
        %657 = vmatmul.bf16.gmra.mxu0 %v472
        %v658 = vpop.f32.mrf.mxu0
        %v659 = vadd.f32 %v645, %v658
        %v660 = vpop.f32.mrf.mxu0
        %v661 = vadd.f32 %v647, %v660
        %662 = vdwg.mxu0
        %663 = vmatpush.bf16.msra.mxu0 %v586
        %664 = vmatpush.bf16.msra.mxu0 %v584
        %665 = vmatpush.bf16.msra.mxu0 %v582
        %666 = vmatpush.bf16.msra.mxu0 %v580
        %667 = vmatpush.bf16.msra.mxu0 %v578
        %668 = vmatpush.bf16.msra.mxu0 %v576
        %669 = vmatpush.bf16.msra.mxu0 %v574
        %670 = vmatpush.bf16.msra.mxu0 %v572
        %671 = vmatmul.bf16.gmra.mxu0 %v471
        %v672 = vpop.f32.mrf.mxu0
        %v673 = vadd.f32 0.0, %v672
        %v674 = vpop.f32.mrf.mxu0
        %v675 = vadd.f32 0.0, %v674
        %676 = vdwg.mxu0
        %677 = vmatpush.bf16.msra.mxu0 %v602
        %678 = vmatpush.bf16.msra.mxu0 %v600
        %679 = vmatpush.bf16.msra.mxu0 %v598
        %680 = vmatpush.bf16.msra.mxu0 %v596
        %681 = vmatpush.bf16.msra.mxu0 %v594
        %682 = vmatpush.bf16.msra.mxu0 %v592
        %683 = vmatpush.bf16.msra.mxu0 %v590
        %684 = vmatpush.bf16.msra.mxu0 %v588
        %685 = vmatmul.bf16.gmra.mxu0 %v472
        %v686 = vpop.f32.mrf.mxu0
        %v687 = vadd.f32 %v673, %v686
        %v688 = vpop.f32.mrf.mxu0
        %v689 = vadd.f32 %v675, %v688
        %690 = vdwg.mxu0
        %v691 = vpack.c.bf16 %v687, %v659
        %v692 = vpack.c.bf16 %v689, %v661
        %693 = vst [vmem:[%s329] sm:$0xff] %v691
        %694 = vst [vmem:[%s329 + $0x8] sm:$0xff] %v692
        %s695 = sand.u32 %s87, 1
        %s696 = sand.u32 %s87, 1
        %s697 = smul.addr %s696, 16
        %s698 = scalar_lea.vmem [#allocation4], %s697
        // Predicated region
        $region71: #{transformer_forward.16} parent=61 // pred_check
          %p699 = pneg %p97
        $region72: #{transformer_forward.16} parent=61 // pred_check_branch
          %701 = sbr.rel (%p699) target = $region74
        $region73: #{transformer_forward.16} parent=61 // pred_region
          %s702 = smul.u32 2, %s17
          %s703 = smul.u32 2, %s18
          %s704 = smul.addr %s702, 4
          %s705 = sadd.s32 %s703, %s704
          %s706 = smul.addr %s705, 4
          %s707 = scalar_lea.vmem %s2, %s706
          // Predicated region
          $region75: #{transformer_forward.16} parent=73 // pred_check
            _
          $region76: #{transformer_forward.16} parent=73 // pred_check_branch
            %709 = sbr.rel (0) target = $region78
          $region77: #{transformer_forward.16} parent=73 // pred_region
            // Predicated region
            $region79: #{transformer_forward.16} parent=77 // pred_check
              _
            $region80: #{transformer_forward.16} parent=77 // pred_check_branch
              %711 = sbr.rel (0) target = $region82
            $region81: #{transformer_forward.16} parent=77 // pred_region
              // Predicated region
              $region94: #{transformer_forward.16} parent=81 // pred_check
                _
              $region95: #{transformer_forward.16} parent=81 // pred_check_branch
                %729 = sbr.rel (0) target = $region97
              $region96: #{transformer_forward.16} parent=81 // pred_region
                loop: start=0, step=1, limit=1
                $region98: #{transformer_forward.16} parent=96 // loop_pre_header
                  _
                $region99: #{transformer_forward.16} parent=96 // loop_header
                  %s731 = sphi 0, %s735
                  %p732 = scmp.ge.s32.totalorder %s731, 1
                  %s736 = sphi %s698, %s698
                  %s737 = sphi %s707, %s707
                $region100: #{transformer_forward.16} parent=96 // loop_header_branch
                  %734 = sbr.rel (%p732) target = $region104
                $region101: #{transformer_forward.16} parent=96 // loop_body
                  %v738 = vld [vmem:[%s736] sm:$0xff]
                  %739 = vst [vmem:[%s737] sm:$0xff] %v738
                  %v740 = vld [vmem:[%s736 + $0x8] sm:$0xff]
                  %741 = vst [vmem:[%s737 + $0x10] sm:$0xff] %v740
                $region102: #{transformer_forward.16} parent=96 // loop_footer
                  %s735 = sadd.s32 1, %s731
                $region103: #{transformer_forward.16} parent=96 // loop_footer_branch
                  %730 = sbr.rel target = $region99
                $region104: #{transformer_forward.16} parent=96 // loop_exit
                  _
              $region97: #{transformer_forward.16} parent=81 // pred_fallthru
                _
              // Predicated region
              $region105: #{transformer_forward.16} parent=81 // pred_check
                _
              $region106: #{transformer_forward.16} parent=81 // pred_check_branch
                %743 = sbr.rel target = $region108
              $region107: #{transformer_forward.16} parent=81 // pred_region
                _
              $region108: #{transformer_forward.16} parent=81 // pred_fallthru
                _
            $region82: #{transformer_forward.16} parent=77 // pred_fallthru
              _
            // Predicated region
            $region83: #{transformer_forward.16} parent=77 // pred_check
              _
            $region84: #{transformer_forward.16} parent=77 // pred_check_branch
              %713 = sbr.rel target = $region86
            $region85: #{transformer_forward.16} parent=77 // pred_region
              %s715 = ssub.s32 256, 1
              loop: start=0, step=1, limit=1
              $region87: #{transformer_forward.16} parent=85 // loop_pre_header
                _
              $region88: #{transformer_forward.16} parent=85 // loop_header
                %s717 = sphi 0, %s721
                %p718 = scmp.ge.s32.totalorder %s717, 1
                %s722 = sphi %s698, %s698
                %s723 = sphi %s707, %s707
              $region89: #{transformer_forward.16} parent=85 // loop_header_branch
                %720 = sbr.rel (%p718) target = $region93
              $region90: #{transformer_forward.16} parent=85 // loop_body
                %v724 = vld [vmem:[%s722] sm:%s715]
                %725 = vst [vmem:[%s723] sm:%s715] %v724
                %v726 = vld [vmem:[%s722 + $0x8] sm:%s715]
                %727 = vst [vmem:[%s723 + $0x10] sm:%s715] %v726
              $region91: #{transformer_forward.16} parent=85 // loop_footer
                %s721 = sadd.s32 1, %s717
              $region92: #{transformer_forward.16} parent=85 // loop_footer_branch
                %716 = sbr.rel target = $region88
              $region93: #{transformer_forward.16} parent=85 // loop_exit
                _
            $region86: #{transformer_forward.16} parent=77 // pred_fallthru
              _
          $region78: #{transformer_forward.16} parent=73 // pred_fallthru
            _
          %744 = vnop
        $region74: #{transformer_forward.16} parent=61 // pred_fallthru
          _
      $region62: #{transformer_forward.16} parent=5 // pred_fallthru
        _
      %p745 = scmp.le.s32.totalorder 2, %s8
      // Predicated region
      $region109: #{transformer_forward.16} parent=5 // pred_check
        %p746 = pneg %p745
      $region110: #{transformer_forward.16} parent=5 // pred_check_branch
        %748 = sbr.rel (%p746) target = $region112
      $region111: #{transformer_forward.16} parent=5 // pred_region
        %s749 = ssub.s32 %s8, 2
        // Predicated region
        $region113: #{transformer_forward.16} parent=111 // pred_check
          %p750 = pneg %p103
        $region114: #{transformer_forward.16} parent=111 // pred_check_branch
          %752 = sbr.rel (%p750) target = $region116
        $region115: #{transformer_forward.16} parent=111 // pred_region
          %s753 = sand.u32 %s88, 1
          %s754 = sand.u32 %s88, 1
          %s755 = smul.addr %s754, 16
          %s756 = scalar_lea.vmem [#allocation4], %s755
        $region116: #{transformer_forward.16} parent=111 // pred_fallthru
          _
      $region112: #{transformer_forward.16} parent=5 // pred_fallthru
        _
    $region6: #{transformer_forward.16} parent=1 // loop_footer
      %s12 = sadd.s32 1, %s8
    $region7: #{transformer_forward.16} parent=1 // loop_footer_branch
      %7 = sbr.rel target = $region3
    $region8: #{transformer_forward.16} parent=1 // loop_exit
      _

// kernel: transformer_forward.21
$region0: #{transformer_forward.21}
  #allocation0 [shape = 'u32[]', space=smem, size = 0x4, offset = 0x4, fixed_abs, tag = 'smem constant byte address 0x4 - core index']
  #allocation1 [shape = 'u32[72,128]{1,0:T(1,128)}', space=vmem, size = 0x9000, scoped, tag = 'internal scratch']
  #allocation2 [shape = 'bf16[16,256]{1,0:T(8,128)(2,1)}', space=vmem, size = 0x2000, scoped, tag = 'scratch operand']
  %s0 = inlined_call_operand.vmem [shape: bf16[16,256], index: 0, kind: input, shape index: {}]
  %s1 = inlined_call_operand.vmem [shape: bf16[256,256], index: 1, kind: input, shape index: {}]
  %s2 = inlined_call_operand.hbm [shape: f32[16,256], index: 2, kind: output, shape index: {}]
  %s3 = sld [smem:[#allocation0]]
  $region22: #{transformer_forward.21} parent=0
    _
  %s5 = ssub.s32 1, %s3
  %s6 = scalar_select 0, %s5, %s3
  $region1: #{transformer_forward.21} parent=0
    #allocation3 [shape = 'u8[16384]{0}', space=vmem, size = 0x4000, scoped, tag = 'output window, operand 0, single buffered']
    #allocation4 [shape = 's32[1]{0}', space=sflag, size = 0x4, scoped, tag = 'scoped memory for transformer_forward.21']
    %7 = vsyncpa [#allocation4], 0
    // Predicated region
    $region2: #{transformer_forward.21} parent=1 // pred_check
      _
    $region3: #{transformer_forward.21} parent=1 // pred_check_branch
      %9 = sbr.rel (0) target = $region5
    $region4: #{transformer_forward.21} parent=1 // pred_region
      _
    $region5: #{transformer_forward.21} parent=1 // pred_fallthru
      _
    // Predicated region
    $region6: #{transformer_forward.21} parent=1 // pred_check
      _
    $region7: #{transformer_forward.21} parent=1 // pred_check_branch
      %11 = sbr.rel (0) target = $region9
    $region8: #{transformer_forward.21} parent=1 // pred_region
      _
    $region9: #{transformer_forward.21} parent=1 // pred_fallthru
      _
    %p12 = scmp.eq.s32.totalorder 0, 0
    // Predicated region
    $region10: #{transformer_forward.21} parent=1 // pred_check
      %p13 = pneg %p12
    $region11: #{transformer_forward.21} parent=1 // pred_check_branch
      %15 = sbr.rel (%p13) target = $region13
    $region12: #{transformer_forward.21} parent=1 // pred_region
      %v16 = vld [vmem:[%s0] sm:$0xff]
      %v17 = vld [vmem:[%s0 + $0x8] sm:$0xff]
      %v18 = vunpack.c.l.bf16 %v16
      %v19 = vunpack.c.h.bf16 %v16
      %v20 = vunpack.c.l.bf16 %v17
      %v21 = vunpack.c.h.bf16 %v17
      %v22 = vmul.f32 %v18, %v18
      %v23 = vmul.f32 %v19, %v19
      %v24 = vmul.f32 %v20, %v20
      %v25 = vmul.f32 %v21, %v21
      %v26 = vadd.f32 %v22, %v23
      %27 = vadd.xlane.f32.xlu0 %v26
      %v28 = vpop.xlane.xlu0 %27
      %v29 = vadd.f32 %v24, %v25
      %30 = vadd.xlane.f32.xlu0 %v29
      %v31 = vpop.xlane.xlu0 %30
      %v32 = vrcp.pop 256.0
      %v33 = vmul.f32 256.0, %v32
      %v34 = vsub.f32 1.0, %v33
      %v35 = vmul.f32 %v32, %v34
      %v36 = vadd.f32 %v32, %v35
      %vm37 = vweird.f32 %v32
      %v38 = vsel %vm37, %v32, %v36
      %v39 = vmul.f32 %v28, %v38
      %v40 = vmul.f32 %v31, %v38
      %v41 = vrsqrt.pop %v39
      %v42 = vmul.f32 %v41, %v39
      %v43 = vmul.f32 %v42, %v41
      %v44 = vmul.f32 0.5, %v43
      %v45 = vsub.f32 1.5, %v44
      %v46 = vmul.f32 %v41, %v45
      %v47 = vmul.f32 %v39, %v46
      %vm48 = vcmp.eq.f32.partialorder %v39, inf
      %v49 = vsel %vm48, %v39, %v47
      %vm50 = vcmp.eq.f32.partialorder %v39, 0.0
      %v51 = vand.u32 %v39, 2147483648
      %v52 = vsel %vm50, %v51, %v49
      %v53 = vrsqrt.pop %v40
      %v54 = vmul.f32 %v53, %v40
      %v55 = vmul.f32 %v54, %v53
      %v56 = vmul.f32 0.5, %v55
      %v57 = vsub.f32 1.5, %v56
      %v58 = vmul.f32 %v53, %v57
      %v59 = vmul.f32 %v40, %v58
      %vm60 = vcmp.eq.f32.partialorder %v40, inf
      %v61 = vsel %vm60, %v40, %v59
      %vm62 = vcmp.eq.f32.partialorder %v40, 0.0
      %v63 = vand.u32 %v40, 2147483648
      %v64 = vsel %vm62, %v63, %v61
      %v65 = vadd.f32 %v52, 1e-05
      %v66 = vadd.f32 %v64, 1e-05
      %v67 = vrcp.pop %v65
      %v68 = vmul.f32 %v65, %v67
      %v69 = vsub.f32 1.0, %v68
      %v70 = vmul.f32 %v67, %v69
      %v71 = vadd.f32 %v67, %v70
      %vm72 = vweird.f32 %v65
      %vm73 = vweird.f32 %v67
      %vm74 = vmor %vm72, %vm73
      %v75 = vsel %vm74, %v67, %v71
      %v76 = vand.u32 2147483647, %v65
      %vm77 = vcmp.eq.f32.partialorder %v76, 8.507059e+37
      %v78 = vand.u32 %v65, 2147483648
      %v79 = vor.u32 1.1754944e-38, %v78
      %v80 = vsel %vm77, %v79, %v75
      %v81 = vmul.f32 %v18, %v80
      %v82 = vmul.f32 %v19, %v80
      %v83 = vrcp.pop %v66
      %v84 = vmul.f32 %v66, %v83
      %v85 = vsub.f32 1.0, %v84
      %v86 = vmul.f32 %v83, %v85
      %v87 = vadd.f32 %v83, %v86
      %vm88 = vweird.f32 %v66
      %vm89 = vweird.f32 %v83
      %vm90 = vmor %vm88, %vm89
      %v91 = vsel %vm90, %v83, %v87
      %v92 = vand.u32 2147483647, %v66
      %vm93 = vcmp.eq.f32.partialorder %v92, 8.507059e+37
      %v94 = vand.u32 %v66, 2147483648
      %v95 = vor.u32 1.1754944e-38, %v94
      %v96 = vsel %vm93, %v95, %v91
      %v97 = vmul.f32 %v20, %v96
      %v98 = vmul.f32 %v21, %v96
      %v99 = vpack.c.bf16 %v82, %v81
      %v100 = vpack.c.bf16 %v98, %v97
      %101 = vst [vmem:[#allocation2] sm:$0xff] %v99
      %102 = vst [vmem:[#allocation2 + $0x8] sm:$0xff] %v100
    $region13: #{transformer_forward.21} parent=1 // pred_fallthru
      _
    %v103 = vld [vmem:[#allocation2] sm:$0xff]
    %v104 = vld [vmem:[#allocation2 + $0x8] sm:$0xff]
    %v105 = vld [vmem:[%s1] sm:$0xff]
    %v106 = vld [vmem:[%s1 + $0x8] sm:$0xff]
    %v107 = vld [vmem:[%s1 + $0x10] sm:$0xff]
    %v108 = vld [vmem:[%s1 + $0x18] sm:$0xff]
    %v109 = vld [vmem:[%s1 + $0x20] sm:$0xff]
    %v110 = vld [vmem:[%s1 + $0x28] sm:$0xff]
    %v111 = vld [vmem:[%s1 + $0x30] sm:$0xff]
    %v112 = vld [vmem:[%s1 + $0x38] sm:$0xff]
    %v113 = vld [vmem:[%s1 + $0x40] sm:$0xff]
    %v114 = vld [vmem:[%s1 + $0x48] sm:$0xff]
    %v115 = vld [vmem:[%s1 + $0x50] sm:$0xff]
    %v116 = vld [vmem:[%s1 + $0x58] sm:$0xff]
    %v117 = vld [vmem:[%s1 + $0x60] sm:$0xff]
    %v118 = vld [vmem:[%s1 + $0x68] sm:$0xff]
    %v119 = vld [vmem:[%s1 + $0x70] sm:$0xff]
    %v120 = vld [vmem:[%s1 + $0x78] sm:$0xff]
    %v121 = vld [vmem:[%s1 + $0x80] sm:$0xff]
    %v122 = vld [vmem:[%s1 + $0x88] sm:$0xff]
    %v123 = vld [vmem:[%s1 + $0x90] sm:$0xff]
    %v124 = vld [vmem:[%s1 + $0x98] sm:$0xff]
    %v125 = vld [vmem:[%s1 + $0xa0] sm:$0xff]
    %v126 = vld [vmem:[%s1 + $0xa8] sm:$0xff]
    %v127 = vld [vmem:[%s1 + $0xb0] sm:$0xff]
    %v128 = vld [vmem:[%s1 + $0xb8] sm:$0xff]
    %v129 = vld [vmem:[%s1 + $0xc0] sm:$0xff]
    %v130 = vld [vmem:[%s1 + $0xc8] sm:$0xff]
    %v131 = vld [vmem:[%s1 + $0xd0] sm:$0xff]
    %v132 = vld [vmem:[%s1 + $0xd8] sm:$0xff]
    %v133 = vld [vmem:[%s1 + $0xe0] sm:$0xff]
    %v134 = vld [vmem:[%s1 + $0xe8] sm:$0xff]
    %v135 = vld [vmem:[%s1 + $0xf0] sm:$0xff]
    %v136 = vld [vmem:[%s1 + $0xf8] sm:$0xff]
    %v139 = vunpack.c.l.b16 %v103
    %v140 = vunpack.c.h.b16 %v103
    %v141 = vunpack.c.l.b16 %v104
    %v142 = vunpack.c.h.b16 %v104
    %v143 = vpack.c.b16 %v141, %v139
    %v144 = vpack.c.b16 %v142, %v140
    %v179 = vunpack.c.l.b16 %v105
    %v180 = vunpack.c.h.b16 %v105
    %v181 = vunpack.c.l.b16 %v106
    %v182 = vunpack.c.h.b16 %v106
    %v183 = vunpack.c.l.b16 %v107
    %v184 = vunpack.c.h.b16 %v107
    %v185 = vunpack.c.l.b16 %v108
    %v186 = vunpack.c.h.b16 %v108
    %v187 = vunpack.c.l.b16 %v109
    %v188 = vunpack.c.h.b16 %v109
    %v189 = vunpack.c.l.b16 %v110
    %v190 = vunpack.c.h.b16 %v110
    %v191 = vunpack.c.l.b16 %v111
    %v192 = vunpack.c.h.b16 %v111
    %v193 = vunpack.c.l.b16 %v112
    %v194 = vunpack.c.h.b16 %v112
    %v195 = vunpack.c.l.b16 %v113
    %v196 = vunpack.c.h.b16 %v113
    %v197 = vunpack.c.l.b16 %v114
    %v198 = vunpack.c.h.b16 %v114
    %v199 = vunpack.c.l.b16 %v115
    %v200 = vunpack.c.h.b16 %v115
    %v201 = vunpack.c.l.b16 %v116
    %v202 = vunpack.c.h.b16 %v116
    %v203 = vunpack.c.l.b16 %v117
    %v204 = vunpack.c.h.b16 %v117
    %v205 = vunpack.c.l.b16 %v118
    %v206 = vunpack.c.h.b16 %v118
    %v207 = vunpack.c.l.b16 %v119
    %v208 = vunpack.c.h.b16 %v119
    %v209 = vunpack.c.l.b16 %v120
    %v210 = vunpack.c.h.b16 %v120
    %v211 = vunpack.c.l.b16 %v121
    %v212 = vunpack.c.h.b16 %v121
    %v213 = vunpack.c.l.b16 %v122
    %v214 = vunpack.c.h.b16 %v122
    %v215 = vunpack.c.l.b16 %v123
    %v216 = vunpack.c.h.b16 %v123
    %v217 = vunpack.c.l.b16 %v124
    %v218 = vunpack.c.h.b16 %v124
    %v219 = vunpack.c.l.b16 %v125
    %v220 = vunpack.c.h.b16 %v125
    %v221 = vunpack.c.l.b16 %v126
    %v222 = vunpack.c.h.b16 %v126
    %v223 = vunpack.c.l.b16 %v127
    %v224 = vunpack.c.h.b16 %v127
    %v225 = vunpack.c.l.b16 %v128
    %v226 = vunpack.c.h.b16 %v128
    %v227 = vunpack.c.l.b16 %v129
    %v228 = vunpack.c.h.b16 %v129
    %v229 = vunpack.c.l.b16 %v130
    %v230 = vunpack.c.h.b16 %v130
    %v231 = vunpack.c.l.b16 %v131
    %v232 = vunpack.c.h.b16 %v131
    %v233 = vunpack.c.l.b16 %v132
    %v234 = vunpack.c.h.b16 %v132
    %v235 = vunpack.c.l.b16 %v133
    %v236 = vunpack.c.h.b16 %v133
    %v237 = vunpack.c.l.b16 %v134
    %v238 = vunpack.c.h.b16 %v134
    %v239 = vunpack.c.l.b16 %v135
    %v240 = vunpack.c.h.b16 %v135
    %v241 = vunpack.c.l.b16 %v136
    %v242 = vunpack.c.h.b16 %v136
    %v243 = vpack.c.b16 %v181, %v179
    %v244 = vpack.c.b16 %v182, %v180
    %v245 = vpack.c.b16 %v185, %v183
    %v246 = vpack.c.b16 %v186, %v184
    %v247 = vpack.c.b16 %v189, %v187
    %v248 = vpack.c.b16 %v190, %v188
    %v249 = vpack.c.b16 %v193, %v191
    %v250 = vpack.c.b16 %v194, %v192
    %v251 = vpack.c.b16 %v197, %v195
    %v252 = vpack.c.b16 %v198, %v196
    %v253 = vpack.c.b16 %v201, %v199
    %v254 = vpack.c.b16 %v202, %v200
    %v255 = vpack.c.b16 %v205, %v203
    %v256 = vpack.c.b16 %v206, %v204
    %v257 = vpack.c.b16 %v209, %v207
    %v258 = vpack.c.b16 %v210, %v208
    %v259 = vpack.c.b16 %v213, %v211
    %v260 = vpack.c.b16 %v214, %v212
    %v261 = vpack.c.b16 %v217, %v215
    %v262 = vpack.c.b16 %v218, %v216
    %v263 = vpack.c.b16 %v221, %v219
    %v264 = vpack.c.b16 %v222, %v220
    %v265 = vpack.c.b16 %v225, %v223
    %v266 = vpack.c.b16 %v226, %v224
    %v267 = vpack.c.b16 %v229, %v227
    %v268 = vpack.c.b16 %v230, %v228
    %v269 = vpack.c.b16 %v233, %v231
    %v270 = vpack.c.b16 %v234, %v232
    %v271 = vpack.c.b16 %v237, %v235
    %v272 = vpack.c.b16 %v238, %v236
    %v273 = vpack.c.b16 %v241, %v239
    %v274 = vpack.c.b16 %v242, %v240
    %307 = vmatpush.bf16.msra.mxu0 %v257
    %308 = vmatpush.bf16.msra.mxu0 %v255
    %309 = vmatpush.bf16.msra.mxu0 %v253
    %310 = vmatpush.bf16.msra.mxu0 %v251
    %311 = vmatpush.bf16.msra.mxu0 %v249
    %312 = vmatpush.bf16.msra.mxu0 %v247
    %313 = vmatpush.bf16.msra.mxu0 %v245
    %314 = vmatpush.bf16.msra.mxu0 %v243
    %315 = vmatmul.bf16.gmra.mxu0 %v143
    %v316 = vpop.f32.mrf.mxu0
    %v317 = vadd.f32 0.0, %v316
    %v318 = vpop.f32.mrf.mxu0
    %v319 = vadd.f32 0.0, %v318
    %320 = vdwg.mxu0
    %321 = vmatpush.bf16.msra.mxu0 %v273
    %322 = vmatpush.bf16.msra.mxu0 %v271
    %323 = vmatpush.bf16.msra.mxu0 %v269
    %324 = vmatpush.bf16.msra.mxu0 %v267
    %325 = vmatpush.bf16.msra.mxu0 %v265
    %326 = vmatpush.bf16.msra.mxu0 %v263
    %327 = vmatpush.bf16.msra.mxu0 %v261
    %328 = vmatpush.bf16.msra.mxu0 %v259
    %329 = vmatmul.bf16.gmra.mxu0 %v144
    %v330 = vpop.f32.mrf.mxu0
    %v331 = vadd.f32 %v317, %v330
    %v332 = vpop.f32.mrf.mxu0
    %v333 = vadd.f32 %v319, %v332
    %334 = vdwg.mxu0
    %335 = vmatpush.bf16.msra.mxu0 %v258
    %336 = vmatpush.bf16.msra.mxu0 %v256
    %337 = vmatpush.bf16.msra.mxu0 %v254
    %338 = vmatpush.bf16.msra.mxu0 %v252
    %339 = vmatpush.bf16.msra.mxu0 %v250
    %340 = vmatpush.bf16.msra.mxu0 %v248
    %341 = vmatpush.bf16.msra.mxu0 %v246
    %342 = vmatpush.bf16.msra.mxu0 %v244
    %343 = vmatmul.bf16.gmra.mxu0 %v143
    %v344 = vpop.f32.mrf.mxu0
    %v345 = vadd.f32 0.0, %v344
    %v346 = vpop.f32.mrf.mxu0
    %v347 = vadd.f32 0.0, %v346
    %348 = vdwg.mxu0
    %349 = vmatpush.bf16.msra.mxu0 %v274
    %350 = vmatpush.bf16.msra.mxu0 %v272
    %351 = vmatpush.bf16.msra.mxu0 %v270
    %352 = vmatpush.bf16.msra.mxu0 %v268
    %353 = vmatpush.bf16.msra.mxu0 %v266
    %354 = vmatpush.bf16.msra.mxu0 %v264
    %355 = vmatpush.bf16.msra.mxu0 %v262
    %356 = vmatpush.bf16.msra.mxu0 %v260
    %357 = vmatmul.bf16.gmra.mxu0 %v144
    %v358 = vpop.f32.mrf.mxu0
    %v359 = vadd.f32 %v345, %v358
    %v360 = vpop.f32.mrf.mxu0
    %v361 = vadd.f32 %v347, %v360
    %362 = vdwg.mxu0
    %363 = vst [vmem:[#allocation3] sm:$0xff] %v331
    %364 = vst [vmem:[#allocation3 + $0x8] sm:$0xff] %v359
    %365 = vst [vmem:[#allocation3 + $0x10] sm:$0xff] %v333
    %366 = vst [vmem:[#allocation3 + $0x18] sm:$0xff] %v361
    // Predicated region
    $region14: #{transformer_forward.21} parent=1 // pred_check
      _
    $region15: #{transformer_forward.21} parent=1 // pred_check_branch
      %368 = sbr.rel (0) target = $region17
    $region16: #{transformer_forward.21} parent=1 // pred_region
      %370 = vsyncadd [#allocation4], 0
      %s371 = sshll.u32 [#allocation3], 4
      %s372 = int_to_ptr.vmem [resolvable:$true] %s371
      %s373 = sshll.u32 %s2, 4
      %s374 = int_to_ptr.hbm [resolvable:$true] %s373
      %379 = dma.vmem_to_hbm [thread:$0]  %s372, 512, %s374, [#allocation4], 256, 256, 16
    $region17: #{transformer_forward.21} parent=1 // pred_fallthru
      _
    // Predicated region
    $region18: #{transformer_forward.21} parent=1 // pred_check
      _
    $region19: #{transformer_forward.21} parent=1 // pred_check_branch
      %381 = sbr.rel (0) target = $region21
    $region20: #{transformer_forward.21} parent=1 // pred_region
      %383 = dma.done [#allocation4], 512
    $region21: #{transformer_forward.21} parent=1 // pred_fallthru
      _
    %384 = vsyncpa [#allocation4], 1

</llo_original>
